<compile_context>
chip_gen: v5e
topology: v5e:2x2
jax: 0.10.0
libtpu: 0.0.40
codegen_flags: <defaults>
</compile_context>

<pallas_src>
import math

import jax
import jax.numpy as jnp
from jax import lax
from jax.experimental import pallas as pl
from jax.experimental.pallas import tpu as pltpu

# ---------------- configuration (small, consistent with the module) ----------------
B = 2            # batch
S = 8            # sequence length (dim 2 of the NCL input)
D_MODEL = 32     # d_model (channel dim of the NCL input)
N_HEAD = 4
D_HEAD = D_MODEL // N_HEAD
D_FFN = 64
NUM_LAYERS = 2
LN_EPS = 1e-5


# ---------------------------------- Pallas kernel -----------------------------------
def _layer_norm(x, w, b):
    mu = jnp.mean(x, axis=-1, keepdims=True)
    var = jnp.mean((x - mu) ** 2, axis=-1, keepdims=True)
    return (x - mu) * lax.rsqrt(var + LN_EPS) * w + b


def make_fused_encoder_kernel(num_layers, seq, d_model, n_head):
    d_head = d_model // n_head

    def kernel(x_ref, pos_ref,
               wqT_ref, bq_ref, wk_ref, bk_ref, wvT_ref, bv_ref, woT_ref, bo_ref,
               ln1w_ref, ln1b_ref, w1T_ref, b1_ref, w2T_ref, b2_ref,
               ln2w_ref, ln2b_ref,
               inter_ref, attn_ref):
        x = x_ref[0]          # (S, D)  current batch element
        pos = pos_ref[0]      # (S, D)

        # intermediate 0 is the raw (permuted) input (norm=None in the module).
        inter_ref[0, 0] = x

        for l in range(num_layers):          # static unrolled loop: all layers fused
            qk_in = x + pos

            # --- attention projections (weights pre-transposed on host; scale folded) ---
            q = jnp.dot(qk_in, wqT_ref[l],
                        preferred_element_type=jnp.float32) + bq_ref[l]          # (S, D)
            # K built directly transposed: contract Wk's d_model with qk_in's d_model.
            kT = lax.dot_general(wk_ref[l], qk_in, (((1,), (1,)), ((), ())),
                                 preferred_element_type=jnp.float32) + bk_ref[l]  # (D, S)
            v = jnp.dot(x, wvT_ref[l],
                        preferred_element_type=jnp.float32) + bv_ref[l]           # (S, D)
            woT = woT_ref[l]                                                       # (D, D)

            attn_out = jnp.zeros((seq, d_model), jnp.float32)
            attn_sum = jnp.zeros((seq, seq), jnp.float32)

            # per-head attention (static unroll); output projection folded per head:
            #   ctx_h @ Wo[:, h].T == ctx_h @ WoT[h_rows, :]
            for h in range(n_head):
                sl = slice(h * d_head, (h + 1) * d_head)
                scores = jnp.dot(q[:, sl], kT[sl, :],
                                 preferred_element_type=jnp.float32)              # (S, S)
                scores = scores - jnp.max(scores, axis=-1, keepdims=True)
                e = jnp.exp(scores)
                p = e * pl.reciprocal(jnp.sum(e, axis=-1, keepdims=True),
                                      approx=False)                               # softmax
                attn_sum = attn_sum + p
                ctx = jnp.dot(p, v[:, sl], preferred_element_type=jnp.float32)    # (S, Dh)
                attn_out = attn_out + jnp.dot(ctx, woT[sl, :],
                                              preferred_element_type=jnp.float32)  # (S, D)
            attn_out = attn_out + bo_ref[l]

            # --- residual + LayerNorm1 ---
            y1 = _layer_norm(x + attn_out, ln1w_ref[l], ln1b_ref[l])

            # --- FFN: Linear1 -> ReLU -> Linear2 ---
            h1 = jnp.maximum(
                jnp.dot(y1, w1T_ref[l], preferred_element_type=jnp.float32) + b1_ref[l],
                0.0)
            ffn = jnp.dot(h1, w2T_ref[l], preferred_element_type=jnp.float32) + b2_ref[l]

            # --- residual + LayerNorm2 ---
            y2 = _layer_norm(y1 + ffn, ln2w_ref[l], ln2b_ref[l])

            inter_ref[l + 1, 0] = y2
            attn_ref[l, 0] = attn_sum * (1.0 / n_head)   # averaged over heads
            x = y2

    return kernel


def _const_spec(shape):
    nd = len(shape)
    return pl.BlockSpec(shape, lambda b, _nd=nd: (0,) * _nd)


# ------------------------------- module-level forward -------------------------------
def transformer_encoder_with_intermid(src, pos, packed_params):
    """
    src, pos: (B, d_model, S)  -- PyTorch NCL layout.
    packed_params: tuple of per-layer-stacked, pre-transposed/pre-scaled parameters.
    Returns:
      intermidiate: (num_layers+1, B, S, d_model)   (== intermidiate.transpose(1, 2))
      attn_weights: (num_layers, B, S, S)
    """
    bsz, d_model, seq = src.shape
    num_layers = packed_params[0].shape[0]

    xb = jnp.transpose(src, (0, 2, 1))     # (B, S, D)  single transpose per input
    pb = jnp.transpose(pos, (0, 2, 1))     # (B, S, D)

    kernel = make_fused_encoder_kernel(num_layers, seq, d_model, N_HEAD)

    in_specs = [
        pl.BlockSpec((1, seq, d_model), lambda b: (b, 0, 0)),   # x  (per-batch slab)
        pl.BlockSpec((1, seq, d_model), lambda b: (b, 0, 0)),   # pos
    ] + [_const_spec(p.shape) for p in packed_params]           # weights: resident

    out_specs = [
        pl.BlockSpec((num_layers + 1, 1, seq, d_model), lambda b: (0, b, 0, 0)),
        pl.BlockSpec((num_layers, 1, seq, seq), lambda b: (0, b, 0, 0)),
    ]
    out_shape = [
        jax.ShapeDtypeStruct((num_layers + 1, bsz, seq, d_model), jnp.float32),
        jax.ShapeDtypeStruct((num_layers, bsz, seq, seq), jnp.float32),
    ]

    inter, attn = pl.pallas_call(
        kernel,
        grid=(bsz,),
        in_specs=in_specs,
        out_specs=out_specs,
        out_shape=out_shape,
        compiler_params=pltpu.CompilerParams(dimension_semantics=("parallel",)),
    )(xb, pb, *packed_params)
    return inter, attn


# ------------------------------- deterministic init ---------------------------------
def xavier_uniform(key, shape):
    fan_out, fan_in = shape
    bound = math.sqrt(6.0 / (fan_in + fan_out))
    return jax.random.uniform(key, shape, jnp.float32, -bound, bound)


def init_packed_params(key, num_layers):
    """Xavier-init per-layer weights, then host-side pack:
       pre-transpose for plain x @ W, fold 1/sqrt(d_head) into Wq/bq, stack over layers."""
    scale = 1.0 / math.sqrt(D_HEAD)
    lists = [[] for _ in range(16)]
    (wqT, bq, wk, bk, wvT, bv, woT, bo,
     ln1w, ln1b, w1T, b1, w2T, b2, ln2w, ln2b) = lists

    for _ in range(num_layers):
        keys = jax.random.split(key, 7)
        key = keys[0]
        Wq = xavier_uniform(keys[1], (D_MODEL, D_MODEL))
        Wk = xavier_uniform(keys[2], (D_MODEL, D_MODEL))
        Wv = xavier_uniform(keys[3], (D_MODEL, D_MODEL))
        Wo = xavier_uniform(keys[4], (D_MODEL, D_MODEL))
        W1 = xavier_uniform(keys[5], (D_FFN, D_MODEL))
        W2 = xavier_uniform(keys[6], (D_MODEL, D_FFN))
        zd = jnp.zeros((D_MODEL,), jnp.float32)
        zf = jnp.zeros((D_FFN,), jnp.float32)

        wqT.append((scale * Wq).T)                      # scale folded into Wq
        bq.append((scale * zd).reshape(1, D_MODEL))     # and into bq
        wk.append(Wk)                                   # un-transposed: kernel builds K^T
        bk.append(zd.reshape(D_MODEL, 1))               # column bias for the (D,S) K^T
        wvT.append(Wv.T)
        bv.append(zd.reshape(1, D_MODEL))
        woT.append(Wo.T)
        bo.append(zd.reshape(1, D_MODEL))
        ln1w.append(jnp.ones((1, D_MODEL), jnp.float32))
        ln1b.append(jnp.zeros((1, D_MODEL), jnp.float32))
        w1T.append(W1.T)
        b1.append(zf.reshape(1, D_FFN))
        w2T.append(W2.T)
        b2.append(zd.reshape(1, D_MODEL))
        ln2w.append(jnp.ones((1, D_MODEL), jnp.float32))
        ln2b.append(jnp.zeros((1, D_MODEL), jnp.float32))

    return tuple(jnp.stack(xs, axis=0) for xs in lists)


# --------------------------------------- main ---------------------------------------
if __name__ == "__main__":
    key = jax.random.PRNGKey(0)
    k_src, k_pos, k_par = jax.random.split(key, 3)

    src = jax.random.normal(k_src, (B, D_MODEL, S), jnp.float32)   # (batch, d_model, seq)
    pos = jax.random.normal(k_pos, (B, D_MODEL, S), jnp.float32)
    packed = init_packed_params(k_par, NUM_LAYERS)

    inter, attn = transformer_encoder_with_intermid(src, pos, packed)
    jax.block_until_ready((inter, attn))

    assert inter.shape == (NUM_LAYERS + 1, B, S, D_MODEL), inter.shape
    assert attn.shape == (NUM_LAYERS, B, S, S), attn.shape
    assert bool(jnp.all(jnp.isfinite(inter))) and bool(jnp.all(jnp.isfinite(attn)))
    # attention rows are softmax-normalized
    assert bool(jnp.allclose(jnp.sum(attn, axis=-1), 1.0, atol=1e-4))
    # intermediate[0] is the (permuted) input, as in the PyTorch module with norm=None
    assert bool(jnp.allclose(inter[0], jnp.transpose(src, (0, 2, 1)), atol=1e-6))

    print("KERNEL_OK")
</pallas_src>

<mosaic_0001>
module attributes {stable_mosaic.version = 11 : i64} {
  func.func @kernel(%arg0: i32, %arg1: memref<1x8x32xf32, #tpu.memory_space<vmem>>, %arg2: memref<1x8x32xf32, #tpu.memory_space<vmem>>, %arg3: memref<2x32x32xf32, #tpu.memory_space<vmem>>, %arg4: memref<2x1x32xf32, #tpu.memory_space<vmem>>, %arg5: memref<2x32x32xf32, #tpu.memory_space<vmem>>, %arg6: memref<2x32x1xf32, #tpu.memory_space<vmem>>, %arg7: memref<2x32x32xf32, #tpu.memory_space<vmem>>, %arg8: memref<2x1x32xf32, #tpu.memory_space<vmem>>, %arg9: memref<2x32x32xf32, #tpu.memory_space<vmem>>, %arg10: memref<2x1x32xf32, #tpu.memory_space<vmem>>, %arg11: memref<2x1x32xf32, #tpu.memory_space<vmem>>, %arg12: memref<2x1x32xf32, #tpu.memory_space<vmem>>, %arg13: memref<2x32x64xf32, #tpu.memory_space<vmem>>, %arg14: memref<2x1x64xf32, #tpu.memory_space<vmem>>, %arg15: memref<2x64x32xf32, #tpu.memory_space<vmem>>, %arg16: memref<2x1x32xf32, #tpu.memory_space<vmem>>, %arg17: memref<2x1x32xf32, #tpu.memory_space<vmem>>, %arg18: memref<2x1x32xf32, #tpu.memory_space<vmem>>, %arg19: memref<3x1x8x32xf32, #tpu.memory_space<vmem>>, %arg20: memref<2x1x8x8xf32, #tpu.memory_space<vmem>>) attributes {dimension_semantics = [#tpu.dimension_semantics<parallel>], iteration_bounds = array<i64: 2>, scalar_prefetch = 0 : i64, scratch_operands = 0 : i64, tpu.core_type = #tpu.core_type<tc>, window_params = [{transform_indices = @transform_0, window_bounds = array<i64: 1, 8, 32>}, {transform_indices = @transform_1, window_bounds = array<i64: 1, 8, 32>}, {pipeline_mode = #tpu.pipeline_mode<synchronous>, transform_indices = @transform_2, window_bounds = array<i64: 2, 32, 32>}, {pipeline_mode = #tpu.pipeline_mode<synchronous>, transform_indices = @transform_3, window_bounds = array<i64: 2, 1, 32>}, {pipeline_mode = #tpu.pipeline_mode<synchronous>, transform_indices = @transform_4, window_bounds = array<i64: 2, 32, 32>}, {pipeline_mode = #tpu.pipeline_mode<synchronous>, transform_indices = @transform_5, window_bounds = array<i64: 2, 32, 1>}, {pipeline_mode = #tpu.pipeline_mode<synchronous>, transform_indices = @transform_6, window_bounds = array<i64: 2, 32, 32>}, {pipeline_mode = #tpu.pipeline_mode<synchronous>, transform_indices = @transform_7, window_bounds = array<i64: 2, 1, 32>}, {pipeline_mode = #tpu.pipeline_mode<synchronous>, transform_indices = @transform_8, window_bounds = array<i64: 2, 32, 32>}, {pipeline_mode = #tpu.pipeline_mode<synchronous>, transform_indices = @transform_9, window_bounds = array<i64: 2, 1, 32>}, {pipeline_mode = #tpu.pipeline_mode<synchronous>, transform_indices = @transform_10, window_bounds = array<i64: 2, 1, 32>}, {pipeline_mode = #tpu.pipeline_mode<synchronous>, transform_indices = @transform_11, window_bounds = array<i64: 2, 1, 32>}, {pipeline_mode = #tpu.pipeline_mode<synchronous>, transform_indices = @transform_12, window_bounds = array<i64: 2, 32, 64>}, {pipeline_mode = #tpu.pipeline_mode<synchronous>, transform_indices = @transform_13, window_bounds = array<i64: 2, 1, 64>}, {pipeline_mode = #tpu.pipeline_mode<synchronous>, transform_indices = @transform_14, window_bounds = array<i64: 2, 64, 32>}, {pipeline_mode = #tpu.pipeline_mode<synchronous>, transform_indices = @transform_15, window_bounds = array<i64: 2, 1, 32>}, {pipeline_mode = #tpu.pipeline_mode<synchronous>, transform_indices = @transform_16, window_bounds = array<i64: 2, 1, 32>}, {pipeline_mode = #tpu.pipeline_mode<synchronous>, transform_indices = @transform_17, window_bounds = array<i64: 2, 1, 32>}, {transform_indices = @transform_18, window_bounds = array<i64: 3, 1, 8, 32>}, {transform_indices = @transform_19, window_bounds = array<i64: 2, 1, 8, 8>}]} {
    %c0 = arith.constant 0 : index
    %c0_0 = arith.constant 0 : index
    %c0_1 = arith.constant 0 : index
    %0 = vector.load %arg1[%c0, %c0_0, %c0_1] : memref<1x8x32xf32, #tpu.memory_space<vmem>>, vector<1x8x32xf32>
    %1 = vector.shape_cast %0 : vector<1x8x32xf32> to vector<8x32xf32>
    %c0_2 = arith.constant 0 : index
    %c0_3 = arith.constant 0 : index
    %c0_4 = arith.constant 0 : index
    %2 = vector.load %arg2[%c0_2, %c0_3, %c0_4] : memref<1x8x32xf32, #tpu.memory_space<vmem>>, vector<1x8x32xf32>
    %3 = vector.shape_cast %2 : vector<1x8x32xf32> to vector<8x32xf32>
    %c0_5 = arith.constant 0 : index
    %c0_6 = arith.constant 0 : index
    %c0_7 = arith.constant 0 : index
    %c0_8 = arith.constant 0 : index
    %4 = vector.load %arg19[%c0_5, %c0_6, %c0_7, %c0_8] : memref<3x1x8x32xf32, #tpu.memory_space<vmem>>, vector<1x1x8x32xf32>
    %5 = vector.shape_cast %4 : vector<1x1x8x32xf32> to vector<8x32xf32>
    %6 = vector.shape_cast %1 : vector<8x32xf32> to vector<1x1x8x32xf32>
    tpu.vector_store %arg19[%c0_5, %c0_6, %c0_7, %c0_8], %6 {strides = array<i32>} : memref<3x1x8x32xf32, #tpu.memory_space<vmem>>, vector<1x1x8x32xf32>,
    %7 = arith.addf %1, %3 : vector<8x32xf32>
    %c0_9 = arith.constant 0 : index
    %c0_10 = arith.constant 0 : index
    %c0_11 = arith.constant 0 : index
    %8 = vector.load %arg3[%c0_9, %c0_10, %c0_11] : memref<2x32x32xf32, #tpu.memory_space<vmem>>, vector<1x32x32xf32>
    %9 = vector.shape_cast %8 : vector<1x32x32xf32> to vector<32x32xf32>
    %cst = arith.constant dense<0.000000e+00> : vector<8x32xf32>
    %10 = tpu.matmul %7, %9, %cst {dimension_numbers = #tpu.dot_dimension_numbers<[1], [0], [0], [1], [0, 0, 1, 1], [], []>} : vector<8x32xf32>, vector<32x32xf32>, vector<8x32xf32> -> vector<8x32xf32>
    %c0_12 = arith.constant 0 : index
    %c0_13 = arith.constant 0 : index
    %c0_14 = arith.constant 0 : index
    %11 = vector.load %arg4[%c0_12, %c0_13, %c0_14] : memref<2x1x32xf32, #tpu.memory_space<vmem>>, vector<1x1x32xf32>
    %12 = vector.shape_cast %11 : vector<1x1x32xf32> to vector<1x32xf32>
    %13 = vector.broadcast %12 : vector<1x32xf32> to vector<8x32xf32>
    %14 = arith.addf %10, %13 : vector<8x32xf32>
    %c0_15 = arith.constant 0 : index
    %c0_16 = arith.constant 0 : index
    %c0_17 = arith.constant 0 : index
    %15 = vector.load %arg5[%c0_15, %c0_16, %c0_17] : memref<2x32x32xf32, #tpu.memory_space<vmem>>, vector<1x32x32xf32>
    %16 = vector.shape_cast %15 : vector<1x32x32xf32> to vector<32x32xf32>
    %cst_18 = arith.constant dense<0.000000e+00> : vector<32x8xf32>
    %17 = tpu.matmul %16, %7, %cst_18 {dimension_numbers = #tpu.dot_dimension_numbers<[1], [1], [0], [0], [0, 0, 1, 0], [], []>} : vector<32x32xf32>, vector<8x32xf32>, vector<32x8xf32> -> vector<32x8xf32>
    %c0_19 = arith.constant 0 : index
    %c0_20 = arith.constant 0 : index
    %c0_21 = arith.constant 0 : index
    %18 = vector.load %arg6[%c0_19, %c0_20, %c0_21] : memref<2x32x1xf32, #tpu.memory_space<vmem>>, vector<1x32x1xf32>
    %19 = vector.shape_cast %18 : vector<1x32x1xf32> to vector<32x1xf32>
    %20 = vector.broadcast %19 : vector<32x1xf32> to vector<32x8xf32>
    %21 = arith.addf %17, %20 : vector<32x8xf32>
    %c0_22 = arith.constant 0 : index
    %c0_23 = arith.constant 0 : index
    %c0_24 = arith.constant 0 : index
    %22 = vector.load %arg7[%c0_22, %c0_23, %c0_24] : memref<2x32x32xf32, #tpu.memory_space<vmem>>, vector<1x32x32xf32>
    %23 = vector.shape_cast %22 : vector<1x32x32xf32> to vector<32x32xf32>
    %cst_25 = arith.constant dense<0.000000e+00> : vector<8x32xf32>
    %24 = tpu.matmul %1, %23, %cst_25 {dimension_numbers = #tpu.dot_dimension_numbers<[1], [0], [0], [1], [0, 0, 1, 1], [], []>} : vector<8x32xf32>, vector<32x32xf32>, vector<8x32xf32> -> vector<8x32xf32>
    %c0_26 = arith.constant 0 : index
    %c0_27 = arith.constant 0 : index
    %c0_28 = arith.constant 0 : index
    %25 = vector.load %arg8[%c0_26, %c0_27, %c0_28] : memref<2x1x32xf32, #tpu.memory_space<vmem>>, vector<1x1x32xf32>
    %26 = vector.shape_cast %25 : vector<1x1x32xf32> to vector<1x32xf32>
    %27 = vector.broadcast %26 : vector<1x32xf32> to vector<8x32xf32>
    %28 = arith.addf %24, %27 : vector<8x32xf32>
    %c0_29 = arith.constant 0 : index
    %c0_30 = arith.constant 0 : index
    %c0_31 = arith.constant 0 : index
    %29 = vector.load %arg9[%c0_29, %c0_30, %c0_31] : memref<2x32x32xf32, #tpu.memory_space<vmem>>, vector<1x32x32xf32>
    %30 = vector.shape_cast %29 : vector<1x32x32xf32> to vector<32x32xf32>
    %cst_32 = arith.constant 0.000000e+00 : f32
    %31 = vector.broadcast %cst_32 : f32 to vector<8x32xf32>
    %cst_33 = arith.constant 0.000000e+00 : f32
    %32 = vector.broadcast %cst_33 : f32 to vector<8x8xf32>
    %33 = vector.extract_strided_slice %14 {offsets = [0, 0], sizes = [8, 8], strides = [1, 1]} : vector<8x32xf32> to vector<8x8xf32>
    %34 = vector.extract_strided_slice %21 {offsets = [0, 0], sizes = [8, 8], strides = [1, 1]} : vector<32x8xf32> to vector<8x8xf32>
    %cst_34 = arith.constant dense<0.000000e+00> : vector<8x8xf32>
    %35 = tpu.matmul %33, %34, %cst_34 {dimension_numbers = #tpu.dot_dimension_numbers<[1], [0], [0], [1], [0, 0, 1, 1], [], []>} : vector<8x8xf32>, vector<8x8xf32>, vector<8x8xf32> -> vector<8x8xf32>
    %cst_35 = arith.constant dense<0xFF800000> : vector<8xf32>
    %36 = vector.multi_reduction <maximumf>, %35, %cst_35 [1] : vector<8x8xf32> to vector<8xf32>
    %37 = vector.shape_cast %36 : vector<8xf32> to vector<8x1xf32>
    %38 = vector.broadcast %37 : vector<8x1xf32> to vector<8x8xf32>
    %39 = arith.subf %35, %38 : vector<8x8xf32>
    %40 = math.exp %39 : vector<8x8xf32>
    %cst_36 = arith.constant dense<0.000000e+00> : vector<8xf32>
    %41 = vector.multi_reduction <add>, %40, %cst_36 [1] : vector<8x8xf32> to vector<8xf32>
    %42 = vector.shape_cast %41 : vector<8xf32> to vector<8x1xf32>
    %43 = tpu.reciprocal %42 : vector<8x1xf32> -> vector<8x1xf32>
    %44 = vector.broadcast %43 : vector<8x1xf32> to vector<8x8xf32>
    %45 = arith.mulf %40, %44 : vector<8x8xf32>
    %46 = arith.addf %32, %45 : vector<8x8xf32>
    %47 = vector.extract_strided_slice %28 {offsets = [0, 0], sizes = [8, 8], strides = [1, 1]} : vector<8x32xf32> to vector<8x8xf32>
    %cst_37 = arith.constant dense<0.000000e+00> : vector<8x8xf32>
    %48 = tpu.matmul %45, %47, %cst_37 {dimension_numbers = #tpu.dot_dimension_numbers<[1], [0], [0], [1], [0, 0, 1, 1], [], []>} : vector<8x8xf32>, vector<8x8xf32>, vector<8x8xf32> -> vector<8x8xf32>
    %49 = vector.extract_strided_slice %30 {offsets = [0, 0], sizes = [8, 32], strides = [1, 1]} : vector<32x32xf32> to vector<8x32xf32>
    %cst_38 = arith.constant dense<0.000000e+00> : vector<8x32xf32>
    %50 = tpu.matmul %48, %49, %cst_38 {dimension_numbers = #tpu.dot_dimension_numbers<[1], [0], [0], [1], [0, 0, 1, 1], [], []>} : vector<8x8xf32>, vector<8x32xf32>, vector<8x32xf32> -> vector<8x32xf32>
    %51 = arith.addf %31, %50 : vector<8x32xf32>
    %52 = vector.extract_strided_slice %14 {offsets = [0, 8], sizes = [8, 8], strides = [1, 1]} : vector<8x32xf32> to vector<8x8xf32>
    %53 = vector.extract_strided_slice %21 {offsets = [8, 0], sizes = [8, 8], strides = [1, 1]} : vector<32x8xf32> to vector<8x8xf32>
    %cst_39 = arith.constant dense<0.000000e+00> : vector<8x8xf32>
    %54 = tpu.matmul %52, %53, %cst_39 {dimension_numbers = #tpu.dot_dimension_numbers<[1], [0], [0], [1], [0, 0, 1, 1], [], []>} : vector<8x8xf32>, vector<8x8xf32>, vector<8x8xf32> -> vector<8x8xf32>
    %cst_40 = arith.constant dense<0xFF800000> : vector<8xf32>
    %55 = vector.multi_reduction <maximumf>, %54, %cst_40 [1] : vector<8x8xf32> to vector<8xf32>
    %56 = vector.shape_cast %55 : vector<8xf32> to vector<8x1xf32>
    %57 = vector.broadcast %56 : vector<8x1xf32> to vector<8x8xf32>
    %58 = arith.subf %54, %57 : vector<8x8xf32>
    %59 = math.exp %58 : vector<8x8xf32>
    %cst_41 = arith.constant dense<0.000000e+00> : vector<8xf32>
    %60 = vector.multi_reduction <add>, %59, %cst_41 [1] : vector<8x8xf32> to vector<8xf32>
    %61 = vector.shape_cast %60 : vector<8xf32> to vector<8x1xf32>
    %62 = tpu.reciprocal %61 : vector<8x1xf32> -> vector<8x1xf32>
    %63 = vector.broadcast %62 : vector<8x1xf32> to vector<8x8xf32>
    %64 = arith.mulf %59, %63 : vector<8x8xf32>
    %65 = arith.addf %46, %64 : vector<8x8xf32>
    %66 = vector.extract_strided_slice %28 {offsets = [0, 8], sizes = [8, 8], strides = [1, 1]} : vector<8x32xf32> to vector<8x8xf32>
    %cst_42 = arith.constant dense<0.000000e+00> : vector<8x8xf32>
    %67 = tpu.matmul %64, %66, %cst_42 {dimension_numbers = #tpu.dot_dimension_numbers<[1], [0], [0], [1], [0, 0, 1, 1], [], []>} : vector<8x8xf32>, vector<8x8xf32>, vector<8x8xf32> -> vector<8x8xf32>
    %68 = vector.extract_strided_slice %30 {offsets = [8, 0], sizes = [8, 32], strides = [1, 1]} : vector<32x32xf32> to vector<8x32xf32>
    %cst_43 = arith.constant dense<0.000000e+00> : vector<8x32xf32>
    %69 = tpu.matmul %67, %68, %cst_43 {dimension_numbers = #tpu.dot_dimension_numbers<[1], [0], [0], [1], [0, 0, 1, 1], [], []>} : vector<8x8xf32>, vector<8x32xf32>, vector<8x32xf32> -> vector<8x32xf32>
    %70 = arith.addf %51, %69 : vector<8x32xf32>
    %71 = vector.extract_strided_slice %14 {offsets = [0, 16], sizes = [8, 8], strides = [1, 1]} : vector<8x32xf32> to vector<8x8xf32>
    %72 = vector.extract_strided_slice %21 {offsets = [16, 0], sizes = [8, 8], strides = [1, 1]} : vector<32x8xf32> to vector<8x8xf32>
    %cst_44 = arith.constant dense<0.000000e+00> : vector<8x8xf32>
    %73 = tpu.matmul %71, %72, %cst_44 {dimension_numbers = #tpu.dot_dimension_numbers<[1], [0], [0], [1], [0, 0, 1, 1], [], []>} : vector<8x8xf32>, vector<8x8xf32>, vector<8x8xf32> -> vector<8x8xf32>
    %cst_45 = arith.constant dense<0xFF800000> : vector<8xf32>
    %74 = vector.multi_reduction <maximumf>, %73, %cst_45 [1] : vector<8x8xf32> to vector<8xf32>
    %75 = vector.shape_cast %74 : vector<8xf32> to vector<8x1xf32>
    %76 = vector.broadcast %75 : vector<8x1xf32> to vector<8x8xf32>
    %77 = arith.subf %73, %76 : vector<8x8xf32>
    %78 = math.exp %77 : vector<8x8xf32>
    %cst_46 = arith.constant dense<0.000000e+00> : vector<8xf32>
    %79 = vector.multi_reduction <add>, %78, %cst_46 [1] : vector<8x8xf32> to vector<8xf32>
    %80 = vector.shape_cast %79 : vector<8xf32> to vector<8x1xf32>
    %81 = tpu.reciprocal %80 : vector<8x1xf32> -> vector<8x1xf32>
    %82 = vector.broadcast %81 : vector<8x1xf32> to vector<8x8xf32>
    %83 = arith.mulf %78, %82 : vector<8x8xf32>
    %84 = arith.addf %65, %83 : vector<8x8xf32>
    %85 = vector.extract_strided_slice %28 {offsets = [0, 16], sizes = [8, 8], strides = [1, 1]} : vector<8x32xf32> to vector<8x8xf32>
    %cst_47 = arith.constant dense<0.000000e+00> : vector<8x8xf32>
    %86 = tpu.matmul %83, %85, %cst_47 {dimension_numbers = #tpu.dot_dimension_numbers<[1], [0], [0], [1], [0, 0, 1, 1], [], []>} : vector<8x8xf32>, vector<8x8xf32>, vector<8x8xf32> -> vector<8x8xf32>
    %87 = vector.extract_strided_slice %30 {offsets = [16, 0], sizes = [8, 32], strides = [1, 1]} : vector<32x32xf32> to vector<8x32xf32>
    %cst_48 = arith.constant dense<0.000000e+00> : vector<8x32xf32>
    %88 = tpu.matmul %86, %87, %cst_48 {dimension_numbers = #tpu.dot_dimension_numbers<[1], [0], [0], [1], [0, 0, 1, 1], [], []>} : vector<8x8xf32>, vector<8x32xf32>, vector<8x32xf32> -> vector<8x32xf32>
    %89 = arith.addf %70, %88 : vector<8x32xf32>
    %90 = vector.extract_strided_slice %14 {offsets = [0, 24], sizes = [8, 8], strides = [1, 1]} : vector<8x32xf32> to vector<8x8xf32>
    %91 = vector.extract_strided_slice %21 {offsets = [24, 0], sizes = [8, 8], strides = [1, 1]} : vector<32x8xf32> to vector<8x8xf32>
    %cst_49 = arith.constant dense<0.000000e+00> : vector<8x8xf32>
    %92 = tpu.matmul %90, %91, %cst_49 {dimension_numbers = #tpu.dot_dimension_numbers<[1], [0], [0], [1], [0, 0, 1, 1], [], []>} : vector<8x8xf32>, vector<8x8xf32>, vector<8x8xf32> -> vector<8x8xf32>
    %cst_50 = arith.constant dense<0xFF800000> : vector<8xf32>
    %93 = vector.multi_reduction <maximumf>, %92, %cst_50 [1] : vector<8x8xf32> to vector<8xf32>
    %94 = vector.shape_cast %93 : vector<8xf32> to vector<8x1xf32>
    %95 = vector.broadcast %94 : vector<8x1xf32> to vector<8x8xf32>
    %96 = arith.subf %92, %95 : vector<8x8xf32>
    %97 = math.exp %96 : vector<8x8xf32>
    %cst_51 = arith.constant dense<0.000000e+00> : vector<8xf32>
    %98 = vector.multi_reduction <add>, %97, %cst_51 [1] : vector<8x8xf32> to vector<8xf32>
    %99 = vector.shape_cast %98 : vector<8xf32> to vector<8x1xf32>
    %100 = tpu.reciprocal %99 : vector<8x1xf32> -> vector<8x1xf32>
    %101 = vector.broadcast %100 : vector<8x1xf32> to vector<8x8xf32>
    %102 = arith.mulf %97, %101 : vector<8x8xf32>
    %103 = arith.addf %84, %102 : vector<8x8xf32>
    %104 = vector.extract_strided_slice %28 {offsets = [0, 24], sizes = [8, 8], strides = [1, 1]} : vector<8x32xf32> to vector<8x8xf32>
    %cst_52 = arith.constant dense<0.000000e+00> : vector<8x8xf32>
    %105 = tpu.matmul %102, %104, %cst_52 {dimension_numbers = #tpu.dot_dimension_numbers<[1], [0], [0], [1], [0, 0, 1, 1], [], []>} : vector<8x8xf32>, vector<8x8xf32>, vector<8x8xf32> -> vector<8x8xf32>
    %106 = vector.extract_strided_slice %30 {offsets = [24, 0], sizes = [8, 32], strides = [1, 1]} : vector<32x32xf32> to vector<8x32xf32>
    %cst_53 = arith.constant dense<0.000000e+00> : vector<8x32xf32>
    %107 = tpu.matmul %105, %106, %cst_53 {dimension_numbers = #tpu.dot_dimension_numbers<[1], [0], [0], [1], [0, 0, 1, 1], [], []>} : vector<8x8xf32>, vector<8x32xf32>, vector<8x32xf32> -> vector<8x32xf32>
    %108 = arith.addf %89, %107 : vector<8x32xf32>
    %c0_54 = arith.constant 0 : index
    %c0_55 = arith.constant 0 : index
    %c0_56 = arith.constant 0 : index
    %109 = vector.load %arg10[%c0_54, %c0_55, %c0_56] : memref<2x1x32xf32, #tpu.memory_space<vmem>>, vector<1x1x32xf32>
    %110 = vector.shape_cast %109 : vector<1x1x32xf32> to vector<1x32xf32>
    %111 = vector.broadcast %110 : vector<1x32xf32> to vector<8x32xf32>
    %112 = arith.addf %108, %111 : vector<8x32xf32>
    %113 = arith.addf %1, %112 : vector<8x32xf32>
    %c0_57 = arith.constant 0 : index
    %c0_58 = arith.constant 0 : index
    %c0_59 = arith.constant 0 : index
    %114 = vector.load %arg11[%c0_57, %c0_58, %c0_59] : memref<2x1x32xf32, #tpu.memory_space<vmem>>, vector<1x1x32xf32>
    %115 = vector.shape_cast %114 : vector<1x1x32xf32> to vector<1x32xf32>
    %c0_60 = arith.constant 0 : index
    %c0_61 = arith.constant 0 : index
    %c0_62 = arith.constant 0 : index
    %116 = vector.load %arg12[%c0_60, %c0_61, %c0_62] : memref<2x1x32xf32, #tpu.memory_space<vmem>>, vector<1x1x32xf32>
    %117 = vector.shape_cast %116 : vector<1x1x32xf32> to vector<1x32xf32>
    %cst_63 = arith.constant dense<0.000000e+00> : vector<8xf32>
    %118 = vector.multi_reduction <add>, %113, %cst_63 [1] : vector<8x32xf32> to vector<8xf32>
    %119 = vector.shape_cast %118 : vector<8xf32> to vector<8x1xf32>
    %cst_64 = arith.constant 3.200000e+01 : f32
    %120 = vector.broadcast %cst_64 : f32 to vector<8x1xf32>
    %121 = arith.divf %119, %120 : vector<8x1xf32>
    %122 = vector.broadcast %121 : vector<8x1xf32> to vector<8x32xf32>
    %123 = arith.subf %113, %122 : vector<8x32xf32>
    %124 = arith.mulf %123, %123 : vector<8x32xf32>
    %cst_65 = arith.constant dense<0.000000e+00> : vector<8xf32>
    %125 = vector.multi_reduction <add>, %124, %cst_65 [1] : vector<8x32xf32> to vector<8xf32>
    %126 = vector.shape_cast %125 : vector<8xf32> to vector<8x1xf32>
    %cst_66 = arith.constant 3.200000e+01 : f32
    %127 = vector.broadcast %cst_66 : f32 to vector<8x1xf32>
    %128 = arith.divf %126, %127 : vector<8x1xf32>
    %129 = vector.broadcast %121 : vector<8x1xf32> to vector<8x32xf32>
    %130 = arith.subf %113, %129 : vector<8x32xf32>
    %cst_67 = arith.constant 9.99999974E-6 : f32
    %131 = vector.broadcast %cst_67 : f32 to vector<8x1xf32>
    %132 = arith.addf %128, %131 : vector<8x1xf32>
    %133 = math.rsqrt %132 : vector<8x1xf32>
    %134 = vector.broadcast %133 : vector<8x1xf32> to vector<8x32xf32>
    %135 = arith.mulf %130, %134 : vector<8x32xf32>
    %136 = vector.broadcast %115 : vector<1x32xf32> to vector<8x32xf32>
    %137 = arith.mulf %135, %136 : vector<8x32xf32>
    %138 = vector.broadcast %117 : vector<1x32xf32> to vector<8x32xf32>
    %139 = arith.addf %137, %138 : vector<8x32xf32>
    %c0_68 = arith.constant 0 : index
    %c0_69 = arith.constant 0 : index
    %c0_70 = arith.constant 0 : index
    %140 = vector.load %arg13[%c0_68, %c0_69, %c0_70] : memref<2x32x64xf32, #tpu.memory_space<vmem>>, vector<1x32x64xf32>
    %141 = vector.shape_cast %140 : vector<1x32x64xf32> to vector<32x64xf32>
    %cst_71 = arith.constant dense<0.000000e+00> : vector<8x64xf32>
    %142 = tpu.matmul %139, %141, %cst_71 {dimension_numbers = #tpu.dot_dimension_numbers<[1], [0], [0], [1], [0, 0, 1, 1], [], []>} : vector<8x32xf32>, vector<32x64xf32>, vector<8x64xf32> -> vector<8x64xf32>
    %c0_72 = arith.constant 0 : index
    %c0_73 = arith.constant 0 : index
    %c0_74 = arith.constant 0 : index
    %143 = vector.load %arg14[%c0_72, %c0_73, %c0_74] : memref<2x1x64xf32, #tpu.memory_space<vmem>>, vector<1x1x64xf32>
    %144 = vector.shape_cast %143 : vector<1x1x64xf32> to vector<1x64xf32>
    %145 = vector.broadcast %144 : vector<1x64xf32> to vector<8x64xf32>
    %146 = arith.addf %142, %145 : vector<8x64xf32>
    %cst_75 = arith.constant 0.000000e+00 : f32
    %147 = vector.broadcast %cst_75 : f32 to vector<8x64xf32>
    %148 = arith.maximumf %146, %147 : vector<8x64xf32>
    %c0_76 = arith.constant 0 : index
    %c0_77 = arith.constant 0 : index
    %c0_78 = arith.constant 0 : index
    %149 = vector.load %arg15[%c0_76, %c0_77, %c0_78] : memref<2x64x32xf32, #tpu.memory_space<vmem>>, vector<1x64x32xf32>
    %150 = vector.shape_cast %149 : vector<1x64x32xf32> to vector<64x32xf32>
    %cst_79 = arith.constant dense<0.000000e+00> : vector<8x32xf32>
    %151 = tpu.matmul %148, %150, %cst_79 {dimension_numbers = #tpu.dot_dimension_numbers<[1], [0], [0], [1], [0, 0, 1, 1], [], []>} : vector<8x64xf32>, vector<64x32xf32>, vector<8x32xf32> -> vector<8x32xf32>
    %c0_80 = arith.constant 0 : index
    %c0_81 = arith.constant 0 : index
    %c0_82 = arith.constant 0 : index
    %152 = vector.load %arg16[%c0_80, %c0_81, %c0_82] : memref<2x1x32xf32, #tpu.memory_space<vmem>>, vector<1x1x32xf32>
    %153 = vector.shape_cast %152 : vector<1x1x32xf32> to vector<1x32xf32>
    %154 = vector.broadcast %153 : vector<1x32xf32> to vector<8x32xf32>
    %155 = arith.addf %151, %154 : vector<8x32xf32>
    %156 = arith.addf %139, %155 : vector<8x32xf32>
    %c0_83 = arith.constant 0 : index
    %c0_84 = arith.constant 0 : index
    %c0_85 = arith.constant 0 : index
    %157 = vector.load %arg17[%c0_83, %c0_84, %c0_85] : memref<2x1x32xf32, #tpu.memory_space<vmem>>, vector<1x1x32xf32>
    %158 = vector.shape_cast %157 : vector<1x1x32xf32> to vector<1x32xf32>
    %c0_86 = arith.constant 0 : index
    %c0_87 = arith.constant 0 : index
    %c0_88 = arith.constant 0 : index
    %159 = vector.load %arg18[%c0_86, %c0_87, %c0_88] : memref<2x1x32xf32, #tpu.memory_space<vmem>>, vector<1x1x32xf32>
    %160 = vector.shape_cast %159 : vector<1x1x32xf32> to vector<1x32xf32>
    %cst_89 = arith.constant dense<0.000000e+00> : vector<8xf32>
    %161 = vector.multi_reduction <add>, %156, %cst_89 [1] : vector<8x32xf32> to vector<8xf32>
    %162 = vector.shape_cast %161 : vector<8xf32> to vector<8x1xf32>
    %cst_90 = arith.constant 3.200000e+01 : f32
    %163 = vector.broadcast %cst_90 : f32 to vector<8x1xf32>
    %164 = arith.divf %162, %163 : vector<8x1xf32>
    %165 = vector.broadcast %164 : vector<8x1xf32> to vector<8x32xf32>
    %166 = arith.subf %156, %165 : vector<8x32xf32>
    %167 = arith.mulf %166, %166 : vector<8x32xf32>
    %cst_91 = arith.constant dense<0.000000e+00> : vector<8xf32>
    %168 = vector.multi_reduction <add>, %167, %cst_91 [1] : vector<8x32xf32> to vector<8xf32>
    %169 = vector.shape_cast %168 : vector<8xf32> to vector<8x1xf32>
    %cst_92 = arith.constant 3.200000e+01 : f32
    %170 = vector.broadcast %cst_92 : f32 to vector<8x1xf32>
    %171 = arith.divf %169, %170 : vector<8x1xf32>
    %172 = vector.broadcast %164 : vector<8x1xf32> to vector<8x32xf32>
    %173 = arith.subf %156, %172 : vector<8x32xf32>
    %cst_93 = arith.constant 9.99999974E-6 : f32
    %174 = vector.broadcast %cst_93 : f32 to vector<8x1xf32>
    %175 = arith.addf %171, %174 : vector<8x1xf32>
    %176 = math.rsqrt %175 : vector<8x1xf32>
    %177 = vector.broadcast %176 : vector<8x1xf32> to vector<8x32xf32>
    %178 = arith.mulf %173, %177 : vector<8x32xf32>
    %179 = vector.broadcast %158 : vector<1x32xf32> to vector<8x32xf32>
    %180 = arith.mulf %178, %179 : vector<8x32xf32>
    %181 = vector.broadcast %160 : vector<1x32xf32> to vector<8x32xf32>
    %182 = arith.addf %180, %181 : vector<8x32xf32>
    %c1 = arith.constant 1 : index
    %c0_94 = arith.constant 0 : index
    %c0_95 = arith.constant 0 : index
    %c0_96 = arith.constant 0 : index
    %183 = vector.load %arg19[%c1, %c0_94, %c0_95, %c0_96] : memref<3x1x8x32xf32, #tpu.memory_space<vmem>>, vector<1x1x8x32xf32>
    %184 = vector.shape_cast %183 : vector<1x1x8x32xf32> to vector<8x32xf32>
    %185 = vector.shape_cast %182 : vector<8x32xf32> to vector<1x1x8x32xf32>
    tpu.vector_store %arg19[%c1, %c0_94, %c0_95, %c0_96], %185 {strides = array<i32>} : memref<3x1x8x32xf32, #tpu.memory_space<vmem>>, vector<1x1x8x32xf32>,
    %cst_97 = arith.constant 2.500000e-01 : f32
    %186 = vector.broadcast %cst_97 : f32 to vector<8x8xf32>
    %187 = arith.mulf %103, %186 : vector<8x8xf32>
    %c0_98 = arith.constant 0 : index
    %c0_99 = arith.constant 0 : index
    %c0_100 = arith.constant 0 : index
    %c0_101 = arith.constant 0 : index
    %188 = vector.load %arg20[%c0_98, %c0_99, %c0_100, %c0_101] : memref<2x1x8x8xf32, #tpu.memory_space<vmem>>, vector<1x1x8x8xf32>
    %189 = vector.shape_cast %188 : vector<1x1x8x8xf32> to vector<8x8xf32>
    %190 = vector.shape_cast %187 : vector<8x8xf32> to vector<1x1x8x8xf32>
    tpu.vector_store %arg20[%c0_98, %c0_99, %c0_100, %c0_101], %190 {strides = array<i32>} : memref<2x1x8x8xf32, #tpu.memory_space<vmem>>, vector<1x1x8x8xf32>,
    %191 = arith.addf %182, %3 : vector<8x32xf32>
    %c1_102 = arith.constant 1 : index
    %c0_103 = arith.constant 0 : index
    %c0_104 = arith.constant 0 : index
    %192 = vector.load %arg3[%c1_102, %c0_103, %c0_104] : memref<2x32x32xf32, #tpu.memory_space<vmem>>, vector<1x32x32xf32>
    %193 = vector.shape_cast %192 : vector<1x32x32xf32> to vector<32x32xf32>
    %cst_105 = arith.constant dense<0.000000e+00> : vector<8x32xf32>
    %194 = tpu.matmul %191, %193, %cst_105 {dimension_numbers = #tpu.dot_dimension_numbers<[1], [0], [0], [1], [0, 0, 1, 1], [], []>} : vector<8x32xf32>, vector<32x32xf32>, vector<8x32xf32> -> vector<8x32xf32>
    %c1_106 = arith.constant 1 : index
    %c0_107 = arith.constant 0 : index
    %c0_108 = arith.constant 0 : index
    %195 = vector.load %arg4[%c1_106, %c0_107, %c0_108] : memref<2x1x32xf32, #tpu.memory_space<vmem>>, vector<1x1x32xf32>
    %196 = vector.shape_cast %195 : vector<1x1x32xf32> to vector<1x32xf32>
    %197 = vector.broadcast %196 : vector<1x32xf32> to vector<8x32xf32>
    %198 = arith.addf %194, %197 : vector<8x32xf32>
    %c1_109 = arith.constant 1 : index
    %c0_110 = arith.constant 0 : index
    %c0_111 = arith.constant 0 : index
    %199 = vector.load %arg5[%c1_109, %c0_110, %c0_111] : memref<2x32x32xf32, #tpu.memory_space<vmem>>, vector<1x32x32xf32>
    %200 = vector.shape_cast %199 : vector<1x32x32xf32> to vector<32x32xf32>
    %cst_112 = arith.constant dense<0.000000e+00> : vector<32x8xf32>
    %201 = tpu.matmul %200, %191, %cst_112 {dimension_numbers = #tpu.dot_dimension_numbers<[1], [1], [0], [0], [0, 0, 1, 0], [], []>} : vector<32x32xf32>, vector<8x32xf32>, vector<32x8xf32> -> vector<32x8xf32>
    %c1_113 = arith.constant 1 : index
    %c0_114 = arith.constant 0 : index
    %c0_115 = arith.constant 0 : index
    %202 = vector.load %arg6[%c1_113, %c0_114, %c0_115] : memref<2x32x1xf32, #tpu.memory_space<vmem>>, vector<1x32x1xf32>
    %203 = vector.shape_cast %202 : vector<1x32x1xf32> to vector<32x1xf32>
    %204 = vector.broadcast %203 : vector<32x1xf32> to vector<32x8xf32>
    %205 = arith.addf %201, %204 : vector<32x8xf32>
    %c1_116 = arith.constant 1 : index
    %c0_117 = arith.constant 0 : index
    %c0_118 = arith.constant 0 : index
    %206 = vector.load %arg7[%c1_116, %c0_117, %c0_118] : memref<2x32x32xf32, #tpu.memory_space<vmem>>, vector<1x32x32xf32>
    %207 = vector.shape_cast %206 : vector<1x32x32xf32> to vector<32x32xf32>
    %cst_119 = arith.constant dense<0.000000e+00> : vector<8x32xf32>
    %208 = tpu.matmul %182, %207, %cst_119 {dimension_numbers = #tpu.dot_dimension_numbers<[1], [0], [0], [1], [0, 0, 1, 1], [], []>} : vector<8x32xf32>, vector<32x32xf32>, vector<8x32xf32> -> vector<8x32xf32>
    %c1_120 = arith.constant 1 : index
    %c0_121 = arith.constant 0 : index
    %c0_122 = arith.constant 0 : index
    %209 = vector.load %arg8[%c1_120, %c0_121, %c0_122] : memref<2x1x32xf32, #tpu.memory_space<vmem>>, vector<1x1x32xf32>
    %210 = vector.shape_cast %209 : vector<1x1x32xf32> to vector<1x32xf32>
    %211 = vector.broadcast %210 : vector<1x32xf32> to vector<8x32xf32>
    %212 = arith.addf %208, %211 : vector<8x32xf32>
    %c1_123 = arith.constant 1 : index
    %c0_124 = arith.constant 0 : index
    %c0_125 = arith.constant 0 : index
    %213 = vector.load %arg9[%c1_123, %c0_124, %c0_125] : memref<2x32x32xf32, #tpu.memory_space<vmem>>, vector<1x32x32xf32>
    %214 = vector.shape_cast %213 : vector<1x32x32xf32> to vector<32x32xf32>
    %cst_126 = arith.constant 0.000000e+00 : f32
    %215 = vector.broadcast %cst_126 : f32 to vector<8x32xf32>
    %cst_127 = arith.constant 0.000000e+00 : f32
    %216 = vector.broadcast %cst_127 : f32 to vector<8x8xf32>
    %217 = vector.extract_strided_slice %198 {offsets = [0, 0], sizes = [8, 8], strides = [1, 1]} : vector<8x32xf32> to vector<8x8xf32>
    %218 = vector.extract_strided_slice %205 {offsets = [0, 0], sizes = [8, 8], strides = [1, 1]} : vector<32x8xf32> to vector<8x8xf32>
    %cst_128 = arith.constant dense<0.000000e+00> : vector<8x8xf32>
    %219 = tpu.matmul %217, %218, %cst_128 {dimension_numbers = #tpu.dot_dimension_numbers<[1], [0], [0], [1], [0, 0, 1, 1], [], []>} : vector<8x8xf32>, vector<8x8xf32>, vector<8x8xf32> -> vector<8x8xf32>
    %cst_129 = arith.constant dense<0xFF800000> : vector<8xf32>
    %220 = vector.multi_reduction <maximumf>, %219, %cst_129 [1] : vector<8x8xf32> to vector<8xf32>
    %221 = vector.shape_cast %220 : vector<8xf32> to vector<8x1xf32>
    %222 = vector.broadcast %221 : vector<8x1xf32> to vector<8x8xf32>
    %223 = arith.subf %219, %222 : vector<8x8xf32>
    %224 = math.exp %223 : vector<8x8xf32>
    %cst_130 = arith.constant dense<0.000000e+00> : vector<8xf32>
    %225 = vector.multi_reduction <add>, %224, %cst_130 [1] : vector<8x8xf32> to vector<8xf32>
    %226 = vector.shape_cast %225 : vector<8xf32> to vector<8x1xf32>
    %227 = tpu.reciprocal %226 : vector<8x1xf32> -> vector<8x1xf32>
    %228 = vector.broadcast %227 : vector<8x1xf32> to vector<8x8xf32>
    %229 = arith.mulf %224, %228 : vector<8x8xf32>
    %230 = arith.addf %216, %229 : vector<8x8xf32>
    %231 = vector.extract_strided_slice %212 {offsets = [0, 0], sizes = [8, 8], strides = [1, 1]} : vector<8x32xf32> to vector<8x8xf32>
    %cst_131 = arith.constant dense<0.000000e+00> : vector<8x8xf32>
    %232 = tpu.matmul %229, %231, %cst_131 {dimension_numbers = #tpu.dot_dimension_numbers<[1], [0], [0], [1], [0, 0, 1, 1], [], []>} : vector<8x8xf32>, vector<8x8xf32>, vector<8x8xf32> -> vector<8x8xf32>
    %233 = vector.extract_strided_slice %214 {offsets = [0, 0], sizes = [8, 32], strides = [1, 1]} : vector<32x32xf32> to vector<8x32xf32>
    %cst_132 = arith.constant dense<0.000000e+00> : vector<8x32xf32>
    %234 = tpu.matmul %232, %233, %cst_132 {dimension_numbers = #tpu.dot_dimension_numbers<[1], [0], [0], [1], [0, 0, 1, 1], [], []>} : vector<8x8xf32>, vector<8x32xf32>, vector<8x32xf32> -> vector<8x32xf32>
    %235 = arith.addf %215, %234 : vector<8x32xf32>
    %236 = vector.extract_strided_slice %198 {offsets = [0, 8], sizes = [8, 8], strides = [1, 1]} : vector<8x32xf32> to vector<8x8xf32>
    %237 = vector.extract_strided_slice %205 {offsets = [8, 0], sizes = [8, 8], strides = [1, 1]} : vector<32x8xf32> to vector<8x8xf32>
    %cst_133 = arith.constant dense<0.000000e+00> : vector<8x8xf32>
    %238 = tpu.matmul %236, %237, %cst_133 {dimension_numbers = #tpu.dot_dimension_numbers<[1], [0], [0], [1], [0, 0, 1, 1], [], []>} : vector<8x8xf32>, vector<8x8xf32>, vector<8x8xf32> -> vector<8x8xf32>
    %cst_134 = arith.constant dense<0xFF800000> : vector<8xf32>
    %239 = vector.multi_reduction <maximumf>, %238, %cst_134 [1] : vector<8x8xf32> to vector<8xf32>
    %240 = vector.shape_cast %239 : vector<8xf32> to vector<8x1xf32>
    %241 = vector.broadcast %240 : vector<8x1xf32> to vector<8x8xf32>
    %242 = arith.subf %238, %241 : vector<8x8xf32>
    %243 = math.exp %242 : vector<8x8xf32>
    %cst_135 = arith.constant dense<0.000000e+00> : vector<8xf32>
    %244 = vector.multi_reduction <add>, %243, %cst_135 [1] : vector<8x8xf32> to vector<8xf32>
    %245 = vector.shape_cast %244 : vector<8xf32> to vector<8x1xf32>
    %246 = tpu.reciprocal %245 : vector<8x1xf32> -> vector<8x1xf32>
    %247 = vector.broadcast %246 : vector<8x1xf32> to vector<8x8xf32>
    %248 = arith.mulf %243, %247 : vector<8x8xf32>
    %249 = arith.addf %230, %248 : vector<8x8xf32>
    %250 = vector.extract_strided_slice %212 {offsets = [0, 8], sizes = [8, 8], strides = [1, 1]} : vector<8x32xf32> to vector<8x8xf32>
    %cst_136 = arith.constant dense<0.000000e+00> : vector<8x8xf32>
    %251 = tpu.matmul %248, %250, %cst_136 {dimension_numbers = #tpu.dot_dimension_numbers<[1], [0], [0], [1], [0, 0, 1, 1], [], []>} : vector<8x8xf32>, vector<8x8xf32>, vector<8x8xf32> -> vector<8x8xf32>
    %252 = vector.extract_strided_slice %214 {offsets = [8, 0], sizes = [8, 32], strides = [1, 1]} : vector<32x32xf32> to vector<8x32xf32>
    %cst_137 = arith.constant dense<0.000000e+00> : vector<8x32xf32>
    %253 = tpu.matmul %251, %252, %cst_137 {dimension_numbers = #tpu.dot_dimension_numbers<[1], [0], [0], [1], [0, 0, 1, 1], [], []>} : vector<8x8xf32>, vector<8x32xf32>, vector<8x32xf32> -> vector<8x32xf32>
    %254 = arith.addf %235, %253 : vector<8x32xf32>
    %255 = vector.extract_strided_slice %198 {offsets = [0, 16], sizes = [8, 8], strides = [1, 1]} : vector<8x32xf32> to vector<8x8xf32>
    %256 = vector.extract_strided_slice %205 {offsets = [16, 0], sizes = [8, 8], strides = [1, 1]} : vector<32x8xf32> to vector<8x8xf32>
    %cst_138 = arith.constant dense<0.000000e+00> : vector<8x8xf32>
    %257 = tpu.matmul %255, %256, %cst_138 {dimension_numbers = #tpu.dot_dimension_numbers<[1], [0], [0], [1], [0, 0, 1, 1], [], []>} : vector<8x8xf32>, vector<8x8xf32>, vector<8x8xf32> -> vector<8x8xf32>
    %cst_139 = arith.constant dense<0xFF800000> : vector<8xf32>
    %258 = vector.multi_reduction <maximumf>, %257, %cst_139 [1] : vector<8x8xf32> to vector<8xf32>
    %259 = vector.shape_cast %258 : vector<8xf32> to vector<8x1xf32>
    %260 = vector.broadcast %259 : vector<8x1xf32> to vector<8x8xf32>
    %261 = arith.subf %257, %260 : vector<8x8xf32>
    %262 = math.exp %261 : vector<8x8xf32>
    %cst_140 = arith.constant dense<0.000000e+00> : vector<8xf32>
    %263 = vector.multi_reduction <add>, %262, %cst_140 [1] : vector<8x8xf32> to vector<8xf32>
    %264 = vector.shape_cast %263 : vector<8xf32> to vector<8x1xf32>
    %265 = tpu.reciprocal %264 : vector<8x1xf32> -> vector<8x1xf32>
    %266 = vector.broadcast %265 : vector<8x1xf32> to vector<8x8xf32>
    %267 = arith.mulf %262, %266 : vector<8x8xf32>
    %268 = arith.addf %249, %267 : vector<8x8xf32>
    %269 = vector.extract_strided_slice %212 {offsets = [0, 16], sizes = [8, 8], strides = [1, 1]} : vector<8x32xf32> to vector<8x8xf32>
    %cst_141 = arith.constant dense<0.000000e+00> : vector<8x8xf32>
    %270 = tpu.matmul %267, %269, %cst_141 {dimension_numbers = #tpu.dot_dimension_numbers<[1], [0], [0], [1], [0, 0, 1, 1], [], []>} : vector<8x8xf32>, vector<8x8xf32>, vector<8x8xf32> -> vector<8x8xf32>
    %271 = vector.extract_strided_slice %214 {offsets = [16, 0], sizes = [8, 32], strides = [1, 1]} : vector<32x32xf32> to vector<8x32xf32>
    %cst_142 = arith.constant dense<0.000000e+00> : vector<8x32xf32>
    %272 = tpu.matmul %270, %271, %cst_142 {dimension_numbers = #tpu.dot_dimension_numbers<[1], [0], [0], [1], [0, 0, 1, 1], [], []>} : vector<8x8xf32>, vector<8x32xf32>, vector<8x32xf32> -> vector<8x32xf32>
    %273 = arith.addf %254, %272 : vector<8x32xf32>
    %274 = vector.extract_strided_slice %198 {offsets = [0, 24], sizes = [8, 8], strides = [1, 1]} : vector<8x32xf32> to vector<8x8xf32>
    %275 = vector.extract_strided_slice %205 {offsets = [24, 0], sizes = [8, 8], strides = [1, 1]} : vector<32x8xf32> to vector<8x8xf32>
    %cst_143 = arith.constant dense<0.000000e+00> : vector<8x8xf32>
    %276 = tpu.matmul %274, %275, %cst_143 {dimension_numbers = #tpu.dot_dimension_numbers<[1], [0], [0], [1], [0, 0, 1, 1], [], []>} : vector<8x8xf32>, vector<8x8xf32>, vector<8x8xf32> -> vector<8x8xf32>
    %cst_144 = arith.constant dense<0xFF800000> : vector<8xf32>
    %277 = vector.multi_reduction <maximumf>, %276, %cst_144 [1] : vector<8x8xf32> to vector<8xf32>
    %278 = vector.shape_cast %277 : vector<8xf32> to vector<8x1xf32>
    %279 = vector.broadcast %278 : vector<8x1xf32> to vector<8x8xf32>
    %280 = arith.subf %276, %279 : vector<8x8xf32>
    %281 = math.exp %280 : vector<8x8xf32>
    %cst_145 = arith.constant dense<0.000000e+00> : vector<8xf32>
    %282 = vector.multi_reduction <add>, %281, %cst_145 [1] : vector<8x8xf32> to vector<8xf32>
    %283 = vector.shape_cast %282 : vector<8xf32> to vector<8x1xf32>
    %284 = tpu.reciprocal %283 : vector<8x1xf32> -> vector<8x1xf32>
    %285 = vector.broadcast %284 : vector<8x1xf32> to vector<8x8xf32>
    %286 = arith.mulf %281, %285 : vector<8x8xf32>
    %287 = arith.addf %268, %286 : vector<8x8xf32>
    %288 = vector.extract_strided_slice %212 {offsets = [0, 24], sizes = [8, 8], strides = [1, 1]} : vector<8x32xf32> to vector<8x8xf32>
    %cst_146 = arith.constant dense<0.000000e+00> : vector<8x8xf32>
    %289 = tpu.matmul %286, %288, %cst_146 {dimension_numbers = #tpu.dot_dimension_numbers<[1], [0], [0], [1], [0, 0, 1, 1], [], []>} : vector<8x8xf32>, vector<8x8xf32>, vector<8x8xf32> -> vector<8x8xf32>
    %290 = vector.extract_strided_slice %214 {offsets = [24, 0], sizes = [8, 32], strides = [1, 1]} : vector<32x32xf32> to vector<8x32xf32>
    %cst_147 = arith.constant dense<0.000000e+00> : vector<8x32xf32>
    %291 = tpu.matmul %289, %290, %cst_147 {dimension_numbers = #tpu.dot_dimension_numbers<[1], [0], [0], [1], [0, 0, 1, 1], [], []>} : vector<8x8xf32>, vector<8x32xf32>, vector<8x32xf32> -> vector<8x32xf32>
    %292 = arith.addf %273, %291 : vector<8x32xf32>
    %c1_148 = arith.constant 1 : index
    %c0_149 = arith.constant 0 : index
    %c0_150 = arith.constant 0 : index
    %293 = vector.load %arg10[%c1_148, %c0_149, %c0_150] : memref<2x1x32xf32, #tpu.memory_space<vmem>>, vector<1x1x32xf32>
    %294 = vector.shape_cast %293 : vector<1x1x32xf32> to vector<1x32xf32>
    %295 = vector.broadcast %294 : vector<1x32xf32> to vector<8x32xf32>
    %296 = arith.addf %292, %295 : vector<8x32xf32>
    %297 = arith.addf %182, %296 : vector<8x32xf32>
    %c1_151 = arith.constant 1 : index
    %c0_152 = arith.constant 0 : index
    %c0_153 = arith.constant 0 : index
    %298 = vector.load %arg11[%c1_151, %c0_152, %c0_153] : memref<2x1x32xf32, #tpu.memory_space<vmem>>, vector<1x1x32xf32>
    %299 = vector.shape_cast %298 : vector<1x1x32xf32> to vector<1x32xf32>
    %c1_154 = arith.constant 1 : index
    %c0_155 = arith.constant 0 : index
    %c0_156 = arith.constant 0 : index
    %300 = vector.load %arg12[%c1_154, %c0_155, %c0_156] : memref<2x1x32xf32, #tpu.memory_space<vmem>>, vector<1x1x32xf32>
    %301 = vector.shape_cast %300 : vector<1x1x32xf32> to vector<1x32xf32>
    %cst_157 = arith.constant dense<0.000000e+00> : vector<8xf32>
    %302 = vector.multi_reduction <add>, %297, %cst_157 [1] : vector<8x32xf32> to vector<8xf32>
    %303 = vector.shape_cast %302 : vector<8xf32> to vector<8x1xf32>
    %cst_158 = arith.constant 3.200000e+01 : f32
    %304 = vector.broadcast %cst_158 : f32 to vector<8x1xf32>
    %305 = arith.divf %303, %304 : vector<8x1xf32>
    %306 = vector.broadcast %305 : vector<8x1xf32> to vector<8x32xf32>
    %307 = arith.subf %297, %306 : vector<8x32xf32>
    %308 = arith.mulf %307, %307 : vector<8x32xf32>
    %cst_159 = arith.constant dense<0.000000e+00> : vector<8xf32>
    %309 = vector.multi_reduction <add>, %308, %cst_159 [1] : vector<8x32xf32> to vector<8xf32>
    %310 = vector.shape_cast %309 : vector<8xf32> to vector<8x1xf32>
    %cst_160 = arith.constant 3.200000e+01 : f32
    %311 = vector.broadcast %cst_160 : f32 to vector<8x1xf32>
    %312 = arith.divf %310, %311 : vector<8x1xf32>
    %313 = vector.broadcast %305 : vector<8x1xf32> to vector<8x32xf32>
    %314 = arith.subf %297, %313 : vector<8x32xf32>
    %cst_161 = arith.constant 9.99999974E-6 : f32
    %315 = vector.broadcast %cst_161 : f32 to vector<8x1xf32>
    %316 = arith.addf %312, %315 : vector<8x1xf32>
    %317 = math.rsqrt %316 : vector<8x1xf32>
    %318 = vector.broadcast %317 : vector<8x1xf32> to vector<8x32xf32>
    %319 = arith.mulf %314, %318 : vector<8x32xf32>
    %320 = vector.broadcast %299 : vector<1x32xf32> to vector<8x32xf32>
    %321 = arith.mulf %319, %320 : vector<8x32xf32>
    %322 = vector.broadcast %301 : vector<1x32xf32> to vector<8x32xf32>
    %323 = arith.addf %321, %322 : vector<8x32xf32>
    %c1_162 = arith.constant 1 : index
    %c0_163 = arith.constant 0 : index
    %c0_164 = arith.constant 0 : index
    %324 = vector.load %arg13[%c1_162, %c0_163, %c0_164] : memref<2x32x64xf32, #tpu.memory_space<vmem>>, vector<1x32x64xf32>
    %325 = vector.shape_cast %324 : vector<1x32x64xf32> to vector<32x64xf32>
    %cst_165 = arith.constant dense<0.000000e+00> : vector<8x64xf32>
    %326 = tpu.matmul %323, %325, %cst_165 {dimension_numbers = #tpu.dot_dimension_numbers<[1], [0], [0], [1], [0, 0, 1, 1], [], []>} : vector<8x32xf32>, vector<32x64xf32>, vector<8x64xf32> -> vector<8x64xf32>
    %c1_166 = arith.constant 1 : index
    %c0_167 = arith.constant 0 : index
    %c0_168 = arith.constant 0 : index
    %327 = vector.load %arg14[%c1_166, %c0_167, %c0_168] : memref<2x1x64xf32, #tpu.memory_space<vmem>>, vector<1x1x64xf32>
    %328 = vector.shape_cast %327 : vector<1x1x64xf32> to vector<1x64xf32>
    %329 = vector.broadcast %328 : vector<1x64xf32> to vector<8x64xf32>
    %330 = arith.addf %326, %329 : vector<8x64xf32>
    %cst_169 = arith.constant 0.000000e+00 : f32
    %331 = vector.broadcast %cst_169 : f32 to vector<8x64xf32>
    %332 = arith.maximumf %330, %331 : vector<8x64xf32>
    %c1_170 = arith.constant 1 : index
    %c0_171 = arith.constant 0 : index
    %c0_172 = arith.constant 0 : index
    %333 = vector.load %arg15[%c1_170, %c0_171, %c0_172] : memref<2x64x32xf32, #tpu.memory_space<vmem>>, vector<1x64x32xf32>
    %334 = vector.shape_cast %333 : vector<1x64x32xf32> to vector<64x32xf32>
    %cst_173 = arith.constant dense<0.000000e+00> : vector<8x32xf32>
    %335 = tpu.matmul %332, %334, %cst_173 {dimension_numbers = #tpu.dot_dimension_numbers<[1], [0], [0], [1], [0, 0, 1, 1], [], []>} : vector<8x64xf32>, vector<64x32xf32>, vector<8x32xf32> -> vector<8x32xf32>
    %c1_174 = arith.constant 1 : index
    %c0_175 = arith.constant 0 : index
    %c0_176 = arith.constant 0 : index
    %336 = vector.load %arg16[%c1_174, %c0_175, %c0_176] : memref<2x1x32xf32, #tpu.memory_space<vmem>>, vector<1x1x32xf32>
    %337 = vector.shape_cast %336 : vector<1x1x32xf32> to vector<1x32xf32>
    %338 = vector.broadcast %337 : vector<1x32xf32> to vector<8x32xf32>
    %339 = arith.addf %335, %338 : vector<8x32xf32>
    %340 = arith.addf %323, %339 : vector<8x32xf32>
    %c1_177 = arith.constant 1 : index
    %c0_178 = arith.constant 0 : index
    %c0_179 = arith.constant 0 : index
    %341 = vector.load %arg17[%c1_177, %c0_178, %c0_179] : memref<2x1x32xf32, #tpu.memory_space<vmem>>, vector<1x1x32xf32>
    %342 = vector.shape_cast %341 : vector<1x1x32xf32> to vector<1x32xf32>
    %c1_180 = arith.constant 1 : index
    %c0_181 = arith.constant 0 : index
    %c0_182 = arith.constant 0 : index
    %343 = vector.load %arg18[%c1_180, %c0_181, %c0_182] : memref<2x1x32xf32, #tpu.memory_space<vmem>>, vector<1x1x32xf32>
    %344 = vector.shape_cast %343 : vector<1x1x32xf32> to vector<1x32xf32>
    %cst_183 = arith.constant dense<0.000000e+00> : vector<8xf32>
    %345 = vector.multi_reduction <add>, %340, %cst_183 [1] : vector<8x32xf32> to vector<8xf32>
    %346 = vector.shape_cast %345 : vector<8xf32> to vector<8x1xf32>
    %cst_184 = arith.constant 3.200000e+01 : f32
    %347 = vector.broadcast %cst_184 : f32 to vector<8x1xf32>
    %348 = arith.divf %346, %347 : vector<8x1xf32>
    %349 = vector.broadcast %348 : vector<8x1xf32> to vector<8x32xf32>
    %350 = arith.subf %340, %349 : vector<8x32xf32>
    %351 = arith.mulf %350, %350 : vector<8x32xf32>
    %cst_185 = arith.constant dense<0.000000e+00> : vector<8xf32>
    %352 = vector.multi_reduction <add>, %351, %cst_185 [1] : vector<8x32xf32> to vector<8xf32>
    %353 = vector.shape_cast %352 : vector<8xf32> to vector<8x1xf32>
    %cst_186 = arith.constant 3.200000e+01 : f32
    %354 = vector.broadcast %cst_186 : f32 to vector<8x1xf32>
    %355 = arith.divf %353, %354 : vector<8x1xf32>
    %356 = vector.broadcast %348 : vector<8x1xf32> to vector<8x32xf32>
    %357 = arith.subf %340, %356 : vector<8x32xf32>
    %cst_187 = arith.constant 9.99999974E-6 : f32
    %358 = vector.broadcast %cst_187 : f32 to vector<8x1xf32>
    %359 = arith.addf %355, %358 : vector<8x1xf32>
    %360 = math.rsqrt %359 : vector<8x1xf32>
    %361 = vector.broadcast %360 : vector<8x1xf32> to vector<8x32xf32>
    %362 = arith.mulf %357, %361 : vector<8x32xf32>
    %363 = vector.broadcast %342 : vector<1x32xf32> to vector<8x32xf32>
    %364 = arith.mulf %362, %363 : vector<8x32xf32>
    %365 = vector.broadcast %344 : vector<1x32xf32> to vector<8x32xf32>
    %366 = arith.addf %364, %365 : vector<8x32xf32>
    %c2 = arith.constant 2 : index
    %c0_188 = arith.constant 0 : index
    %c0_189 = arith.constant 0 : index
    %c0_190 = arith.constant 0 : index
    %367 = vector.load %arg19[%c2, %c0_188, %c0_189, %c0_190] : memref<3x1x8x32xf32, #tpu.memory_space<vmem>>, vector<1x1x8x32xf32>
    %368 = vector.shape_cast %367 : vector<1x1x8x32xf32> to vector<8x32xf32>
    %369 = vector.shape_cast %366 : vector<8x32xf32> to vector<1x1x8x32xf32>
    tpu.vector_store %arg19[%c2, %c0_188, %c0_189, %c0_190], %369 {strides = array<i32>} : memref<3x1x8x32xf32, #tpu.memory_space<vmem>>, vector<1x1x8x32xf32>,
    %cst_191 = arith.constant 2.500000e-01 : f32
    %370 = vector.broadcast %cst_191 : f32 to vector<8x8xf32>
    %371 = arith.mulf %287, %370 : vector<8x8xf32>
    %c1_192 = arith.constant 1 : index
    %c0_193 = arith.constant 0 : index
    %c0_194 = arith.constant 0 : index
    %c0_195 = arith.constant 0 : index
    %372 = vector.load %arg20[%c1_192, %c0_193, %c0_194, %c0_195] : memref<2x1x8x8xf32, #tpu.memory_space<vmem>>, vector<1x1x8x8xf32>
    %373 = vector.shape_cast %372 : vector<1x1x8x8xf32> to vector<8x8xf32>
    %374 = vector.shape_cast %371 : vector<8x8xf32> to vector<1x1x8x8xf32>
    tpu.vector_store %arg20[%c1_192, %c0_193, %c0_194, %c0_195], %374 {strides = array<i32>} : memref<2x1x8x8xf32, #tpu.memory_space<vmem>>, vector<1x1x8x8xf32>,
    return
  }
  func.func @transform_0(%arg0: i32) -> (i32, i32, i32) {
    %c0_i32 = arith.constant 0 : i32
    %c0_i32_0 = arith.constant 0 : i32
    %c0_i32_1 = arith.constant 0 : i32
    return %arg0, %c0_i32, %c0_i32_0 : i32, i32, i32
  }
  func.func @transform_1(%arg0: i32) -> (i32, i32, i32) {
    %c0_i32 = arith.constant 0 : i32
    %c0_i32_0 = arith.constant 0 : i32
    %c0_i32_1 = arith.constant 0 : i32
    return %arg0, %c0_i32, %c0_i32_0 : i32, i32, i32
  }
  func.func @transform_2(%arg0: i32) -> (i32, i32, i32) {
    %c0_i32 = arith.constant 0 : i32
    %c0_i32_0 = arith.constant 0 : i32
    %c0_i32_1 = arith.constant 0 : i32
    %c0_i32_2 = arith.constant 0 : i32
    return %c0_i32, %c0_i32_0, %c0_i32_1 : i32, i32, i32
  }
  func.func @transform_3(%arg0: i32) -> (i32, i32, i32) {
    %c0_i32 = arith.constant 0 : i32
    %c0_i32_0 = arith.constant 0 : i32
    %c0_i32_1 = arith.constant 0 : i32
    %c0_i32_2 = arith.constant 0 : i32
    return %c0_i32, %c0_i32_0, %c0_i32_1 : i32, i32, i32
  }
  func.func @transform_4(%arg0: i32) -> (i32, i32, i32) {
    %c0_i32 = arith.constant 0 : i32
    %c0_i32_0 = arith.constant 0 : i32
    %c0_i32_1 = arith.constant 0 : i32
    %c0_i32_2 = arith.constant 0 : i32
    return %c0_i32, %c0_i32_0, %c0_i32_1 : i32, i32, i32
  }
  func.func @transform_5(%arg0: i32) -> (i32, i32, i32) {
    %c0_i32 = arith.constant 0 : i32
    %c0_i32_0 = arith.constant 0 : i32
    %c0_i32_1 = arith.constant 0 : i32
    %c0_i32_2 = arith.constant 0 : i32
    return %c0_i32, %c0_i32_0, %c0_i32_1 : i32, i32, i32
  }
  func.func @transform_6(%arg0: i32) -> (i32, i32, i32) {
    %c0_i32 = arith.constant 0 : i32
    %c0_i32_0 = arith.constant 0 : i32
    %c0_i32_1 = arith.constant 0 : i32
    %c0_i32_2 = arith.constant 0 : i32
    return %c0_i32, %c0_i32_0, %c0_i32_1 : i32, i32, i32
  }
  func.func @transform_7(%arg0: i32) -> (i32, i32, i32) {
    %c0_i32 = arith.constant 0 : i32
    %c0_i32_0 = arith.constant 0 : i32
    %c0_i32_1 = arith.constant 0 : i32
    %c0_i32_2 = arith.constant 0 : i32
    return %c0_i32, %c0_i32_0, %c0_i32_1 : i32, i32, i32
  }
  func.func @transform_8(%arg0: i32) -> (i32, i32, i32) {
    %c0_i32 = arith.constant 0 : i32
    %c0_i32_0 = arith.constant 0 : i32
    %c0_i32_1 = arith.constant 0 : i32
    %c0_i32_2 = arith.constant 0 : i32
    return %c0_i32, %c0_i32_0, %c0_i32_1 : i32, i32, i32
  }
  func.func @transform_9(%arg0: i32) -> (i32, i32, i32) {
    %c0_i32 = arith.constant 0 : i32
    %c0_i32_0 = arith.constant 0 : i32
    %c0_i32_1 = arith.constant 0 : i32
    %c0_i32_2 = arith.constant 0 : i32
    return %c0_i32, %c0_i32_0, %c0_i32_1 : i32, i32, i32
  }
  func.func @transform_10(%arg0: i32) -> (i32, i32, i32) {
    %c0_i32 = arith.constant 0 : i32
    %c0_i32_0 = arith.constant 0 : i32
    %c0_i32_1 = arith.constant 0 : i32
    %c0_i32_2 = arith.constant 0 : i32
    return %c0_i32, %c0_i32_0, %c0_i32_1 : i32, i32, i32
  }
  func.func @transform_11(%arg0: i32) -> (i32, i32, i32) {
    %c0_i32 = arith.constant 0 : i32
    %c0_i32_0 = arith.constant 0 : i32
    %c0_i32_1 = arith.constant 0 : i32
    %c0_i32_2 = arith.constant 0 : i32
    return %c0_i32, %c0_i32_0, %c0_i32_1 : i32, i32, i32
  }
  func.func @transform_12(%arg0: i32) -> (i32, i32, i32) {
    %c0_i32 = arith.constant 0 : i32
    %c0_i32_0 = arith.constant 0 : i32
    %c0_i32_1 = arith.constant 0 : i32
    %c0_i32_2 = arith.constant 0 : i32
    return %c0_i32, %c0_i32_0, %c0_i32_1 : i32, i32, i32
  }
  func.func @transform_13(%arg0: i32) -> (i32, i32, i32) {
    %c0_i32 = arith.constant 0 : i32
    %c0_i32_0 = arith.constant 0 : i32
    %c0_i32_1 = arith.constant 0 : i32
    %c0_i32_2 = arith.constant 0 : i32
    return %c0_i32, %c0_i32_0, %c0_i32_1 : i32, i32, i32
  }
  func.func @transform_14(%arg0: i32) -> (i32, i32, i32) {
    %c0_i32 = arith.constant 0 : i32
    %c0_i32_0 = arith.constant 0 : i32
    %c0_i32_1 = arith.constant 0 : i32
    %c0_i32_2 = arith.constant 0 : i32
    return %c0_i32, %c0_i32_0, %c0_i32_1 : i32, i32, i32
  }
  func.func @transform_15(%arg0: i32) -> (i32, i32, i32) {
    %c0_i32 = arith.constant 0 : i32
    %c0_i32_0 = arith.constant 0 : i32
    %c0_i32_1 = arith.constant 0 : i32
    %c0_i32_2 = arith.constant 0 : i32
    return %c0_i32, %c0_i32_0, %c0_i32_1 : i32, i32, i32
  }
  func.func @transform_16(%arg0: i32) -> (i32, i32, i32) {
    %c0_i32 = arith.constant 0 : i32
    %c0_i32_0 = arith.constant 0 : i32
    %c0_i32_1 = arith.constant 0 : i32
    %c0_i32_2 = arith.constant 0 : i32
    return %c0_i32, %c0_i32_0, %c0_i32_1 : i32, i32, i32
  }
  func.func @transform_17(%arg0: i32) -> (i32, i32, i32) {
    %c0_i32 = arith.constant 0 : i32
    %c0_i32_0 = arith.constant 0 : i32
    %c0_i32_1 = arith.constant 0 : i32
    %c0_i32_2 = arith.constant 0 : i32
    return %c0_i32, %c0_i32_0, %c0_i32_1 : i32, i32, i32
  }
  func.func @transform_18(%arg0: i32) -> (i32, i32, i32, i32) {
    %c0_i32 = arith.constant 0 : i32
    %c0_i32_0 = arith.constant 0 : i32
    %c0_i32_1 = arith.constant 0 : i32
    %c0_i32_2 = arith.constant 0 : i32
    return %c0_i32, %arg0, %c0_i32_0, %c0_i32_1 : i32, i32, i32, i32
  }
  func.func @transform_19(%arg0: i32) -> (i32, i32, i32, i32) {
    %c0_i32 = arith.constant 0 : i32
    %c0_i32_0 = arith.constant 0 : i32
    %c0_i32_1 = arith.constant 0 : i32
    %c0_i32_2 = arith.constant 0 : i32
    return %c0_i32, %arg0, %c0_i32_0, %c0_i32_1 : i32, i32, i32, i32
  }
}

</mosaic_0001>

<llo_original>
// kernel: tpu_custom_call.1
$region0: #{tpu_custom_call.1}
  #allocation0 [shape = 'u32[]', space=smem, size = 0x4, offset = 0x4, fixed_abs, tag = 'smem constant byte address 0x4 - core index']
  #allocation1 [shape = 'u32[72,128]{1,0:T(1,128)}', space=vmem, size = 0x9000, scoped, tag = 'internal scratch']
  %s0 = inlined_call_operand.hbm [shape: f32[2,8,32], index: 0, kind: input, shape index: {}]
  %s1 = inlined_call_operand.hbm [shape: f32[2,8,32], index: 1, kind: input, shape index: {}]
  %s2 = inlined_call_operand.vmem [shape: f32[2,32,32], index: 2, kind: input, shape index: {}]
  %s3 = inlined_call_operand.vmem [shape: f32[2,1,32], index: 3, kind: input, shape index: {}]
  %s4 = inlined_call_operand.vmem [shape: f32[2,32,32], index: 4, kind: input, shape index: {}]
  %s5 = inlined_call_operand.vmem [shape: f32[2,32,1], index: 5, kind: input, shape index: {}]
  %s6 = inlined_call_operand.vmem [shape: f32[2,32,32], index: 6, kind: input, shape index: {}]
  %s7 = inlined_call_operand.vmem [shape: f32[2,1,32], index: 7, kind: input, shape index: {}]
  %s8 = inlined_call_operand.hbm [shape: f32[2,32,32], index: 8, kind: input, shape index: {}]
  %s9 = inlined_call_operand.vmem [shape: f32[2,1,32], index: 9, kind: input, shape index: {}]
  %s10 = inlined_call_operand.vmem [shape: f32[2,1,32], index: 10, kind: input, shape index: {}]
  %s11 = inlined_call_operand.vmem [shape: f32[2,1,32], index: 11, kind: input, shape index: {}]
  %s12 = inlined_call_operand.hbm [shape: f32[2,32,64], index: 12, kind: input, shape index: {}]
  %s13 = inlined_call_operand.vmem [shape: f32[2,1,64], index: 13, kind: input, shape index: {}]
  %s14 = inlined_call_operand.vmem [shape: f32[2,64,32], index: 14, kind: input, shape index: {}]
  %s15 = inlined_call_operand.vmem [shape: f32[2,1,32], index: 15, kind: input, shape index: {}]
  %s16 = inlined_call_operand.vmem [shape: f32[2,1,32], index: 16, kind: input, shape index: {}]
  %s17 = inlined_call_operand.hbm [shape: f32[2,1,32], index: 17, kind: input, shape index: {}]
  %s18 = inlined_call_operand.hbm [shape: f32[3,2,8,32], index: 18, kind: output, shape index: {0}]
  %s19 = inlined_call_operand.hbm [shape: f32[2,2,8,8], index: 19, kind: output, shape index: {1}]
  %20 = xla_tuple %s18, %s19
  %s21 = sld [smem:[#allocation0]]
  $region133: #{tpu_custom_call.1} parent=0
    _
  %s23 = ssub.s32 1, %s21
  %s24 = scalar_select 0, %s23, %s21
  $region1: #{tpu_custom_call.1} parent=0
    #allocation2 [shape = 'u8[8192]{0}', space=vmem, size = 0x2000, scoped, tag = 'input window, operand 0']
    #allocation3 [shape = 's32[2]{0}', space=sflag, size = 0x8, scoped, tag = 'scoped memory for tpu_custom_call.1']
    #allocation4 [shape = 's32[2]{0}', space=sflag, size = 0x8, scoped, tag = 'scoped memory for tpu_custom_call.1']
    #allocation5 [shape = 'u8[8192]{0}', space=vmem, size = 0x2000, scoped, tag = 'input window, operand 1']
    #allocation6 [shape = 's32[2]{0}', space=sflag, size = 0x8, scoped, tag = 'scoped memory for tpu_custom_call.1']
    #allocation7 [shape = 'u8[32768]{0}', space=vmem, size = 0x8000, scoped, tag = 'input window, operand 8, single buffered']
    #allocation8 [shape = 'u8[32768]{0}', space=vmem, size = 0x8000, scoped, tag = 'input window, operand 12, single buffered']
    #allocation9 [shape = 's32[1]{0}', space=sflag, size = 0x4, scoped, tag = 'scoped memory for tpu_custom_call.1']
    #allocation10 [shape = 'u8[1024]{0}', space=vmem, size = 0x400, scoped, tag = 'input window, operand 17, single buffered']
    #allocation11 [shape = 'u8[24576]{0}', space=vmem, size = 0x6000, scoped, tag = 'output window, operand 0']
    #allocation12 [shape = 'u8[16384]{0}', space=vmem, size = 0x4000, scoped, tag = 'output window, operand 1']
    #allocation13 [shape = 's32[2]{0}', space=sflag, size = 0x8, scoped, tag = 'scoped memory for tpu_custom_call.1']
    %25 = vsyncpa [#allocation3], 0
    %s26 = scalar_lea.sflag [#allocation3], 1
    %27 = vsyncpa %s26, 0
    %28 = vsyncpa [#allocation6], 0
    %s29 = scalar_lea.sflag [#allocation6], 1
    %30 = vsyncpa %s29, 0
    %31 = vsyncpa [#allocation9], 0
    %32 = vsyncpa [#allocation4], 0
    %s33 = scalar_lea.sflag [#allocation4], 1
    %34 = vsyncpa %s33, 0
    %35 = vsyncpa [#allocation13], 0
    %s36 = scalar_lea.sflag [#allocation13], 1
    %37 = vsyncpa %s36, 0
    loop: start=0, step=1, limit=4
    $region2: #{tpu_custom_call.1} parent=1 // loop_pre_header
      _
    $region3: #{tpu_custom_call.1} parent=1 // loop_header
      %s39 = sphi 0, %s43
      %p40 = scmp.ge.s32.totalorder %s39, 4
      %s49 = sphi 0, %s51
      %s52 = sphi 0, %s49
      %s53 = sphi 0, %s52
      %s69 = sphi 0, %s53
      %s75 = sphi 0, %s77
      %s78 = sphi 0, %s75
      %s79 = sphi 0, %s78
      %s95 = sphi 0, %s79
      %s99 = sphi 0, %s99
      %s101 = sphi 0, %s99
      %s102 = sphi 0, %s101
      %s116 = sphi 0, %s102
      %s120 = sphi 0, %s120
      %s122 = sphi 0, %s120
      %s123 = sphi 0, %s122
      %s137 = sphi 0, %s123
      %s141 = sphi 0, %s141
      %s143 = sphi 0, %s141
      %s144 = sphi 0, %s143
      %s158 = sphi 0, %s144
      %s162 = sphi 0, %s162
      %s164 = sphi 0, %s162
      %s165 = sphi 0, %s164
      %s179 = sphi 0, %s165
      %s183 = sphi 0, %s183
      %s185 = sphi 0, %s183
      %s186 = sphi 0, %s185
      %s200 = sphi 0, %s186
      %s204 = sphi 0, %s204
      %s206 = sphi 0, %s204
      %s207 = sphi 0, %s206
      %s221 = sphi 0, %s207
      %s225 = sphi 0, %s225
      %s227 = sphi 0, %s225
      %s228 = sphi 0, %s227
      %s242 = sphi 0, %s228
      %s246 = sphi 0, %s246
      %s248 = sphi 0, %s246
      %s249 = sphi 0, %s248
      %s263 = sphi 0, %s249
      %s267 = sphi 0, %s267
      %s269 = sphi 0, %s267
      %s270 = sphi 0, %s269
      %s284 = sphi 0, %s270
      %s288 = sphi 0, %s288
      %s290 = sphi 0, %s288
      %s291 = sphi 0, %s290
      %s305 = sphi 0, %s291
      %s309 = sphi 0, %s309
      %s311 = sphi 0, %s309
      %s312 = sphi 0, %s311
      %s326 = sphi 0, %s312
      %s330 = sphi 0, %s330
      %s332 = sphi 0, %s330
      %s333 = sphi 0, %s332
      %s347 = sphi 0, %s333
      %s351 = sphi 0, %s351
      %s353 = sphi 0, %s351
      %s354 = sphi 0, %s353
      %s368 = sphi 0, %s354
      %s372 = sphi 0, %s372
      %s374 = sphi 0, %s372
      %s375 = sphi 0, %s374
      %s389 = sphi 0, %s375
      %s393 = sphi 0, %s393
      %s395 = sphi 0, %s393
      %s396 = sphi 0, %s395
      %s410 = sphi 0, %s396
      %s414 = sphi 0, %s414
      %s416 = sphi 0, %s414
      %s417 = sphi 0, %s416
      %s431 = sphi 0, %s417
      %s437 = sphi 0, %s439
      %s440 = sphi 0, %s437
      %s441 = sphi 0, %s440
      %s457 = sphi 0, %s441
      %s463 = sphi 0, %s465
      %s466 = sphi 0, %s463
      %s467 = sphi 0, %s466
      %s483 = sphi 0, %s467
    $region4: #{tpu_custom_call.1} parent=1 // loop_header_branch
      %42 = sbr.rel (%p40) target = $region8
    $region5: #{tpu_custom_call.1} parent=1 // loop_body
      %s44 = ssub.s32 %s39, 1
      %s45 = ssub.s32 %s39, 2
      %s46 = sadd.s32 %s39, 1
      %s47 = ssub.s32 %s39, %s46
      %p48 = scmp.eq.s32.totalorder %s47, 0
      %s50 = sadd.s32 %s49, 1
      %s51 = scalar_select %p48, %s49, %s50
      %p54 = pneg %p48
      %p55 = scmp.eq.s32.totalorder %s39, 1
      %p56 = por %p54, %p55
      %p57 = scmp.ne.s32.totalorder %s49, %s52
      %p58 = scmp.eq.s32.totalorder %s39, 0
      %p59 = por %p57, %p58
      %p60 = scmp.ne.s32.totalorder %s49, %s52
      %p61 = scmp.eq.s32.totalorder %s44, 1
      %p62 = por %p60, %p61
      %p63 = scmp.ne.s32.totalorder %s52, %s53
      %p64 = scmp.eq.s32.totalorder %s44, 0
      %p65 = por %p63, %p64
      %p66 = scmp.ne.s32.totalorder %s52, %s53
      %p67 = scmp.eq.s32.totalorder %s45, 1
      %p68 = por %p66, %p67
      %p70 = scmp.ne.s32.totalorder %s53, %s69
      %p71 = scmp.eq.s32.totalorder %s45, 0
      %p72 = por %p70, %p71
      %s73 = ssub.s32 %s39, %s46
      %p74 = scmp.eq.s32.totalorder %s73, 0
      %s76 = sadd.s32 %s75, 1
      %s77 = scalar_select %p74, %s75, %s76
      %p80 = pneg %p74
      %p81 = scmp.eq.s32.totalorder %s39, 1
      %p82 = por %p80, %p81
      %p83 = scmp.ne.s32.totalorder %s75, %s78
      %p84 = scmp.eq.s32.totalorder %s39, 0
      %p85 = por %p83, %p84
      %p86 = scmp.ne.s32.totalorder %s75, %s78
      %p87 = scmp.eq.s32.totalorder %s44, 1
      %p88 = por %p86, %p87
      %p89 = scmp.ne.s32.totalorder %s78, %s79
      %p90 = scmp.eq.s32.totalorder %s44, 0
      %p91 = por %p89, %p90
      %p92 = scmp.ne.s32.totalorder %s78, %s79
      %p93 = scmp.eq.s32.totalorder %s45, 1
      %p94 = por %p92, %p93
      %p96 = scmp.ne.s32.totalorder %s79, %s95
      %p97 = scmp.eq.s32.totalorder %s45, 0
      %p98 = por %p96, %p97
      %s100 = sadd.s32 %s99, 1
      %p103 = scmp.eq.s32.totalorder %s39, 1
      %p104 = scmp.ne.s32.totalorder %s99, %s101
      %p105 = scmp.eq.s32.totalorder %s39, 0
      %p106 = por %p104, %p105
      %p107 = scmp.ne.s32.totalorder %s99, %s101
      %p108 = scmp.eq.s32.totalorder %s44, 1
      %p109 = por %p107, %p108
      %p110 = scmp.ne.s32.totalorder %s101, %s102
      %p111 = scmp.eq.s32.totalorder %s44, 0
      %p112 = por %p110, %p111
      %p113 = scmp.ne.s32.totalorder %s101, %s102
      %p114 = scmp.eq.s32.totalorder %s45, 1
      %p115 = por %p113, %p114
      %p117 = scmp.ne.s32.totalorder %s102, %s116
      %p118 = scmp.eq.s32.totalorder %s45, 0
      %p119 = por %p117, %p118
      %s121 = sadd.s32 %s120, 1
      %p124 = scmp.eq.s32.totalorder %s39, 1
      %p125 = scmp.ne.s32.totalorder %s120, %s122
      %p126 = scmp.eq.s32.totalorder %s39, 0
      %p127 = por %p125, %p126
      %p128 = scmp.ne.s32.totalorder %s120, %s122
      %p129 = scmp.eq.s32.totalorder %s44, 1
      %p130 = por %p128, %p129
      %p131 = scmp.ne.s32.totalorder %s122, %s123
      %p132 = scmp.eq.s32.totalorder %s44, 0
      %p133 = por %p131, %p132
      %p134 = scmp.ne.s32.totalorder %s122, %s123
      %p135 = scmp.eq.s32.totalorder %s45, 1
      %p136 = por %p134, %p135
      %p138 = scmp.ne.s32.totalorder %s123, %s137
      %p139 = scmp.eq.s32.totalorder %s45, 0
      %p140 = por %p138, %p139
      %s142 = sadd.s32 %s141, 1
      %p145 = scmp.eq.s32.totalorder %s39, 1
      %p146 = scmp.ne.s32.totalorder %s141, %s143
      %p147 = scmp.eq.s32.totalorder %s39, 0
      %p148 = por %p146, %p147
      %p149 = scmp.ne.s32.totalorder %s141, %s143
      %p150 = scmp.eq.s32.totalorder %s44, 1
      %p151 = por %p149, %p150
      %p152 = scmp.ne.s32.totalorder %s143, %s144
      %p153 = scmp.eq.s32.totalorder %s44, 0
      %p154 = por %p152, %p153
      %p155 = scmp.ne.s32.totalorder %s143, %s144
      %p156 = scmp.eq.s32.totalorder %s45, 1
      %p157 = por %p155, %p156
      %p159 = scmp.ne.s32.totalorder %s144, %s158
      %p160 = scmp.eq.s32.totalorder %s45, 0
      %p161 = por %p159, %p160
      %s163 = sadd.s32 %s162, 1
      %p166 = scmp.eq.s32.totalorder %s39, 1
      %p167 = scmp.ne.s32.totalorder %s162, %s164
      %p168 = scmp.eq.s32.totalorder %s39, 0
      %p169 = por %p167, %p168
      %p170 = scmp.ne.s32.totalorder %s162, %s164
      %p171 = scmp.eq.s32.totalorder %s44, 1
      %p172 = por %p170, %p171
      %p173 = scmp.ne.s32.totalorder %s164, %s165
      %p174 = scmp.eq.s32.totalorder %s44, 0
      %p175 = por %p173, %p174
      %p176 = scmp.ne.s32.totalorder %s164, %s165
      %p177 = scmp.eq.s32.totalorder %s45, 1
      %p178 = por %p176, %p177
      %p180 = scmp.ne.s32.totalorder %s165, %s179
      %p181 = scmp.eq.s32.totalorder %s45, 0
      %p182 = por %p180, %p181
      %s184 = sadd.s32 %s183, 1
      %p187 = scmp.eq.s32.totalorder %s39, 1
      %p188 = scmp.ne.s32.totalorder %s183, %s185
      %p189 = scmp.eq.s32.totalorder %s39, 0
      %p190 = por %p188, %p189
      %p191 = scmp.ne.s32.totalorder %s183, %s185
      %p192 = scmp.eq.s32.totalorder %s44, 1
      %p193 = por %p191, %p192
      %p194 = scmp.ne.s32.totalorder %s185, %s186
      %p195 = scmp.eq.s32.totalorder %s44, 0
      %p196 = por %p194, %p195
      %p197 = scmp.ne.s32.totalorder %s185, %s186
      %p198 = scmp.eq.s32.totalorder %s45, 1
      %p199 = por %p197, %p198
      %p201 = scmp.ne.s32.totalorder %s186, %s200
      %p202 = scmp.eq.s32.totalorder %s45, 0
      %p203 = por %p201, %p202
      %s205 = sadd.s32 %s204, 1
      %p208 = scmp.eq.s32.totalorder %s39, 1
      %p209 = scmp.ne.s32.totalorder %s204, %s206
      %p210 = scmp.eq.s32.totalorder %s39, 0
      %p211 = por %p209, %p210
      %p212 = scmp.ne.s32.totalorder %s204, %s206
      %p213 = scmp.eq.s32.totalorder %s44, 1
      %p214 = por %p212, %p213
      %p215 = scmp.ne.s32.totalorder %s206, %s207
      %p216 = scmp.eq.s32.totalorder %s44, 0
      %p217 = por %p215, %p216
      %p218 = scmp.ne.s32.totalorder %s206, %s207
      %p219 = scmp.eq.s32.totalorder %s45, 1
      %p220 = por %p218, %p219
      %p222 = scmp.ne.s32.totalorder %s207, %s221
      %p223 = scmp.eq.s32.totalorder %s45, 0
      %p224 = por %p222, %p223
      %s226 = sadd.s32 %s225, 1
      %p229 = scmp.eq.s32.totalorder %s39, 1
      %p230 = scmp.ne.s32.totalorder %s225, %s227
      %p231 = scmp.eq.s32.totalorder %s39, 0
      %p232 = por %p230, %p231
      %p233 = scmp.ne.s32.totalorder %s225, %s227
      %p234 = scmp.eq.s32.totalorder %s44, 1
      %p235 = por %p233, %p234
      %p236 = scmp.ne.s32.totalorder %s227, %s228
      %p237 = scmp.eq.s32.totalorder %s44, 0
      %p238 = por %p236, %p237
      %p239 = scmp.ne.s32.totalorder %s227, %s228
      %p240 = scmp.eq.s32.totalorder %s45, 1
      %p241 = por %p239, %p240
      %p243 = scmp.ne.s32.totalorder %s228, %s242
      %p244 = scmp.eq.s32.totalorder %s45, 0
      %p245 = por %p243, %p244
      %s247 = sadd.s32 %s246, 1
      %p250 = scmp.eq.s32.totalorder %s39, 1
      %p251 = scmp.ne.s32.totalorder %s246, %s248
      %p252 = scmp.eq.s32.totalorder %s39, 0
      %p253 = por %p251, %p252
      %p254 = scmp.ne.s32.totalorder %s246, %s248
      %p255 = scmp.eq.s32.totalorder %s44, 1
      %p256 = por %p254, %p255
      %p257 = scmp.ne.s32.totalorder %s248, %s249
      %p258 = scmp.eq.s32.totalorder %s44, 0
      %p259 = por %p257, %p258
      %p260 = scmp.ne.s32.totalorder %s248, %s249
      %p261 = scmp.eq.s32.totalorder %s45, 1
      %p262 = por %p260, %p261
      %p264 = scmp.ne.s32.totalorder %s249, %s263
      %p265 = scmp.eq.s32.totalorder %s45, 0
      %p266 = por %p264, %p265
      %s268 = sadd.s32 %s267, 1
      %p271 = scmp.eq.s32.totalorder %s39, 1
      %p272 = scmp.ne.s32.totalorder %s267, %s269
      %p273 = scmp.eq.s32.totalorder %s39, 0
      %p274 = por %p272, %p273
      %p275 = scmp.ne.s32.totalorder %s267, %s269
      %p276 = scmp.eq.s32.totalorder %s44, 1
      %p277 = por %p275, %p276
      %p278 = scmp.ne.s32.totalorder %s269, %s270
      %p279 = scmp.eq.s32.totalorder %s44, 0
      %p280 = por %p278, %p279
      %p281 = scmp.ne.s32.totalorder %s269, %s270
      %p282 = scmp.eq.s32.totalorder %s45, 1
      %p283 = por %p281, %p282
      %p285 = scmp.ne.s32.totalorder %s270, %s284
      %p286 = scmp.eq.s32.totalorder %s45, 0
      %p287 = por %p285, %p286
      %s289 = sadd.s32 %s288, 1
      %p292 = scmp.eq.s32.totalorder %s39, 1
      %p293 = scmp.ne.s32.totalorder %s288, %s290
      %p294 = scmp.eq.s32.totalorder %s39, 0
      %p295 = por %p293, %p294
      %p296 = scmp.ne.s32.totalorder %s288, %s290
      %p297 = scmp.eq.s32.totalorder %s44, 1
      %p298 = por %p296, %p297
      %p299 = scmp.ne.s32.totalorder %s290, %s291
      %p300 = scmp.eq.s32.totalorder %s44, 0
      %p301 = por %p299, %p300
      %p302 = scmp.ne.s32.totalorder %s290, %s291
      %p303 = scmp.eq.s32.totalorder %s45, 1
      %p304 = por %p302, %p303
      %p306 = scmp.ne.s32.totalorder %s291, %s305
      %p307 = scmp.eq.s32.totalorder %s45, 0
      %p308 = por %p306, %p307
      %s310 = sadd.s32 %s309, 1
      %p313 = scmp.eq.s32.totalorder %s39, 1
      %p314 = scmp.ne.s32.totalorder %s309, %s311
      %p315 = scmp.eq.s32.totalorder %s39, 0
      %p316 = por %p314, %p315
      %p317 = scmp.ne.s32.totalorder %s309, %s311
      %p318 = scmp.eq.s32.totalorder %s44, 1
      %p319 = por %p317, %p318
      %p320 = scmp.ne.s32.totalorder %s311, %s312
      %p321 = scmp.eq.s32.totalorder %s44, 0
      %p322 = por %p320, %p321
      %p323 = scmp.ne.s32.totalorder %s311, %s312
      %p324 = scmp.eq.s32.totalorder %s45, 1
      %p325 = por %p323, %p324
      %p327 = scmp.ne.s32.totalorder %s312, %s326
      %p328 = scmp.eq.s32.totalorder %s45, 0
      %p329 = por %p327, %p328
      %s331 = sadd.s32 %s330, 1
      %p334 = scmp.eq.s32.totalorder %s39, 1
      %p335 = scmp.ne.s32.totalorder %s330, %s332
      %p336 = scmp.eq.s32.totalorder %s39, 0
      %p337 = por %p335, %p336
      %p338 = scmp.ne.s32.totalorder %s330, %s332
      %p339 = scmp.eq.s32.totalorder %s44, 1
      %p340 = por %p338, %p339
      %p341 = scmp.ne.s32.totalorder %s332, %s333
      %p342 = scmp.eq.s32.totalorder %s44, 0
      %p343 = por %p341, %p342
      %p344 = scmp.ne.s32.totalorder %s332, %s333
      %p345 = scmp.eq.s32.totalorder %s45, 1
      %p346 = por %p344, %p345
      %p348 = scmp.ne.s32.totalorder %s333, %s347
      %p349 = scmp.eq.s32.totalorder %s45, 0
      %p350 = por %p348, %p349
      %s352 = sadd.s32 %s351, 1
      %p355 = scmp.eq.s32.totalorder %s39, 1
      %p356 = scmp.ne.s32.totalorder %s351, %s353
      %p357 = scmp.eq.s32.totalorder %s39, 0
      %p358 = por %p356, %p357
      %p359 = scmp.ne.s32.totalorder %s351, %s353
      %p360 = scmp.eq.s32.totalorder %s44, 1
      %p361 = por %p359, %p360
      %p362 = scmp.ne.s32.totalorder %s353, %s354
      %p363 = scmp.eq.s32.totalorder %s44, 0
      %p364 = por %p362, %p363
      %p365 = scmp.ne.s32.totalorder %s353, %s354
      %p366 = scmp.eq.s32.totalorder %s45, 1
      %p367 = por %p365, %p366
      %p369 = scmp.ne.s32.totalorder %s354, %s368
      %p370 = scmp.eq.s32.totalorder %s45, 0
      %p371 = por %p369, %p370
      %s373 = sadd.s32 %s372, 1
      %p376 = scmp.eq.s32.totalorder %s39, 1
      %p377 = scmp.ne.s32.totalorder %s372, %s374
      %p378 = scmp.eq.s32.totalorder %s39, 0
      %p379 = por %p377, %p378
      %p380 = scmp.ne.s32.totalorder %s372, %s374
      %p381 = scmp.eq.s32.totalorder %s44, 1
      %p382 = por %p380, %p381
      %p383 = scmp.ne.s32.totalorder %s374, %s375
      %p384 = scmp.eq.s32.totalorder %s44, 0
      %p385 = por %p383, %p384
      %p386 = scmp.ne.s32.totalorder %s374, %s375
      %p387 = scmp.eq.s32.totalorder %s45, 1
      %p388 = por %p386, %p387
      %p390 = scmp.ne.s32.totalorder %s375, %s389
      %p391 = scmp.eq.s32.totalorder %s45, 0
      %p392 = por %p390, %p391
      %s394 = sadd.s32 %s393, 1
      %p397 = scmp.eq.s32.totalorder %s39, 1
      %p398 = scmp.ne.s32.totalorder %s393, %s395
      %p399 = scmp.eq.s32.totalorder %s39, 0
      %p400 = por %p398, %p399
      %p401 = scmp.ne.s32.totalorder %s393, %s395
      %p402 = scmp.eq.s32.totalorder %s44, 1
      %p403 = por %p401, %p402
      %p404 = scmp.ne.s32.totalorder %s395, %s396
      %p405 = scmp.eq.s32.totalorder %s44, 0
      %p406 = por %p404, %p405
      %p407 = scmp.ne.s32.totalorder %s395, %s396
      %p408 = scmp.eq.s32.totalorder %s45, 1
      %p409 = por %p407, %p408
      %p411 = scmp.ne.s32.totalorder %s396, %s410
      %p412 = scmp.eq.s32.totalorder %s45, 0
      %p413 = por %p411, %p412
      %s415 = sadd.s32 %s414, 1
      %p418 = scmp.eq.s32.totalorder %s39, 1
      %p419 = scmp.ne.s32.totalorder %s414, %s416
      %p420 = scmp.eq.s32.totalorder %s39, 0
      %p421 = por %p419, %p420
      %p422 = scmp.ne.s32.totalorder %s414, %s416
      %p423 = scmp.eq.s32.totalorder %s44, 1
      %p424 = por %p422, %p423
      %p425 = scmp.ne.s32.totalorder %s416, %s417
      %p426 = scmp.eq.s32.totalorder %s44, 0
      %p427 = por %p425, %p426
      %p428 = scmp.ne.s32.totalorder %s416, %s417
      %p429 = scmp.eq.s32.totalorder %s45, 1
      %p430 = por %p428, %p429
      %p432 = scmp.ne.s32.totalorder %s417, %s431
      %p433 = scmp.eq.s32.totalorder %s45, 0
      %p434 = por %p432, %p433
      %s435 = ssub.s32 %s39, %s46
      %p436 = scmp.eq.s32.totalorder %s435, 0
      %s438 = sadd.s32 %s437, 1
      %s439 = scalar_select %p436, %s437, %s438
      %p442 = pneg %p436
      %p443 = scmp.eq.s32.totalorder %s39, 1
      %p444 = por %p442, %p443
      %p445 = scmp.ne.s32.totalorder %s437, %s440
      %p446 = scmp.eq.s32.totalorder %s39, 0
      %p447 = por %p445, %p446
      %p448 = scmp.ne.s32.totalorder %s437, %s440
      %p449 = scmp.eq.s32.totalorder %s44, 1
      %p450 = por %p448, %p449
      %p451 = scmp.ne.s32.totalorder %s440, %s441
      %p452 = scmp.eq.s32.totalorder %s44, 0
      %p453 = por %p451, %p452
      %p454 = scmp.ne.s32.totalorder %s440, %s441
      %p455 = scmp.eq.s32.totalorder %s45, 1
      %p456 = por %p454, %p455
      %p458 = scmp.ne.s32.totalorder %s441, %s457
      %p459 = scmp.eq.s32.totalorder %s45, 0
      %p460 = por %p458, %p459
      %s461 = ssub.s32 %s39, %s46
      %p462 = scmp.eq.s32.totalorder %s461, 0
      %s464 = sadd.s32 %s463, 1
      %s465 = scalar_select %p462, %s463, %s464
      %p468 = pneg %p462
      %p469 = scmp.eq.s32.totalorder %s39, 1
      %p470 = por %p468, %p469
      %p471 = scmp.ne.s32.totalorder %s463, %s466
      %p472 = scmp.eq.s32.totalorder %s39, 0
      %p473 = por %p471, %p472
      %p474 = scmp.ne.s32.totalorder %s463, %s466
      %p475 = scmp.eq.s32.totalorder %s44, 1
      %p476 = por %p474, %p475
      %p477 = scmp.ne.s32.totalorder %s466, %s467
      %p478 = scmp.eq.s32.totalorder %s44, 0
      %p479 = por %p477, %p478
      %p480 = scmp.ne.s32.totalorder %s466, %s467
      %p481 = scmp.eq.s32.totalorder %s45, 1
      %p482 = por %p480, %p481
      %p484 = scmp.ne.s32.totalorder %s467, %s483
      %p485 = scmp.eq.s32.totalorder %s45, 0
      %p486 = por %p484, %p485
      %p487 = scmp.le.s32.totalorder 1, %s39
      %p488 = scmp.lt.s32.totalorder %s39, 3
      %p489 = pnand %p487, %p488
      %p490 = pneg %p489
      // Predicated region
      $region9: #{tpu_custom_call.1} parent=5 // pred_check
        _
      $region10: #{tpu_custom_call.1} parent=5 // pred_check_branch
        %492 = sbr.rel (%p489) target = $region12
      $region11: #{tpu_custom_call.1} parent=5 // pred_region
        %s493 = ssub.s32 %s39, 1
        // Predicated region
        $region13: #{tpu_custom_call.1} parent=11 // pred_check
          %p494 = pneg %p112
        $region14: #{tpu_custom_call.1} parent=11 // pred_check_branch
          %496 = sbr.rel (%p494) target = $region16
        $region15: #{tpu_custom_call.1} parent=11 // pred_region
          _
        $region16: #{tpu_custom_call.1} parent=11 // pred_fallthru
          _
        // Predicated region
        $region17: #{tpu_custom_call.1} parent=11 // pred_check
          %p497 = pneg %p133
        $region18: #{tpu_custom_call.1} parent=11 // pred_check_branch
          %499 = sbr.rel (%p497) target = $region20
        $region19: #{tpu_custom_call.1} parent=11 // pred_region
          _
        $region20: #{tpu_custom_call.1} parent=11 // pred_fallthru
          _
        // Predicated region
        $region21: #{tpu_custom_call.1} parent=11 // pred_check
          %p500 = pneg %p154
        $region22: #{tpu_custom_call.1} parent=11 // pred_check_branch
          %502 = sbr.rel (%p500) target = $region24
        $region23: #{tpu_custom_call.1} parent=11 // pred_region
          _
        $region24: #{tpu_custom_call.1} parent=11 // pred_fallthru
          _
        // Predicated region
        $region25: #{tpu_custom_call.1} parent=11 // pred_check
          %p503 = pneg %p175
        $region26: #{tpu_custom_call.1} parent=11 // pred_check_branch
          %505 = sbr.rel (%p503) target = $region28
        $region27: #{tpu_custom_call.1} parent=11 // pred_region
          _
        $region28: #{tpu_custom_call.1} parent=11 // pred_fallthru
          _
        // Predicated region
        $region29: #{tpu_custom_call.1} parent=11 // pred_check
          %p506 = pneg %p196
        $region30: #{tpu_custom_call.1} parent=11 // pred_check_branch
          %508 = sbr.rel (%p506) target = $region32
        $region31: #{tpu_custom_call.1} parent=11 // pred_region
          _
        $region32: #{tpu_custom_call.1} parent=11 // pred_fallthru
          _
        // Predicated region
        $region33: #{tpu_custom_call.1} parent=11 // pred_check
          %p509 = pneg %p217
        $region34: #{tpu_custom_call.1} parent=11 // pred_check_branch
          %511 = sbr.rel (%p509) target = $region36
        $region35: #{tpu_custom_call.1} parent=11 // pred_region
          _
        $region36: #{tpu_custom_call.1} parent=11 // pred_fallthru
          _
        // Predicated region
        $region37: #{tpu_custom_call.1} parent=11 // pred_check
          %p512 = pneg %p238
        $region38: #{tpu_custom_call.1} parent=11 // pred_check_branch
          %514 = sbr.rel (%p512) target = $region40
        $region39: #{tpu_custom_call.1} parent=11 // pred_region
          %516 = vsyncadd [#allocation6], 0
          %s517 = sshll.u32 %s8, 4
          %s518 = int_to_ptr.hbm [resolvable:$true] %s517
          %s519 = sshll.u32 [#allocation7], 4
          %s520 = int_to_ptr.vmem [resolvable:$true] %s519
          %525 = dma.hbm_to_vmem [thread:$0]  %s518, 1024, %s520, [#allocation6], 128, 128, 8
        $region40: #{tpu_custom_call.1} parent=11 // pred_fallthru
          _
        // Predicated region
        $region41: #{tpu_custom_call.1} parent=11 // pred_check
          %p526 = pneg %p259
        $region42: #{tpu_custom_call.1} parent=11 // pred_check_branch
          %528 = sbr.rel (%p526) target = $region44
        $region43: #{tpu_custom_call.1} parent=11 // pred_region
          _
        $region44: #{tpu_custom_call.1} parent=11 // pred_fallthru
          _
        // Predicated region
        $region45: #{tpu_custom_call.1} parent=11 // pred_check
          %p529 = pneg %p280
        $region46: #{tpu_custom_call.1} parent=11 // pred_check_branch
          %531 = sbr.rel (%p529) target = $region48
        $region47: #{tpu_custom_call.1} parent=11 // pred_region
          _
        $region48: #{tpu_custom_call.1} parent=11 // pred_fallthru
          _
        // Predicated region
        $region49: #{tpu_custom_call.1} parent=11 // pred_check
          %p532 = pneg %p301
        $region50: #{tpu_custom_call.1} parent=11 // pred_check_branch
          %534 = sbr.rel (%p532) target = $region52
        $region51: #{tpu_custom_call.1} parent=11 // pred_region
          _
        $region52: #{tpu_custom_call.1} parent=11 // pred_fallthru
          _
        // Predicated region
        $region53: #{tpu_custom_call.1} parent=11 // pred_check
          %p535 = pneg %p322
        $region54: #{tpu_custom_call.1} parent=11 // pred_check_branch
          %537 = sbr.rel (%p535) target = $region56
        $region55: #{tpu_custom_call.1} parent=11 // pred_region
          %539 = vsyncadd [#allocation9], 0
          %s540 = sshll.u32 %s12, 4
          %s541 = int_to_ptr.hbm [resolvable:$true] %s540
          %s542 = sshll.u32 [#allocation8], 4
          %s543 = int_to_ptr.vmem [resolvable:$true] %s542
          %548 = dma.hbm_to_vmem [thread:$0]  %s541, 1024, %s543, [#allocation9], 128, 128, 8
        $region56: #{tpu_custom_call.1} parent=11 // pred_fallthru
          _
        // Predicated region
        $region57: #{tpu_custom_call.1} parent=11 // pred_check
          %p549 = pneg %p343
        $region58: #{tpu_custom_call.1} parent=11 // pred_check_branch
          %551 = sbr.rel (%p549) target = $region60
        $region59: #{tpu_custom_call.1} parent=11 // pred_region
          _
        $region60: #{tpu_custom_call.1} parent=11 // pred_fallthru
          _
        // Predicated region
        $region61: #{tpu_custom_call.1} parent=11 // pred_check
          %p552 = pneg %p364
        $region62: #{tpu_custom_call.1} parent=11 // pred_check_branch
          %554 = sbr.rel (%p552) target = $region64
        $region63: #{tpu_custom_call.1} parent=11 // pred_region
          _
        $region64: #{tpu_custom_call.1} parent=11 // pred_fallthru
          _
        // Predicated region
        $region65: #{tpu_custom_call.1} parent=11 // pred_check
          %p555 = pneg %p385
        $region66: #{tpu_custom_call.1} parent=11 // pred_check_branch
          %557 = sbr.rel (%p555) target = $region68
        $region67: #{tpu_custom_call.1} parent=11 // pred_region
          _
        $region68: #{tpu_custom_call.1} parent=11 // pred_fallthru
          _
        // Predicated region
        $region69: #{tpu_custom_call.1} parent=11 // pred_check
          %p558 = pneg %p406
        $region70: #{tpu_custom_call.1} parent=11 // pred_check_branch
          %560 = sbr.rel (%p558) target = $region72
        $region71: #{tpu_custom_call.1} parent=11 // pred_region
          _
        $region72: #{tpu_custom_call.1} parent=11 // pred_fallthru
          _
        // Predicated region
        $region73: #{tpu_custom_call.1} parent=11 // pred_check
          %p561 = pneg %p427
        $region74: #{tpu_custom_call.1} parent=11 // pred_check_branch
          %563 = sbr.rel (%p561) target = $region76
        $region75: #{tpu_custom_call.1} parent=11 // pred_region
          %565 = vsyncadd [#allocation9], 0
          %s566 = sshll.u32 %s17, 4
          %s567 = int_to_ptr.hbm [resolvable:$true] %s566
          %s568 = sshll.u32 [#allocation10], 4
          %s569 = int_to_ptr.vmem [resolvable:$true] %s568
          %574 = dma.hbm_to_vmem [thread:$0]  %s567, 32, %s569, [#allocation9], 16, 16, 1
        $region76: #{tpu_custom_call.1} parent=11 // pred_fallthru
          _
      $region12: #{tpu_custom_call.1} parent=5 // pred_fallthru
        _
      %p575 = scmp.lt.s32.totalorder %s39, 2
      // Predicated region
      $region77: #{tpu_custom_call.1} parent=5 // pred_check
        %p576 = pneg %p575
      $region78: #{tpu_custom_call.1} parent=5 // pred_check_branch
        %578 = sbr.rel (%p576) target = $region80
      $region79: #{tpu_custom_call.1} parent=5 // pred_region
        // Predicated region
        $region81: #{tpu_custom_call.1} parent=79 // pred_check
          %p579 = pneg %p59
        $region82: #{tpu_custom_call.1} parent=79 // pred_check_branch
          %581 = sbr.rel (%p579) target = $region84
        $region83: #{tpu_custom_call.1} parent=79 // pred_region
          %s582 = sand.u32 %s49, 1
          %s583 = scalar_lea.sflag [#allocation3], %s582
          %s584 = sand.u32 %s49, 1
          %s585 = smul.addr %s584, 8
          %s586 = scalar_lea.vmem [#allocation2], %s585
          %588 = vsyncadd %s583, 0
          %s589 = smul.addr %s39, 8
          %s590 = scalar_lea.hbm %s0, %s589
          %s592 = sshll.u32 %s590, 4
          %s593 = int_to_ptr.hbm [resolvable:$true] %s592
          %s594 = sshll.u32 %s586, 4
          %s595 = int_to_ptr.vmem [resolvable:$true] %s594
          %597 = dma.hbm_to_vmem [thread:$0]  %s593, 128, %s595, %s583
        $region84: #{tpu_custom_call.1} parent=79 // pred_fallthru
          _
        // Predicated region
        $region85: #{tpu_custom_call.1} parent=79 // pred_check
          %p598 = pneg %p85
        $region86: #{tpu_custom_call.1} parent=79 // pred_check_branch
          %600 = sbr.rel (%p598) target = $region88
        $region87: #{tpu_custom_call.1} parent=79 // pred_region
          %s601 = sand.u32 %s39, 1
          %s602 = scalar_lea.sflag [#allocation6], %s601
          %s603 = sand.u32 %s75, 1
          %s604 = smul.addr %s603, 8
          %s605 = scalar_lea.vmem [#allocation5], %s604
          %607 = vsyncadd %s602, 0
          %s608 = smul.addr %s39, 8
          %s609 = scalar_lea.hbm %s1, %s608
          %s611 = sshll.u32 %s609, 4
          %s612 = int_to_ptr.hbm [resolvable:$true] %s611
          %s613 = sshll.u32 %s605, 4
          %s614 = int_to_ptr.vmem [resolvable:$true] %s613
          %616 = dma.hbm_to_vmem [thread:$0]  %s612, 128, %s614, %s602
        $region88: #{tpu_custom_call.1} parent=79 // pred_fallthru
          _
      $region80: #{tpu_custom_call.1} parent=5 // pred_fallthru
        _
      %p617 = scmp.le.s32.totalorder 1, %s39
      %p618 = scmp.lt.s32.totalorder %s39, 3
      %p619 = pnand %p617, %p618
      %p620 = pneg %p619
      // Predicated region
      $region89: #{tpu_custom_call.1} parent=5 // pred_check
        _
      $region90: #{tpu_custom_call.1} parent=5 // pred_check_branch
        %622 = sbr.rel (%p619) target = $region92
      $region91: #{tpu_custom_call.1} parent=5 // pred_region
        %s623 = ssub.s32 %s39, 1
        %s624 = sand.u32 %s52, 1
        %s625 = scalar_lea.sflag [#allocation3], %s624
        %s626 = sand.u32 %s52, 1
        %s627 = smul.addr %s626, 8
        %s628 = scalar_lea.vmem [#allocation2], %s627
        // Predicated region
        $region93: #{tpu_custom_call.1} parent=91 // pred_check
          %p629 = pneg %p65
        $region94: #{tpu_custom_call.1} parent=91 // pred_check_branch
          %631 = sbr.rel (%p629) target = $region96
        $region95: #{tpu_custom_call.1} parent=91 // pred_region
          %633 = dma.done %s625, 128
        $region96: #{tpu_custom_call.1} parent=91 // pred_fallthru
          _
        %s634 = sand.u32 %s44, 1
        %s635 = scalar_lea.sflag [#allocation6], %s634
        %s636 = sand.u32 %s78, 1
        %s637 = smul.addr %s636, 8
        %s638 = scalar_lea.vmem [#allocation5], %s637
        // Predicated region
        $region97: #{tpu_custom_call.1} parent=91 // pred_check
          %p639 = pneg %p91
        $region98: #{tpu_custom_call.1} parent=91 // pred_check_branch
          %641 = sbr.rel (%p639) target = $region100
        $region99: #{tpu_custom_call.1} parent=91 // pred_region
          %643 = dma.done %s635, 128
        $region100: #{tpu_custom_call.1} parent=91 // pred_fallthru
          _
        // Predicated region
        $region101: #{tpu_custom_call.1} parent=91 // pred_check
          %p644 = pneg %p238
        $region102: #{tpu_custom_call.1} parent=91 // pred_check_branch
          %646 = sbr.rel (%p644) target = $region104
        $region103: #{tpu_custom_call.1} parent=91 // pred_region
          %648 = dma.done [#allocation6], 1024
        $region104: #{tpu_custom_call.1} parent=91 // pred_fallthru
          _
        // Predicated region
        $region105: #{tpu_custom_call.1} parent=91 // pred_check
          %p649 = pneg %p322
        $region106: #{tpu_custom_call.1} parent=91 // pred_check_branch
          %651 = sbr.rel (%p649) target = $region108
        $region107: #{tpu_custom_call.1} parent=91 // pred_region
          %653 = dma.done [#allocation9], 1024
        $region108: #{tpu_custom_call.1} parent=91 // pred_fallthru
          _
        // Predicated region
        $region109: #{tpu_custom_call.1} parent=91 // pred_check
          %p654 = pneg %p427
        $region110: #{tpu_custom_call.1} parent=91 // pred_check_branch
          %656 = sbr.rel (%p654) target = $region112
        $region111: #{tpu_custom_call.1} parent=91 // pred_region
          %658 = dma.done [#allocation9], 32
        $region112: #{tpu_custom_call.1} parent=91 // pred_fallthru
          _
        %s659 = sand.u32 %s52, 1
        %s660 = scalar_lea.sflag [#allocation3], %s659
        %s661 = sand.u32 %s52, 1
        %s662 = smul.addr %s661, 8
        %s663 = scalar_lea.vmem [#allocation2], %s662
        %p664 = pneg %p65
        %p665 = pneg %p62
        %s666 = sand.u32 %s44, 1
        %s667 = scalar_lea.sflag [#allocation6], %s666
        %s668 = sand.u32 %s78, 1
        %s669 = smul.addr %s668, 8
        %s670 = scalar_lea.vmem [#allocation5], %s669
        %p671 = pneg %p91
        %p672 = pneg %p88
        %p673 = pneg %p112
        %p674 = pneg %p109
        %p675 = pneg %p133
        %p676 = pneg %p130
        %p677 = pneg %p154
        %p678 = pneg %p151
        %p679 = pneg %p175
        %p680 = pneg %p172
        %p681 = pneg %p196
        %p682 = pneg %p193
        %p683 = pneg %p217
        %p684 = pneg %p214
        %p685 = pneg %p238
        %p686 = pneg %p235
        %p687 = pneg %p259
        %p688 = pneg %p256
        %p689 = pneg %p280
        %p690 = pneg %p277
        %p691 = pneg %p301
        %p692 = pneg %p298
        %p693 = pneg %p322
        %p694 = pneg %p319
        %p695 = pneg %p343
        %p696 = pneg %p340
        %p697 = pneg %p364
        %p698 = pneg %p361
        %p699 = pneg %p385
        %p700 = pneg %p382
        %p701 = pneg %p406
        %p702 = pneg %p403
        %p703 = pneg %p427
        %p704 = pneg %p424
        %p705 = pneg %p453
        %p706 = pneg %p450
        %s707 = sand.u32 %s440, 1
        %s708 = scalar_lea.sflag [#allocation4], %s707
        %s709 = sand.u32 %s440, 1
        %s710 = smul.addr %s709, 24
        %s711 = scalar_lea.vmem [#allocation11], %s710
        %p712 = pneg %p479
        %p713 = pneg %p476
        %s714 = sand.u32 %s466, 1
        %s715 = scalar_lea.sflag [#allocation13], %s714
        %s716 = sand.u32 %s466, 1
        %s717 = smul.addr %s716, 16
        %s718 = scalar_lea.vmem [#allocation12], %s717
        %v719 = vld [vmem:[%s628] sm:$0xff]
        %v720 = vld [vmem:[%s638] sm:$0xff]
        %vm721 = vcmask 261120
        %722 = vst.msk [vmem:[%s711] sm:$0xff] %vm721, %v719
        %v723 = vadd.f32 %v719, %v720
        %v724 = vld [vmem:[%s2] sm:$0xff]
        %v725 = vld [vmem:[%s2 + $0x8] sm:$0xff]
        %v726 = vld [vmem:[%s2 + $0x10] sm:$0xff]
        %v727 = vld [vmem:[%s2 + $0x18] sm:$0xff]
        %v728 = vld [vmem:[%s3] sm:$0x1]
        %v730 = vperm.slane %v728, 0
        %v733 = vsel %vm721, %v723, 0
        %735 = vmatpush.msra.mxu0 0.0
        %736 = vmatpush.msra.mxu0 0.0
        %737 = vmatpush.msra.mxu0 0.0
        %738 = vmatpush.msra.mxu0 0.0
        %739 = vmatpush.msra.mxu0 0.0
        %740 = vmatpush.msra.mxu0 0.0
        %741 = vmatpush.msra.mxu0 0.0
        %742 = vmatpush.msra.mxu0 0.0
        %743 = vmatpush.msra.mxu0 0.0
        %744 = vmatpush.msra.mxu0 0.0
        %745 = vmatpush.msra.mxu0 0.0
        %746 = vmatpush.msra.mxu0 0.0
        %747 = vmatpush.msra.mxu0 %v727
        %748 = vmatpush.msra.mxu0 %v726
        %749 = vmatpush.msra.mxu0 %v725
        %750 = vmatpush.msra.mxu0 %v724
        %751 = vmatmul.f32.gmra.mxu0 %v733
        %v752 = vpop.f32.mrf.mxu0
        %v753 = vadd.f32 %v730, %v752
        %754 = vdwg.mxu0
        %v755 = vld [vmem:[%s4] sm:$0xff]
        %v756 = vld [vmem:[%s4 + $0x8] sm:$0xff]
        %v757 = vld [vmem:[%s4 + $0x10] sm:$0xff]
        %v758 = vld [vmem:[%s4 + $0x18] sm:$0xff]
        %v759 = vld [vmem:[%s5] sm:$0xff]
        %v760 = vld [vmem:[%s5 + $0x8] sm:$0xff]
        %v761 = vld [vmem:[%s5 + $0x10] sm:$0xff]
        %v762 = vld [vmem:[%s5 + $0x18] sm:$0xff]
        %764 = vset.pattern.permute.xlu0 0
        %765 = vperm.xlu0 %764, %v759
        %v766 = vpop.permute.xlu0 %765
        %769 = vset.pattern.permute.xlu0 0
        %770 = vperm.xlu0 %769, %v760
        %v771 = vpop.permute.xlu0 %770
        %774 = vset.pattern.permute.xlu0 0
        %775 = vperm.xlu0 %774, %v761
        %v776 = vpop.permute.xlu0 %775
        %779 = vset.pattern.permute.xlu0 0
        %780 = vperm.xlu0 %779, %v762
        %v781 = vpop.permute.xlu0 %780
        %v784 = vsel %vm721, %v755, 0
        %v787 = vsel %vm721, %v756, 0
        %v790 = vsel %vm721, %v757, 0
        %v793 = vsel %vm721, %v758, 0
        %795 = vmatpush.xpose.msra.mxu0 0.0
        %796 = vmatpush.xpose.msra.mxu0 0.0
        %797 = vmatpush.xpose.msra.mxu0 0.0
        %798 = vmatpush.xpose.msra.mxu0 0.0
        %799 = vmatpush.xpose.msra.mxu0 0.0
        %800 = vmatpush.xpose.msra.mxu0 0.0
        %801 = vmatpush.xpose.msra.mxu0 0.0
        %802 = vmatpush.xpose.msra.mxu0 0.0
        %803 = vmatpush.xpose.msra.mxu0 0.0
        %804 = vmatpush.xpose.msra.mxu0 0.0
        %805 = vmatpush.xpose.msra.mxu0 0.0
        %806 = vmatpush.xpose.msra.mxu0 0.0
        %807 = vmatpush.xpose.msra.mxu0 0.0
        %808 = vmatpush.xpose.msra.mxu0 0.0
        %809 = vmatpush.xpose.msra.mxu0 0.0
        %810 = vmatpush.xpose.msra.mxu0 %v733
        %811 = vmatmul.f32.gmra.mxu0 %v784
        %v812 = vpop.f32.mrf.mxu0
        %v813 = vadd.f32 %v766, %v812
        %814 = vmatmul.f32.gmra.mxu0 %v787
        %v815 = vpop.f32.mrf.mxu0
        %v816 = vadd.f32 %v771, %v815
        %817 = vmatmul.f32.gmra.mxu0 %v790
        %v818 = vpop.f32.mrf.mxu0
        %v819 = vadd.f32 %v776, %v818
        %820 = vmatmul.f32.gmra.mxu0 %v793
        %v821 = vpop.f32.mrf.mxu0
        %v822 = vadd.f32 %v781, %v821
        %823 = vdwg.mxu0
        %v824 = vld [vmem:[%s6] sm:$0xff]
        %v825 = vld [vmem:[%s6 + $0x8] sm:$0xff]
        %v826 = vld [vmem:[%s6 + $0x10] sm:$0xff]
        %v827 = vld [vmem:[%s6 + $0x18] sm:$0xff]
        %v828 = vld [vmem:[%s7] sm:$0x1]
        %v830 = vperm.slane %v828, 0
        %v833 = vsel %vm721, %v719, 0
        %835 = vmatpush.msra.mxu0 0.0
        %836 = vmatpush.msra.mxu0 0.0
        %837 = vmatpush.msra.mxu0 0.0
        %838 = vmatpush.msra.mxu0 0.0
        %839 = vmatpush.msra.mxu0 0.0
        %840 = vmatpush.msra.mxu0 0.0
        %841 = vmatpush.msra.mxu0 0.0
        %842 = vmatpush.msra.mxu0 0.0
        %843 = vmatpush.msra.mxu0 0.0
        %844 = vmatpush.msra.mxu0 0.0
        %845 = vmatpush.msra.mxu0 0.0
        %846 = vmatpush.msra.mxu0 0.0
        %847 = vmatpush.msra.mxu0 %v827
        %848 = vmatpush.msra.mxu0 %v826
        %849 = vmatpush.msra.mxu0 %v825
        %850 = vmatpush.msra.mxu0 %v824
        %851 = vmatmul.f32.gmra.mxu0 %v833
        %v852 = vpop.f32.mrf.mxu0
        %v853 = vadd.f32 %v830, %v852
        %854 = vdwg.mxu0
        %v855 = vld [vmem:[#allocation7] sm:$0xff]
        %v856 = vld [vmem:[#allocation7 + $0x8] sm:$0xff]
        %v857 = vld [vmem:[#allocation7 + $0x10] sm:$0xff]
        %v858 = vld [vmem:[#allocation7 + $0x18] sm:$0xff]
        %vm859 = vcmask 64512
        %v861 = vsel %vm859, %v753, 0
        %863 = vmatpush.msra.mxu0 0.0
        %864 = vmatpush.msra.mxu0 0.0
        %865 = vmatpush.msra.mxu0 0.0
        %866 = vmatpush.msra.mxu0 0.0
        %867 = vmatpush.msra.mxu0 0.0
        %868 = vmatpush.msra.mxu0 0.0
        %869 = vmatpush.msra.mxu0 0.0
        %870 = vmatpush.msra.mxu0 0.0
        %871 = vmatpush.msra.mxu0 0.0
        %872 = vmatpush.msra.mxu0 0.0
        %873 = vmatpush.msra.mxu0 0.0
        %874 = vmatpush.msra.mxu0 0.0
        %875 = vmatpush.msra.mxu0 0.0
        %876 = vmatpush.msra.mxu0 0.0
        %877 = vmatpush.msra.mxu0 0.0
        %878 = vmatpush.msra.mxu0 %v813
        %879 = vmatmul.f32.gmra.mxu0 %v861
        %v880 = vpop.f32.mrf.mxu0
        %v881 = vadd.f32 0.0, %v880
        %882 = vdwg.mxu0
        %v883 = vsel %vm859, %v881, -inf
        %884 = vmax.xlane.f32.xlu0 %v883
        %v885 = vpop.xlane.xlu0 %884
        %v886 = vsub.f32 %v881, %v885
        %v887 = vmul.f32 %v886, 1.442695
        %v888 = vpow.pop %v887
        %v889 = vsel %vm859, %v888, 0.0
        %890 = vadd.xlane.f32.xlu0 %v889
        %v891 = vpop.xlane.xlu0 %890
        %v892 = vrcp.pop %v891
        %v893 = vmul.f32 %v891, %v892
        %v894 = vsub.f32 1.0, %v893
        %v895 = vmul.f32 %v892, %v894
        %v896 = vadd.f32 %v892, %v895
        %vm897 = vweird.f32 %v891
        %vm898 = vweird.f32 %v892
        %vm899 = vmor %vm897, %vm898
        %v900 = vsel %vm899, %v892, %v896
        %v901 = vand.u32 2147483647, %v891
        %vm902 = vcmp.eq.f32.partialorder %v901, 8.507059e+37
        %v903 = vand.u32 %v891, 2147483648
        %v904 = vor.u32 1.1754944e-38, %v903
        %v905 = vsel %vm902, %v904, %v900
        %v906 = vmul.f32 %v888, %v905
        %v907 = vadd.f32 %v906, 0.0
        %v909 = vsel %vm859, %v906, 0
        %911 = vmatpush.msra.mxu0 0.0
        %912 = vmatpush.msra.mxu0 0.0
        %913 = vmatpush.msra.mxu0 0.0
        %914 = vmatpush.msra.mxu0 0.0
        %915 = vmatpush.msra.mxu0 0.0
        %916 = vmatpush.msra.mxu0 0.0
        %917 = vmatpush.msra.mxu0 0.0
        %918 = vmatpush.msra.mxu0 0.0
        %919 = vmatpush.msra.mxu0 0.0
        %920 = vmatpush.msra.mxu0 0.0
        %921 = vmatpush.msra.mxu0 0.0
        %922 = vmatpush.msra.mxu0 0.0
        %923 = vmatpush.msra.mxu0 0.0
        %924 = vmatpush.msra.mxu0 0.0
        %925 = vmatpush.msra.mxu0 0.0
        %926 = vmatpush.msra.mxu0 %v853
        %927 = vmatmul.f32.gmra.mxu0 %v909
        %v928 = vpop.f32.mrf.mxu0
        %v929 = vadd.f32 0.0, %v928
        %930 = vdwg.mxu0
        %931 = vrot.lane.b32.xlu0 %v753, 120
        %v932 = vpop.permute.xlu0 %931
        %v933 = vsel %vm859, %v932, 0
        %935 = vmatpush.msra.mxu0 0.0
        %936 = vmatpush.msra.mxu0 0.0
        %937 = vmatpush.msra.mxu0 0.0
        %938 = vmatpush.msra.mxu0 0.0
        %939 = vmatpush.msra.mxu0 0.0
        %940 = vmatpush.msra.mxu0 0.0
        %941 = vmatpush.msra.mxu0 0.0
        %942 = vmatpush.msra.mxu0 0.0
        %943 = vmatpush.msra.mxu0 0.0
        %944 = vmatpush.msra.mxu0 0.0
        %945 = vmatpush.msra.mxu0 0.0
        %946 = vmatpush.msra.mxu0 0.0
        %947 = vmatpush.msra.mxu0 0.0
        %948 = vmatpush.msra.mxu0 0.0
        %949 = vmatpush.msra.mxu0 0.0
        %950 = vmatpush.msra.mxu0 %v816
        %951 = vmatmul.f32.gmra.mxu0 %v933
        %v952 = vpop.f32.mrf.mxu0
        %v953 = vadd.f32 0.0, %v952
        %954 = vdwg.mxu0
        %v955 = vsel %vm859, %v953, -inf
        %956 = vmax.xlane.f32.xlu0 %v955
        %v957 = vpop.xlane.xlu0 %956
        %v958 = vsub.f32 %v953, %v957
        %v959 = vmul.f32 %v958, 1.442695
        %v960 = vpow.pop %v959
        %v961 = vsel %vm859, %v960, 0.0
        %962 = vadd.xlane.f32.xlu0 %v961
        %v963 = vpop.xlane.xlu0 %962
        %v964 = vrcp.pop %v963
        %v965 = vmul.f32 %v963, %v964
        %v966 = vsub.f32 1.0, %v965
        %v967 = vmul.f32 %v964, %v966
        %v968 = vadd.f32 %v964, %v967
        %vm969 = vweird.f32 %v963
        %vm970 = vweird.f32 %v964
        %vm971 = vmor %vm969, %vm970
        %v972 = vsel %vm971, %v964, %v968
        %v973 = vand.u32 2147483647, %v963
        %vm974 = vcmp.eq.f32.partialorder %v973, 8.507059e+37
        %v975 = vand.u32 %v963, 2147483648
        %v976 = vor.u32 1.1754944e-38, %v975
        %v977 = vsel %vm974, %v976, %v972
        %v978 = vmul.f32 %v960, %v977
        %v979 = vadd.f32 %v907, %v978
        %981 = vrot.lane.b32.xlu0 %v853, 120
        %v982 = vpop.permute.xlu0 %981
        %v985 = vsel %vm859, %v978, 0
        %987 = vmatpush.msra.mxu0 0.0
        %988 = vmatpush.msra.mxu0 0.0
        %989 = vmatpush.msra.mxu0 0.0
        %990 = vmatpush.msra.mxu0 0.0
        %991 = vmatpush.msra.mxu0 0.0
        %992 = vmatpush.msra.mxu0 0.0
        %993 = vmatpush.msra.mxu0 0.0
        %994 = vmatpush.msra.mxu0 0.0
        %995 = vmatpush.msra.mxu0 0.0
        %996 = vmatpush.msra.mxu0 0.0
        %997 = vmatpush.msra.mxu0 0.0
        %998 = vmatpush.msra.mxu0 0.0
        %999 = vmatpush.msra.mxu0 0.0
        %1000 = vmatpush.msra.mxu0 0.0
        %1001 = vmatpush.msra.mxu0 0.0
        %1002 = vmatpush.msra.mxu0 %v982
        %1003 = vmatmul.f32.gmra.mxu0 %v985
        %v1004 = vpop.f32.mrf.mxu0
        %v1005 = vadd.f32 0.0, %v1004
        %1006 = vdwg.mxu0
        %v1008 = vsel %vm859, %v1005, 0
        %1010 = vmatpush.msra.mxu0 0.0
        %1011 = vmatpush.msra.mxu0 0.0
        %1012 = vmatpush.msra.mxu0 0.0
        %1013 = vmatpush.msra.mxu0 0.0
        %1014 = vmatpush.msra.mxu0 0.0
        %1015 = vmatpush.msra.mxu0 0.0
        %1016 = vmatpush.msra.mxu0 0.0
        %1017 = vmatpush.msra.mxu0 0.0
        %1018 = vmatpush.msra.mxu0 0.0
        %1019 = vmatpush.msra.mxu0 0.0
        %1020 = vmatpush.msra.mxu0 0.0
        %1021 = vmatpush.msra.mxu0 0.0
        %1022 = vmatpush.msra.mxu0 0.0
        %1023 = vmatpush.msra.mxu0 0.0
        %1024 = vmatpush.msra.mxu0 0.0
        %1025 = vmatpush.msra.mxu0 %v856
        %1026 = vmatmul.f32.gmra.mxu0 %v1008
        %v1027 = vpop.f32.mrf.mxu0
        %v1028 = vadd.f32 0.0, %v1027
        %1029 = vdwg.mxu0
        %v1031 = vsel %vm859, %v929, 0
        %1033 = vmatpush.msra.mxu0 0.0
        %1034 = vmatpush.msra.mxu0 0.0
        %1035 = vmatpush.msra.mxu0 0.0
        %1036 = vmatpush.msra.mxu0 0.0
        %1037 = vmatpush.msra.mxu0 0.0
        %1038 = vmatpush.msra.mxu0 0.0
        %1039 = vmatpush.msra.mxu0 0.0
        %1040 = vmatpush.msra.mxu0 0.0
        %1041 = vmatpush.msra.mxu0 0.0
        %1042 = vmatpush.msra.mxu0 0.0
        %1043 = vmatpush.msra.mxu0 0.0
        %1044 = vmatpush.msra.mxu0 0.0
        %1045 = vmatpush.msra.mxu0 0.0
        %1046 = vmatpush.msra.mxu0 0.0
        %1047 = vmatpush.msra.mxu0 0.0
        %1048 = vmatpush.msra.mxu0 %v855
        %1049 = vmatmul.f32.gmra.mxu0 %v1031
        %v1050 = vpop.f32.mrf.mxu0
        %v1051 = vadd.f32 %v1028, %v1050
        %1052 = vdwg.mxu0
        %1053 = vrot.lane.b32.xlu0 %v753, 112
        %v1054 = vpop.permute.xlu0 %1053
        %v1055 = vsel %vm859, %v1054, 0
        %1057 = vmatpush.msra.mxu0 0.0
        %1058 = vmatpush.msra.mxu0 0.0
        %1059 = vmatpush.msra.mxu0 0.0
        %1060 = vmatpush.msra.mxu0 0.0
        %1061 = vmatpush.msra.mxu0 0.0
        %1062 = vmatpush.msra.mxu0 0.0
        %1063 = vmatpush.msra.mxu0 0.0
        %1064 = vmatpush.msra.mxu0 0.0
        %1065 = vmatpush.msra.mxu0 0.0
        %1066 = vmatpush.msra.mxu0 0.0
        %1067 = vmatpush.msra.mxu0 0.0
        %1068 = vmatpush.msra.mxu0 0.0
        %1069 = vmatpush.msra.mxu0 0.0
        %1070 = vmatpush.msra.mxu0 0.0
        %1071 = vmatpush.msra.mxu0 0.0
        %1072 = vmatpush.msra.mxu0 %v819
        %1073 = vmatmul.f32.gmra.mxu0 %v1055
        %v1074 = vpop.f32.mrf.mxu0
        %v1075 = vadd.f32 0.0, %v1074
        %1076 = vdwg.mxu0
        %v1077 = vsel %vm859, %v1075, -inf
        %1078 = vmax.xlane.f32.xlu0 %v1077
        %v1079 = vpop.xlane.xlu0 %1078
        %v1080 = vsub.f32 %v1075, %v1079
        %v1081 = vmul.f32 %v1080, 1.442695
        %v1082 = vpow.pop %v1081
        %v1083 = vsel %vm859, %v1082, 0.0
        %1084 = vadd.xlane.f32.xlu0 %v1083
        %v1085 = vpop.xlane.xlu0 %1084
        %v1086 = vrcp.pop %v1085
        %v1087 = vmul.f32 %v1085, %v1086
        %v1088 = vsub.f32 1.0, %v1087
        %v1089 = vmul.f32 %v1086, %v1088
        %v1090 = vadd.f32 %v1086, %v1089
        %vm1091 = vweird.f32 %v1085
        %vm1092 = vweird.f32 %v1086
        %vm1093 = vmor %vm1091, %vm1092
        %v1094 = vsel %vm1093, %v1086, %v1090
        %v1095 = vand.u32 2147483647, %v1085
        %vm1096 = vcmp.eq.f32.partialorder %v1095, 8.507059e+37
        %v1097 = vand.u32 %v1085, 2147483648
        %v1098 = vor.u32 1.1754944e-38, %v1097
        %v1099 = vsel %vm1096, %v1098, %v1094
        %v1100 = vmul.f32 %v1082, %v1099
        %v1101 = vadd.f32 %v979, %v1100
        %1102 = vrot.lane.b32.xlu0 %v853, 112
        %v1103 = vpop.permute.xlu0 %1102
        %v1106 = vsel %vm859, %v1100, 0
        %1108 = vmatpush.msra.mxu0 0.0
        %1109 = vmatpush.msra.mxu0 0.0
        %1110 = vmatpush.msra.mxu0 0.0
        %1111 = vmatpush.msra.mxu0 0.0
        %1112 = vmatpush.msra.mxu0 0.0
        %1113 = vmatpush.msra.mxu0 0.0
        %1114 = vmatpush.msra.mxu0 0.0
        %1115 = vmatpush.msra.mxu0 0.0
        %1116 = vmatpush.msra.mxu0 0.0
        %1117 = vmatpush.msra.mxu0 0.0
        %1118 = vmatpush.msra.mxu0 0.0
        %1119 = vmatpush.msra.mxu0 0.0
        %1120 = vmatpush.msra.mxu0 0.0
        %1121 = vmatpush.msra.mxu0 0.0
        %1122 = vmatpush.msra.mxu0 0.0
        %1123 = vmatpush.msra.mxu0 %v1103
        %1124 = vmatmul.f32.gmra.mxu0 %v1106
        %v1125 = vpop.f32.mrf.mxu0
        %v1126 = vadd.f32 0.0, %v1125
        %1127 = vdwg.mxu0
        %v1129 = vsel %vm859, %v1126, 0
        %1131 = vmatpush.msra.mxu0 0.0
        %1132 = vmatpush.msra.mxu0 0.0
        %1133 = vmatpush.msra.mxu0 0.0
        %1134 = vmatpush.msra.mxu0 0.0
        %1135 = vmatpush.msra.mxu0 0.0
        %1136 = vmatpush.msra.mxu0 0.0
        %1137 = vmatpush.msra.mxu0 0.0
        %1138 = vmatpush.msra.mxu0 0.0
        %1139 = vmatpush.msra.mxu0 0.0
        %1140 = vmatpush.msra.mxu0 0.0
        %1141 = vmatpush.msra.mxu0 0.0
        %1142 = vmatpush.msra.mxu0 0.0
        %1143 = vmatpush.msra.mxu0 0.0
        %1144 = vmatpush.msra.mxu0 0.0
        %1145 = vmatpush.msra.mxu0 0.0
        %1146 = vmatpush.msra.mxu0 %v857
        %1147 = vmatmul.f32.gmra.mxu0 %v1129
        %v1148 = vpop.f32.mrf.mxu0
        %v1149 = vadd.f32 0.0, %v1148
        %1150 = vdwg.mxu0
        %v1151 = vadd.f32 %v1051, %v1149
        %1152 = vrot.lane.b32.xlu0 %v753, 104
        %v1153 = vpop.permute.xlu0 %1152
        %v1154 = vsel %vm859, %v1153, 0
        %1156 = vmatpush.msra.mxu0 0.0
        %1157 = vmatpush.msra.mxu0 0.0
        %1158 = vmatpush.msra.mxu0 0.0
        %1159 = vmatpush.msra.mxu0 0.0
        %1160 = vmatpush.msra.mxu0 0.0
        %1161 = vmatpush.msra.mxu0 0.0
        %1162 = vmatpush.msra.mxu0 0.0
        %1163 = vmatpush.msra.mxu0 0.0
        %1164 = vmatpush.msra.mxu0 0.0
        %1165 = vmatpush.msra.mxu0 0.0
        %1166 = vmatpush.msra.mxu0 0.0
        %1167 = vmatpush.msra.mxu0 0.0
        %1168 = vmatpush.msra.mxu0 0.0
        %1169 = vmatpush.msra.mxu0 0.0
        %1170 = vmatpush.msra.mxu0 0.0
        %1171 = vmatpush.msra.mxu0 %v822
        %1172 = vmatmul.f32.gmra.mxu0 %v1154
        %v1173 = vpop.f32.mrf.mxu0
        %v1174 = vadd.f32 0.0, %v1173
        %1175 = vdwg.mxu0
        %v1176 = vsel %vm859, %v1174, -inf
        %1177 = vmax.xlane.f32.xlu0 %v1176
        %v1178 = vpop.xlane.xlu0 %1177
        %v1179 = vsub.f32 %v1174, %v1178
        %v1180 = vmul.f32 %v1179, 1.442695
        %v1181 = vpow.pop %v1180
        %v1182 = vsel %vm859, %v1181, 0.0
        %1183 = vadd.xlane.f32.xlu0 %v1182
        %v1184 = vpop.xlane.xlu0 %1183
        %v1185 = vrcp.pop %v1184
        %v1186 = vmul.f32 %v1184, %v1185
        %v1187 = vsub.f32 1.0, %v1186
        %v1188 = vmul.f32 %v1185, %v1187
        %v1189 = vadd.f32 %v1185, %v1188
        %vm1190 = vweird.f32 %v1184
        %vm1191 = vweird.f32 %v1185
        %vm1192 = vmor %vm1190, %vm1191
        %v1193 = vsel %vm1192, %v1185, %v1189
        %v1194 = vand.u32 2147483647, %v1184
        %vm1195 = vcmp.eq.f32.partialorder %v1194, 8.507059e+37
        %v1196 = vand.u32 %v1184, 2147483648
        %v1197 = vor.u32 1.1754944e-38, %v1196
        %v1198 = vsel %vm1195, %v1197, %v1193
        %v1199 = vmul.f32 %v1181, %v1198
        %v1200 = vadd.f32 %v1101, %v1199
        %1201 = vrot.lane.b32.xlu0 %v853, 104
        %v1202 = vpop.permute.xlu0 %1201
        %v1205 = vsel %vm859, %v1199, 0
        %1207 = vmatpush.msra.mxu0 0.0
        %1208 = vmatpush.msra.mxu0 0.0
        %1209 = vmatpush.msra.mxu0 0.0
        %1210 = vmatpush.msra.mxu0 0.0
        %1211 = vmatpush.msra.mxu0 0.0
        %1212 = vmatpush.msra.mxu0 0.0
        %1213 = vmatpush.msra.mxu0 0.0
        %1214 = vmatpush.msra.mxu0 0.0
        %1215 = vmatpush.msra.mxu0 0.0
        %1216 = vmatpush.msra.mxu0 0.0
        %1217 = vmatpush.msra.mxu0 0.0
        %1218 = vmatpush.msra.mxu0 0.0
        %1219 = vmatpush.msra.mxu0 0.0
        %1220 = vmatpush.msra.mxu0 0.0
        %1221 = vmatpush.msra.mxu0 0.0
        %1222 = vmatpush.msra.mxu0 %v1202
        %1223 = vmatmul.f32.gmra.mxu0 %v1205
        %v1224 = vpop.f32.mrf.mxu0
        %v1225 = vadd.f32 0.0, %v1224
        %1226 = vdwg.mxu0
        %v1228 = vsel %vm859, %v1225, 0
        %1230 = vmatpush.msra.mxu0 0.0
        %1231 = vmatpush.msra.mxu0 0.0
        %1232 = vmatpush.msra.mxu0 0.0
        %1233 = vmatpush.msra.mxu0 0.0
        %1234 = vmatpush.msra.mxu0 0.0
        %1235 = vmatpush.msra.mxu0 0.0
        %1236 = vmatpush.msra.mxu0 0.0
        %1237 = vmatpush.msra.mxu0 0.0
        %1238 = vmatpush.msra.mxu0 0.0
        %1239 = vmatpush.msra.mxu0 0.0
        %1240 = vmatpush.msra.mxu0 0.0
        %1241 = vmatpush.msra.mxu0 0.0
        %1242 = vmatpush.msra.mxu0 0.0
        %1243 = vmatpush.msra.mxu0 0.0
        %1244 = vmatpush.msra.mxu0 0.0
        %1245 = vmatpush.msra.mxu0 %v858
        %1246 = vmatmul.f32.gmra.mxu0 %v1228
        %v1247 = vpop.f32.mrf.mxu0
        %v1248 = vadd.f32 0.0, %v1247
        %1249 = vdwg.mxu0
        %v1250 = vadd.f32 %v1151, %v1248
        %v1251 = vld [vmem:[%s9] sm:$0x1]
        %v1253 = vperm.slane %v1251, 0
        %v1255 = vadd.f32 %v1250, %v1253
        %v1256 = vadd.f32 %v719, %v1255
        %v1257 = vld [vmem:[%s10] sm:$0x1]
        %v1258 = vld [vmem:[%s11] sm:$0x1]
        %v1259 = vsel %vm721, %v1256, 0.0
        %1260 = vadd.xlane.f32.xlu0 %v1259
        %v1261 = vpop.xlane.xlu0 %1260
        %v1262 = vrcp.pop 32.0
        %v1263 = vmul.f32 32.0, %v1262
        %v1264 = vsub.f32 1.0, %v1263
        %v1265 = vmul.f32 %v1262, %v1264
        %v1266 = vadd.f32 %v1262, %v1265
        %vm1267 = vweird.f32 %v1262
        %v1268 = vsel %vm1267, %v1262, %v1266
        %v1269 = vmul.f32 %v1261, %v1268
        %v1270 = vsub.f32 %v1256, %v1269
        %v1271 = vmul.f32 %v1270, %v1270
        %v1272 = vsel %vm721, %v1271, 0.0
        %1273 = vadd.xlane.f32.xlu0 %v1272
        %v1274 = vpop.xlane.xlu0 %1273
        %v1275 = vmul.f32 %v1274, %v1268
        %v1276 = vadd.f32 %v1275, 1e-05
        %v1277 = vrsqrt.pop %v1276
        %v1278 = vmul.f32 %v1277, %v1276
        %v1279 = vmul.f32 %v1278, %v1277
        %v1280 = vmul.f32 0.5, %v1279
        %v1281 = vsub.f32 1.5, %v1280
        %v1282 = vmul.f32 %v1277, %v1281
        %vm1283 = vweird.f32 %v1276
        %vm1284 = vweird.f32 %v1277
        %vm1285 = vmor %vm1283, %vm1284
        %v1286 = vsel %vm1285, %v1277, %v1282
        %v1287 = vmul.f32 %v1270, %v1286
        %v1289 = vperm.slane %v1257, 0
        %v1291 = vmul.f32 %v1287, %v1289
        %v1293 = vperm.slane %v1258, 0
        %v1295 = vadd.f32 %v1291, %v1293
        %v1296 = vld [vmem:[#allocation8] sm:$0xff]
        %v1297 = vld [vmem:[#allocation8 + $0x8] sm:$0xff]
        %v1298 = vld [vmem:[#allocation8 + $0x10] sm:$0xff]
        %v1299 = vld [vmem:[#allocation8 + $0x18] sm:$0xff]
        %v1300 = vld [vmem:[%s13] sm:$0x1]
        %v1302 = vperm.slane %v1300, 0
        %v1305 = vsel %vm721, %v1295, 0
        %1307 = vmatpush.msra.mxu0 0.0
        %1308 = vmatpush.msra.mxu0 0.0
        %1309 = vmatpush.msra.mxu0 0.0
        %1310 = vmatpush.msra.mxu0 0.0
        %1311 = vmatpush.msra.mxu0 0.0
        %1312 = vmatpush.msra.mxu0 0.0
        %1313 = vmatpush.msra.mxu0 0.0
        %1314 = vmatpush.msra.mxu0 0.0
        %1315 = vmatpush.msra.mxu0 0.0
        %1316 = vmatpush.msra.mxu0 0.0
        %1317 = vmatpush.msra.mxu0 0.0
        %1318 = vmatpush.msra.mxu0 0.0
        %1319 = vmatpush.msra.mxu0 %v1299
        %1320 = vmatpush.msra.mxu0 %v1298
        %1321 = vmatpush.msra.mxu0 %v1297
        %1322 = vmatpush.msra.mxu0 %v1296
        %1323 = vmatmul.f32.gmra.mxu0 %v1305
        %v1324 = vpop.f32.mrf.mxu0
        %v1325 = vadd.f32 %v1302, %v1324
        %1326 = vdwg.mxu0
        %v1327 = vmax.f32 %v1325, 0.0
        %v1328 = vld [vmem:[%s14] sm:$0xff]
        %v1329 = vld [vmem:[%s14 + $0x8] sm:$0xff]
        %v1330 = vld [vmem:[%s14 + $0x10] sm:$0xff]
        %v1331 = vld [vmem:[%s14 + $0x18] sm:$0xff]
        %v1332 = vld [vmem:[%s14 + $0x20] sm:$0xff]
        %v1333 = vld [vmem:[%s14 + $0x28] sm:$0xff]
        %v1334 = vld [vmem:[%s14 + $0x30] sm:$0xff]
        %v1335 = vld [vmem:[%s14 + $0x38] sm:$0xff]
        %v1336 = vld [vmem:[%s15] sm:$0x1]
        %v1338 = vperm.slane %v1336, 0
        %vm1340 = vcmask 523264
        %v1342 = vsel %vm1340, %v1327, 0
        %1344 = vmatpush.msra.mxu0 0.0
        %1345 = vmatpush.msra.mxu0 0.0
        %1346 = vmatpush.msra.mxu0 0.0
        %1347 = vmatpush.msra.mxu0 0.0
        %1348 = vmatpush.msra.mxu0 0.0
        %1349 = vmatpush.msra.mxu0 0.0
        %1350 = vmatpush.msra.mxu0 0.0
        %1351 = vmatpush.msra.mxu0 0.0
        %1352 = vmatpush.msra.mxu0 %v1335
        %1353 = vmatpush.msra.mxu0 %v1334
        %1354 = vmatpush.msra.mxu0 %v1333
        %1355 = vmatpush.msra.mxu0 %v1332
        %1356 = vmatpush.msra.mxu0 %v1331
        %1357 = vmatpush.msra.mxu0 %v1330
        %1358 = vmatpush.msra.mxu0 %v1329
        %1359 = vmatpush.msra.mxu0 %v1328
        %1360 = vmatmul.f32.gmra.mxu0 %v1342
        %v1361 = vpop.f32.mrf.mxu0
        %v1362 = vadd.f32 %v1338, %v1361
        %1363 = vdwg.mxu0
        %v1364 = vadd.f32 %v1295, %v1362
        %v1365 = vld [vmem:[%s16] sm:$0x1]
        %v1366 = vld [vmem:[#allocation10] sm:$0x1]
        %v1367 = vsel %vm721, %v1364, 0.0
        %1368 = vadd.xlane.f32.xlu0 %v1367
        %v1369 = vpop.xlane.xlu0 %1368
        %v1370 = vmul.f32 %v1369, %v1268
        %v1371 = vsub.f32 %v1364, %v1370
        %v1372 = vmul.f32 %v1371, %v1371
        %v1373 = vsel %vm721, %v1372, 0.0
        %1374 = vadd.xlane.f32.xlu0 %v1373
        %v1375 = vpop.xlane.xlu0 %1374
        %v1376 = vmul.f32 %v1375, %v1268
        %v1377 = vadd.f32 %v1376, 1e-05
        %v1378 = vrsqrt.pop %v1377
        %v1379 = vmul.f32 %v1378, %v1377
        %v1380 = vmul.f32 %v1379, %v1378
        %v1381 = vmul.f32 0.5, %v1380
        %v1382 = vsub.f32 1.5, %v1381
        %v1383 = vmul.f32 %v1378, %v1382
        %vm1384 = vweird.f32 %v1377
        %vm1385 = vweird.f32 %v1378
        %vm1386 = vmor %vm1384, %vm1385
        %v1387 = vsel %vm1386, %v1378, %v1383
        %v1388 = vmul.f32 %v1371, %v1387
        %v1390 = vperm.slane %v1365, 0
        %v1392 = vmul.f32 %v1388, %v1390
        %v1394 = vperm.slane %v1366, 0
        %v1396 = vadd.f32 %v1392, %v1394
        %s1397 = scalar_lea.vmem %s711, 8 [#allocation11]
        %1398 = vst.msk [vmem:[%s1397] sm:$0xff] %vm721, %v1396
        %v1399 = vmul.f32 %v1200, 0.25
        %1400 = vst.msk [vmem:[%s718] sm:$0xff] %vm859, %v1399
        %v1401 = vadd.f32 %v1396, %v720
        %s1402 = scalar_lea.vmem %s2, 32
        %v1403 = vld [vmem:[%s1402] sm:$0xff]
        %v1404 = vld [vmem:[%s1402 + $0x8] sm:$0xff]
        %v1405 = vld [vmem:[%s1402 + $0x10] sm:$0xff]
        %v1406 = vld [vmem:[%s1402 + $0x18] sm:$0xff]
        %s1407 = scalar_lea.vmem %s3, 1
        %v1408 = vld [vmem:[%s1407] sm:$0x1]
        %v1410 = vperm.slane %v1408, 0
        %v1413 = vsel %vm721, %v1401, 0
        %1415 = vmatpush.msra.mxu0 0.0
        %1416 = vmatpush.msra.mxu0 0.0
        %1417 = vmatpush.msra.mxu0 0.0
        %1418 = vmatpush.msra.mxu0 0.0
        %1419 = vmatpush.msra.mxu0 0.0
        %1420 = vmatpush.msra.mxu0 0.0
        %1421 = vmatpush.msra.mxu0 0.0
        %1422 = vmatpush.msra.mxu0 0.0
        %1423 = vmatpush.msra.mxu0 0.0
        %1424 = vmatpush.msra.mxu0 0.0
        %1425 = vmatpush.msra.mxu0 0.0
        %1426 = vmatpush.msra.mxu0 0.0
        %1427 = vmatpush.msra.mxu0 %v1406
        %1428 = vmatpush.msra.mxu0 %v1405
        %1429 = vmatpush.msra.mxu0 %v1404
        %1430 = vmatpush.msra.mxu0 %v1403
        %1431 = vmatmul.f32.gmra.mxu0 %v1413
        %v1432 = vpop.f32.mrf.mxu0
        %v1433 = vadd.f32 %v1410, %v1432
        %1434 = vdwg.mxu0
        %s1435 = scalar_lea.vmem %s4, 32
        %v1436 = vld [vmem:[%s1435] sm:$0xff]
        %v1437 = vld [vmem:[%s1435 + $0x8] sm:$0xff]
        %v1438 = vld [vmem:[%s1435 + $0x10] sm:$0xff]
        %v1439 = vld [vmem:[%s1435 + $0x18] sm:$0xff]
        %s1440 = scalar_lea.vmem %s5, 32
        %v1441 = vld [vmem:[%s1440] sm:$0xff]
        %v1442 = vld [vmem:[%s1440 + $0x8] sm:$0xff]
        %v1443 = vld [vmem:[%s1440 + $0x10] sm:$0xff]
        %v1444 = vld [vmem:[%s1440 + $0x18] sm:$0xff]
        %1446 = vset.pattern.permute.xlu0 0
        %1447 = vperm.xlu0 %1446, %v1441
        %v1448 = vpop.permute.xlu0 %1447
        %1451 = vset.pattern.permute.xlu0 0
        %1452 = vperm.xlu0 %1451, %v1442
        %v1453 = vpop.permute.xlu0 %1452
        %1456 = vset.pattern.permute.xlu0 0
        %1457 = vperm.xlu0 %1456, %v1443
        %v1458 = vpop.permute.xlu0 %1457
        %1461 = vset.pattern.permute.xlu0 0
        %1462 = vperm.xlu0 %1461, %v1444
        %v1463 = vpop.permute.xlu0 %1462
        %v1466 = vsel %vm721, %v1436, 0
        %v1469 = vsel %vm721, %v1437, 0
        %v1472 = vsel %vm721, %v1438, 0
        %v1475 = vsel %vm721, %v1439, 0
        %1477 = vmatpush.xpose.msra.mxu0 0.0
        %1478 = vmatpush.xpose.msra.mxu0 0.0
        %1479 = vmatpush.xpose.msra.mxu0 0.0
        %1480 = vmatpush.xpose.msra.mxu0 0.0
        %1481 = vmatpush.xpose.msra.mxu0 0.0
        %1482 = vmatpush.xpose.msra.mxu0 0.0
        %1483 = vmatpush.xpose.msra.mxu0 0.0
        %1484 = vmatpush.xpose.msra.mxu0 0.0
        %1485 = vmatpush.xpose.msra.mxu0 0.0
        %1486 = vmatpush.xpose.msra.mxu0 0.0
        %1487 = vmatpush.xpose.msra.mxu0 0.0
        %1488 = vmatpush.xpose.msra.mxu0 0.0
        %1489 = vmatpush.xpose.msra.mxu0 0.0
        %1490 = vmatpush.xpose.msra.mxu0 0.0
        %1491 = vmatpush.xpose.msra.mxu0 0.0
        %1492 = vmatpush.xpose.msra.mxu0 %v1413
        %1493 = vmatmul.f32.gmra.mxu0 %v1466
        %v1494 = vpop.f32.mrf.mxu0
        %v1495 = vadd.f32 %v1448, %v1494
        %1496 = vmatmul.f32.gmra.mxu0 %v1469
        %v1497 = vpop.f32.mrf.mxu0
        %v1498 = vadd.f32 %v1453, %v1497
        %1499 = vmatmul.f32.gmra.mxu0 %v1472
        %v1500 = vpop.f32.mrf.mxu0
        %v1501 = vadd.f32 %v1458, %v1500
        %1502 = vmatmul.f32.gmra.mxu0 %v1475
        %v1503 = vpop.f32.mrf.mxu0
        %v1504 = vadd.f32 %v1463, %v1503
        %1505 = vdwg.mxu0
        %s1506 = scalar_lea.vmem %s6, 32
        %v1507 = vld [vmem:[%s1506] sm:$0xff]
        %v1508 = vld [vmem:[%s1506 + $0x8] sm:$0xff]
        %v1509 = vld [vmem:[%s1506 + $0x10] sm:$0xff]
        %v1510 = vld [vmem:[%s1506 + $0x18] sm:$0xff]
        %s1511 = scalar_lea.vmem %s7, 1
        %v1512 = vld [vmem:[%s1511] sm:$0x1]
        %v1514 = vperm.slane %v1512, 0
        %v1517 = vsel %vm721, %v1396, 0
        %1519 = vmatpush.msra.mxu0 0.0
        %1520 = vmatpush.msra.mxu0 0.0
        %1521 = vmatpush.msra.mxu0 0.0
        %1522 = vmatpush.msra.mxu0 0.0
        %1523 = vmatpush.msra.mxu0 0.0
        %1524 = vmatpush.msra.mxu0 0.0
        %1525 = vmatpush.msra.mxu0 0.0
        %1526 = vmatpush.msra.mxu0 0.0
        %1527 = vmatpush.msra.mxu0 0.0
        %1528 = vmatpush.msra.mxu0 0.0
        %1529 = vmatpush.msra.mxu0 0.0
        %1530 = vmatpush.msra.mxu0 0.0
        %1531 = vmatpush.msra.mxu0 %v1510
        %1532 = vmatpush.msra.mxu0 %v1509
        %1533 = vmatpush.msra.mxu0 %v1508
        %1534 = vmatpush.msra.mxu0 %v1507
        %1535 = vmatmul.f32.gmra.mxu0 %v1517
        %v1536 = vpop.f32.mrf.mxu0
        %v1537 = vadd.f32 %v1514, %v1536
        %1538 = vdwg.mxu0
        %s1539 = scalar_lea.vmem [#allocation7], 32
        %v1540 = vld [vmem:[%s1539] sm:$0xff]
        %v1541 = vld [vmem:[%s1539 + $0x8] sm:$0xff]
        %v1542 = vld [vmem:[%s1539 + $0x10] sm:$0xff]
        %v1543 = vld [vmem:[%s1539 + $0x18] sm:$0xff]
        %v1545 = vsel %vm859, %v1433, 0
        %1547 = vmatpush.msra.mxu0 0.0
        %1548 = vmatpush.msra.mxu0 0.0
        %1549 = vmatpush.msra.mxu0 0.0
        %1550 = vmatpush.msra.mxu0 0.0
        %1551 = vmatpush.msra.mxu0 0.0
        %1552 = vmatpush.msra.mxu0 0.0
        %1553 = vmatpush.msra.mxu0 0.0
        %1554 = vmatpush.msra.mxu0 0.0
        %1555 = vmatpush.msra.mxu0 0.0
        %1556 = vmatpush.msra.mxu0 0.0
        %1557 = vmatpush.msra.mxu0 0.0
        %1558 = vmatpush.msra.mxu0 0.0
        %1559 = vmatpush.msra.mxu0 0.0
        %1560 = vmatpush.msra.mxu0 0.0
        %1561 = vmatpush.msra.mxu0 0.0
        %1562 = vmatpush.msra.mxu0 %v1495
        %1563 = vmatmul.f32.gmra.mxu0 %v1545
        %v1564 = vpop.f32.mrf.mxu0
        %v1565 = vadd.f32 0.0, %v1564
        %1566 = vdwg.mxu0
        %v1567 = vsel %vm859, %v1565, -inf
        %1568 = vmax.xlane.f32.xlu0 %v1567
        %v1569 = vpop.xlane.xlu0 %1568
        %v1570 = vsub.f32 %v1565, %v1569
        %v1571 = vmul.f32 %v1570, 1.442695
        %v1572 = vpow.pop %v1571
        %v1573 = vsel %vm859, %v1572, 0.0
        %1574 = vadd.xlane.f32.xlu0 %v1573
        %v1575 = vpop.xlane.xlu0 %1574
        %v1576 = vrcp.pop %v1575
        %v1577 = vmul.f32 %v1575, %v1576
        %v1578 = vsub.f32 1.0, %v1577
        %v1579 = vmul.f32 %v1576, %v1578
        %v1580 = vadd.f32 %v1576, %v1579
        %vm1581 = vweird.f32 %v1575
        %vm1582 = vweird.f32 %v1576
        %vm1583 = vmor %vm1581, %vm1582
        %v1584 = vsel %vm1583, %v1576, %v1580
        %v1585 = vand.u32 2147483647, %v1575
        %vm1586 = vcmp.eq.f32.partialorder %v1585, 8.507059e+37
        %v1587 = vand.u32 %v1575, 2147483648
        %v1588 = vor.u32 1.1754944e-38, %v1587
        %v1589 = vsel %vm1586, %v1588, %v1584
        %v1590 = vmul.f32 %v1572, %v1589
        %v1591 = vadd.f32 %v1590, 0.0
        %v1593 = vsel %vm859, %v1590, 0
        %1595 = vmatpush.msra.mxu0 0.0
        %1596 = vmatpush.msra.mxu0 0.0
        %1597 = vmatpush.msra.mxu0 0.0
        %1598 = vmatpush.msra.mxu0 0.0
        %1599 = vmatpush.msra.mxu0 0.0
        %1600 = vmatpush.msra.mxu0 0.0
        %1601 = vmatpush.msra.mxu0 0.0
        %1602 = vmatpush.msra.mxu0 0.0
        %1603 = vmatpush.msra.mxu0 0.0
        %1604 = vmatpush.msra.mxu0 0.0
        %1605 = vmatpush.msra.mxu0 0.0
        %1606 = vmatpush.msra.mxu0 0.0
        %1607 = vmatpush.msra.mxu0 0.0
        %1608 = vmatpush.msra.mxu0 0.0
        %1609 = vmatpush.msra.mxu0 0.0
        %1610 = vmatpush.msra.mxu0 %v1537
        %1611 = vmatmul.f32.gmra.mxu0 %v1593
        %v1612 = vpop.f32.mrf.mxu0
        %v1613 = vadd.f32 0.0, %v1612
        %1614 = vdwg.mxu0
        %1615 = vrot.lane.b32.xlu0 %v1433, 120
        %v1616 = vpop.permute.xlu0 %1615
        %v1617 = vsel %vm859, %v1616, 0
        %1619 = vmatpush.msra.mxu0 0.0
        %1620 = vmatpush.msra.mxu0 0.0
        %1621 = vmatpush.msra.mxu0 0.0
        %1622 = vmatpush.msra.mxu0 0.0
        %1623 = vmatpush.msra.mxu0 0.0
        %1624 = vmatpush.msra.mxu0 0.0
        %1625 = vmatpush.msra.mxu0 0.0
        %1626 = vmatpush.msra.mxu0 0.0
        %1627 = vmatpush.msra.mxu0 0.0
        %1628 = vmatpush.msra.mxu0 0.0
        %1629 = vmatpush.msra.mxu0 0.0
        %1630 = vmatpush.msra.mxu0 0.0
        %1631 = vmatpush.msra.mxu0 0.0
        %1632 = vmatpush.msra.mxu0 0.0
        %1633 = vmatpush.msra.mxu0 0.0
        %1634 = vmatpush.msra.mxu0 %v1498
        %1635 = vmatmul.f32.gmra.mxu0 %v1617
        %v1636 = vpop.f32.mrf.mxu0
        %v1637 = vadd.f32 0.0, %v1636
        %1638 = vdwg.mxu0
        %v1639 = vsel %vm859, %v1637, -inf
        %1640 = vmax.xlane.f32.xlu0 %v1639
        %v1641 = vpop.xlane.xlu0 %1640
        %v1642 = vsub.f32 %v1637, %v1641
        %v1643 = vmul.f32 %v1642, 1.442695
        %v1644 = vpow.pop %v1643
        %v1645 = vsel %vm859, %v1644, 0.0
        %1646 = vadd.xlane.f32.xlu0 %v1645
        %v1647 = vpop.xlane.xlu0 %1646
        %v1648 = vrcp.pop %v1647
        %v1649 = vmul.f32 %v1647, %v1648
        %v1650 = vsub.f32 1.0, %v1649
        %v1651 = vmul.f32 %v1648, %v1650
        %v1652 = vadd.f32 %v1648, %v1651
        %vm1653 = vweird.f32 %v1647
        %vm1654 = vweird.f32 %v1648
        %vm1655 = vmor %vm1653, %vm1654
        %v1656 = vsel %vm1655, %v1648, %v1652
        %v1657 = vand.u32 2147483647, %v1647
        %vm1658 = vcmp.eq.f32.partialorder %v1657, 8.507059e+37
        %v1659 = vand.u32 %v1647, 2147483648
        %v1660 = vor.u32 1.1754944e-38, %v1659
        %v1661 = vsel %vm1658, %v1660, %v1656
        %v1662 = vmul.f32 %v1644, %v1661
        %v1663 = vadd.f32 %v1591, %v1662
        %1665 = vrot.lane.b32.xlu0 %v1537, 120
        %v1666 = vpop.permute.xlu0 %1665
        %v1669 = vsel %vm859, %v1662, 0
        %1671 = vmatpush.msra.mxu0 0.0
        %1672 = vmatpush.msra.mxu0 0.0
        %1673 = vmatpush.msra.mxu0 0.0
        %1674 = vmatpush.msra.mxu0 0.0
        %1675 = vmatpush.msra.mxu0 0.0
        %1676 = vmatpush.msra.mxu0 0.0
        %1677 = vmatpush.msra.mxu0 0.0
        %1678 = vmatpush.msra.mxu0 0.0
        %1679 = vmatpush.msra.mxu0 0.0
        %1680 = vmatpush.msra.mxu0 0.0
        %1681 = vmatpush.msra.mxu0 0.0
        %1682 = vmatpush.msra.mxu0 0.0
        %1683 = vmatpush.msra.mxu0 0.0
        %1684 = vmatpush.msra.mxu0 0.0
        %1685 = vmatpush.msra.mxu0 0.0
        %1686 = vmatpush.msra.mxu0 %v1666
        %1687 = vmatmul.f32.gmra.mxu0 %v1669
        %v1688 = vpop.f32.mrf.mxu0
        %v1689 = vadd.f32 0.0, %v1688
        %1690 = vdwg.mxu0
        %v1692 = vsel %vm859, %v1689, 0
        %1694 = vmatpush.msra.mxu0 0.0
        %1695 = vmatpush.msra.mxu0 0.0
        %1696 = vmatpush.msra.mxu0 0.0
        %1697 = vmatpush.msra.mxu0 0.0
        %1698 = vmatpush.msra.mxu0 0.0
        %1699 = vmatpush.msra.mxu0 0.0
        %1700 = vmatpush.msra.mxu0 0.0
        %1701 = vmatpush.msra.mxu0 0.0
        %1702 = vmatpush.msra.mxu0 0.0
        %1703 = vmatpush.msra.mxu0 0.0
        %1704 = vmatpush.msra.mxu0 0.0
        %1705 = vmatpush.msra.mxu0 0.0
        %1706 = vmatpush.msra.mxu0 0.0
        %1707 = vmatpush.msra.mxu0 0.0
        %1708 = vmatpush.msra.mxu0 0.0
        %1709 = vmatpush.msra.mxu0 %v1541
        %1710 = vmatmul.f32.gmra.mxu0 %v1692
        %v1711 = vpop.f32.mrf.mxu0
        %v1712 = vadd.f32 0.0, %v1711
        %1713 = vdwg.mxu0
        %v1715 = vsel %vm859, %v1613, 0
        %1717 = vmatpush.msra.mxu0 0.0
        %1718 = vmatpush.msra.mxu0 0.0
        %1719 = vmatpush.msra.mxu0 0.0
        %1720 = vmatpush.msra.mxu0 0.0
        %1721 = vmatpush.msra.mxu0 0.0
        %1722 = vmatpush.msra.mxu0 0.0
        %1723 = vmatpush.msra.mxu0 0.0
        %1724 = vmatpush.msra.mxu0 0.0
        %1725 = vmatpush.msra.mxu0 0.0
        %1726 = vmatpush.msra.mxu0 0.0
        %1727 = vmatpush.msra.mxu0 0.0
        %1728 = vmatpush.msra.mxu0 0.0
        %1729 = vmatpush.msra.mxu0 0.0
        %1730 = vmatpush.msra.mxu0 0.0
        %1731 = vmatpush.msra.mxu0 0.0
        %1732 = vmatpush.msra.mxu0 %v1540
        %1733 = vmatmul.f32.gmra.mxu0 %v1715
        %v1734 = vpop.f32.mrf.mxu0
        %v1735 = vadd.f32 %v1712, %v1734
        %1736 = vdwg.mxu0
        %1737 = vrot.lane.b32.xlu0 %v1433, 112
        %v1738 = vpop.permute.xlu0 %1737
        %v1739 = vsel %vm859, %v1738, 0
        %1741 = vmatpush.msra.mxu0 0.0
        %1742 = vmatpush.msra.mxu0 0.0
        %1743 = vmatpush.msra.mxu0 0.0
        %1744 = vmatpush.msra.mxu0 0.0
        %1745 = vmatpush.msra.mxu0 0.0
        %1746 = vmatpush.msra.mxu0 0.0
        %1747 = vmatpush.msra.mxu0 0.0
        %1748 = vmatpush.msra.mxu0 0.0
        %1749 = vmatpush.msra.mxu0 0.0
        %1750 = vmatpush.msra.mxu0 0.0
        %1751 = vmatpush.msra.mxu0 0.0
        %1752 = vmatpush.msra.mxu0 0.0
        %1753 = vmatpush.msra.mxu0 0.0
        %1754 = vmatpush.msra.mxu0 0.0
        %1755 = vmatpush.msra.mxu0 0.0
        %1756 = vmatpush.msra.mxu0 %v1501
        %1757 = vmatmul.f32.gmra.mxu0 %v1739
        %v1758 = vpop.f32.mrf.mxu0
        %v1759 = vadd.f32 0.0, %v1758
        %1760 = vdwg.mxu0
        %v1761 = vsel %vm859, %v1759, -inf
        %1762 = vmax.xlane.f32.xlu0 %v1761
        %v1763 = vpop.xlane.xlu0 %1762
        %v1764 = vsub.f32 %v1759, %v1763
        %v1765 = vmul.f32 %v1764, 1.442695
        %v1766 = vpow.pop %v1765
        %v1767 = vsel %vm859, %v1766, 0.0
        %1768 = vadd.xlane.f32.xlu0 %v1767
        %v1769 = vpop.xlane.xlu0 %1768
        %v1770 = vrcp.pop %v1769
        %v1771 = vmul.f32 %v1769, %v1770
        %v1772 = vsub.f32 1.0, %v1771
        %v1773 = vmul.f32 %v1770, %v1772
        %v1774 = vadd.f32 %v1770, %v1773
        %vm1775 = vweird.f32 %v1769
        %vm1776 = vweird.f32 %v1770
        %vm1777 = vmor %vm1775, %vm1776
        %v1778 = vsel %vm1777, %v1770, %v1774
        %v1779 = vand.u32 2147483647, %v1769
        %vm1780 = vcmp.eq.f32.partialorder %v1779, 8.507059e+37
        %v1781 = vand.u32 %v1769, 2147483648
        %v1782 = vor.u32 1.1754944e-38, %v1781
        %v1783 = vsel %vm1780, %v1782, %v1778
        %v1784 = vmul.f32 %v1766, %v1783
        %v1785 = vadd.f32 %v1663, %v1784
        %1786 = vrot.lane.b32.xlu0 %v1537, 112
        %v1787 = vpop.permute.xlu0 %1786
        %v1790 = vsel %vm859, %v1784, 0
        %1792 = vmatpush.msra.mxu0 0.0
        %1793 = vmatpush.msra.mxu0 0.0
        %1794 = vmatpush.msra.mxu0 0.0
        %1795 = vmatpush.msra.mxu0 0.0
        %1796 = vmatpush.msra.mxu0 0.0
        %1797 = vmatpush.msra.mxu0 0.0
        %1798 = vmatpush.msra.mxu0 0.0
        %1799 = vmatpush.msra.mxu0 0.0
        %1800 = vmatpush.msra.mxu0 0.0
        %1801 = vmatpush.msra.mxu0 0.0
        %1802 = vmatpush.msra.mxu0 0.0
        %1803 = vmatpush.msra.mxu0 0.0
        %1804 = vmatpush.msra.mxu0 0.0
        %1805 = vmatpush.msra.mxu0 0.0
        %1806 = vmatpush.msra.mxu0 0.0
        %1807 = vmatpush.msra.mxu0 %v1787
        %1808 = vmatmul.f32.gmra.mxu0 %v1790
        %v1809 = vpop.f32.mrf.mxu0
        %v1810 = vadd.f32 0.0, %v1809
        %1811 = vdwg.mxu0
        %v1813 = vsel %vm859, %v1810, 0
        %1815 = vmatpush.msra.mxu0 0.0
        %1816 = vmatpush.msra.mxu0 0.0
        %1817 = vmatpush.msra.mxu0 0.0
        %1818 = vmatpush.msra.mxu0 0.0
        %1819 = vmatpush.msra.mxu0 0.0
        %1820 = vmatpush.msra.mxu0 0.0
        %1821 = vmatpush.msra.mxu0 0.0
        %1822 = vmatpush.msra.mxu0 0.0
        %1823 = vmatpush.msra.mxu0 0.0
        %1824 = vmatpush.msra.mxu0 0.0
        %1825 = vmatpush.msra.mxu0 0.0
        %1826 = vmatpush.msra.mxu0 0.0
        %1827 = vmatpush.msra.mxu0 0.0
        %1828 = vmatpush.msra.mxu0 0.0
        %1829 = vmatpush.msra.mxu0 0.0
        %1830 = vmatpush.msra.mxu0 %v1542
        %1831 = vmatmul.f32.gmra.mxu0 %v1813
        %v1832 = vpop.f32.mrf.mxu0
        %v1833 = vadd.f32 0.0, %v1832
        %1834 = vdwg.mxu0
        %v1835 = vadd.f32 %v1735, %v1833
        %1836 = vrot.lane.b32.xlu0 %v1433, 104
        %v1837 = vpop.permute.xlu0 %1836
        %v1838 = vsel %vm859, %v1837, 0
        %1840 = vmatpush.msra.mxu0 0.0
        %1841 = vmatpush.msra.mxu0 0.0
        %1842 = vmatpush.msra.mxu0 0.0
        %1843 = vmatpush.msra.mxu0 0.0
        %1844 = vmatpush.msra.mxu0 0.0
        %1845 = vmatpush.msra.mxu0 0.0
        %1846 = vmatpush.msra.mxu0 0.0
        %1847 = vmatpush.msra.mxu0 0.0
        %1848 = vmatpush.msra.mxu0 0.0
        %1849 = vmatpush.msra.mxu0 0.0
        %1850 = vmatpush.msra.mxu0 0.0
        %1851 = vmatpush.msra.mxu0 0.0
        %1852 = vmatpush.msra.mxu0 0.0
        %1853 = vmatpush.msra.mxu0 0.0
        %1854 = vmatpush.msra.mxu0 0.0
        %1855 = vmatpush.msra.mxu0 %v1504
        %1856 = vmatmul.f32.gmra.mxu0 %v1838
        %v1857 = vpop.f32.mrf.mxu0
        %v1858 = vadd.f32 0.0, %v1857
        %1859 = vdwg.mxu0
        %v1860 = vsel %vm859, %v1858, -inf
        %1861 = vmax.xlane.f32.xlu0 %v1860
        %v1862 = vpop.xlane.xlu0 %1861
        %v1863 = vsub.f32 %v1858, %v1862
        %v1864 = vmul.f32 %v1863, 1.442695
        %v1865 = vpow.pop %v1864
        %v1866 = vsel %vm859, %v1865, 0.0
        %1867 = vadd.xlane.f32.xlu0 %v1866
        %v1868 = vpop.xlane.xlu0 %1867
        %v1869 = vrcp.pop %v1868
        %v1870 = vmul.f32 %v1868, %v1869
        %v1871 = vsub.f32 1.0, %v1870
        %v1872 = vmul.f32 %v1869, %v1871
        %v1873 = vadd.f32 %v1869, %v1872
        %vm1874 = vweird.f32 %v1868
        %vm1875 = vweird.f32 %v1869
        %vm1876 = vmor %vm1874, %vm1875
        %v1877 = vsel %vm1876, %v1869, %v1873
        %v1878 = vand.u32 2147483647, %v1868
        %vm1879 = vcmp.eq.f32.partialorder %v1878, 8.507059e+37
        %v1880 = vand.u32 %v1868, 2147483648
        %v1881 = vor.u32 1.1754944e-38, %v1880
        %v1882 = vsel %vm1879, %v1881, %v1877
        %v1883 = vmul.f32 %v1865, %v1882
        %v1884 = vadd.f32 %v1785, %v1883
        %1885 = vrot.lane.b32.xlu0 %v1537, 104
        %v1886 = vpop.permute.xlu0 %1885
        %v1889 = vsel %vm859, %v1883, 0
        %1891 = vmatpush.msra.mxu0 0.0
        %1892 = vmatpush.msra.mxu0 0.0
        %1893 = vmatpush.msra.mxu0 0.0
        %1894 = vmatpush.msra.mxu0 0.0
        %1895 = vmatpush.msra.mxu0 0.0
        %1896 = vmatpush.msra.mxu0 0.0
        %1897 = vmatpush.msra.mxu0 0.0
        %1898 = vmatpush.msra.mxu0 0.0
        %1899 = vmatpush.msra.mxu0 0.0
        %1900 = vmatpush.msra.mxu0 0.0
        %1901 = vmatpush.msra.mxu0 0.0
        %1902 = vmatpush.msra.mxu0 0.0
        %1903 = vmatpush.msra.mxu0 0.0
        %1904 = vmatpush.msra.mxu0 0.0
        %1905 = vmatpush.msra.mxu0 0.0
        %1906 = vmatpush.msra.mxu0 %v1886
        %1907 = vmatmul.f32.gmra.mxu0 %v1889
        %v1908 = vpop.f32.mrf.mxu0
        %v1909 = vadd.f32 0.0, %v1908
        %1910 = vdwg.mxu0
        %v1912 = vsel %vm859, %v1909, 0
        %1914 = vmatpush.msra.mxu0 0.0
        %1915 = vmatpush.msra.mxu0 0.0
        %1916 = vmatpush.msra.mxu0 0.0
        %1917 = vmatpush.msra.mxu0 0.0
        %1918 = vmatpush.msra.mxu0 0.0
        %1919 = vmatpush.msra.mxu0 0.0
        %1920 = vmatpush.msra.mxu0 0.0
        %1921 = vmatpush.msra.mxu0 0.0
        %1922 = vmatpush.msra.mxu0 0.0
        %1923 = vmatpush.msra.mxu0 0.0
        %1924 = vmatpush.msra.mxu0 0.0
        %1925 = vmatpush.msra.mxu0 0.0
        %1926 = vmatpush.msra.mxu0 0.0
        %1927 = vmatpush.msra.mxu0 0.0
        %1928 = vmatpush.msra.mxu0 0.0
        %1929 = vmatpush.msra.mxu0 %v1543
        %1930 = vmatmul.f32.gmra.mxu0 %v1912
        %v1931 = vpop.f32.mrf.mxu0
        %v1932 = vadd.f32 0.0, %v1931
        %1933 = vdwg.mxu0
        %v1934 = vadd.f32 %v1835, %v1932
        %s1935 = scalar_lea.vmem %s9, 1
        %v1936 = vld [vmem:[%s1935] sm:$0x1]
        %v1938 = vperm.slane %v1936, 0
        %v1940 = vadd.f32 %v1934, %v1938
        %v1941 = vadd.f32 %v1396, %v1940
        %s1942 = scalar_lea.vmem %s10, 1
        %v1943 = vld [vmem:[%s1942] sm:$0x1]
        %s1944 = scalar_lea.vmem %s11, 1
        %v1945 = vld [vmem:[%s1944] sm:$0x1]
        %v1946 = vsel %vm721, %v1941, 0.0
        %1947 = vadd.xlane.f32.xlu0 %v1946
        %v1948 = vpop.xlane.xlu0 %1947
        %v1949 = vmul.f32 %v1948, %v1268
        %v1950 = vsub.f32 %v1941, %v1949
        %v1951 = vmul.f32 %v1950, %v1950
        %v1952 = vsel %vm721, %v1951, 0.0
        %1953 = vadd.xlane.f32.xlu0 %v1952
        %v1954 = vpop.xlane.xlu0 %1953
        %v1955 = vmul.f32 %v1954, %v1268
        %v1956 = vadd.f32 %v1955, 1e-05
        %v1957 = vrsqrt.pop %v1956
        %v1958 = vmul.f32 %v1957, %v1956
        %v1959 = vmul.f32 %v1958, %v1957
        %v1960 = vmul.f32 0.5, %v1959
        %v1961 = vsub.f32 1.5, %v1960
        %v1962 = vmul.f32 %v1957, %v1961
        %vm1963 = vweird.f32 %v1956
        %vm1964 = vweird.f32 %v1957
        %vm1965 = vmor %vm1963, %vm1964
        %v1966 = vsel %vm1965, %v1957, %v1962
        %v1967 = vmul.f32 %v1950, %v1966
        %v1969 = vperm.slane %v1943, 0
        %v1971 = vmul.f32 %v1967, %v1969
        %v1973 = vperm.slane %v1945, 0
        %v1975 = vadd.f32 %v1971, %v1973
        %s1976 = scalar_lea.vmem [#allocation8], 32
        %v1977 = vld [vmem:[%s1976] sm:$0xff]
        %v1978 = vld [vmem:[%s1976 + $0x8] sm:$0xff]
        %v1979 = vld [vmem:[%s1976 + $0x10] sm:$0xff]
        %v1980 = vld [vmem:[%s1976 + $0x18] sm:$0xff]
        %s1981 = scalar_lea.vmem %s13, 1
        %v1982 = vld [vmem:[%s1981] sm:$0x1]
        %v1984 = vperm.slane %v1982, 0
        %v1987 = vsel %vm721, %v1975, 0
        %1989 = vmatpush.msra.mxu0 0.0
        %1990 = vmatpush.msra.mxu0 0.0
        %1991 = vmatpush.msra.mxu0 0.0
        %1992 = vmatpush.msra.mxu0 0.0
        %1993 = vmatpush.msra.mxu0 0.0
        %1994 = vmatpush.msra.mxu0 0.0
        %1995 = vmatpush.msra.mxu0 0.0
        %1996 = vmatpush.msra.mxu0 0.0
        %1997 = vmatpush.msra.mxu0 0.0
        %1998 = vmatpush.msra.mxu0 0.0
        %1999 = vmatpush.msra.mxu0 0.0
        %2000 = vmatpush.msra.mxu0 0.0
        %2001 = vmatpush.msra.mxu0 %v1980
        %2002 = vmatpush.msra.mxu0 %v1979
        %2003 = vmatpush.msra.mxu0 %v1978
        %2004 = vmatpush.msra.mxu0 %v1977
        %2005 = vmatmul.f32.gmra.mxu0 %v1987
        %v2006 = vpop.f32.mrf.mxu0
        %v2007 = vadd.f32 %v1984, %v2006
        %2008 = vdwg.mxu0
        %v2009 = vmax.f32 %v2007, 0.0
        %s2010 = scalar_lea.vmem %s14, 64
        %v2011 = vld [vmem:[%s2010] sm:$0xff]
        %v2012 = vld [vmem:[%s2010 + $0x8] sm:$0xff]
        %v2013 = vld [vmem:[%s2010 + $0x10] sm:$0xff]
        %v2014 = vld [vmem:[%s2010 + $0x18] sm:$0xff]
        %v2015 = vld [vmem:[%s2010 + $0x20] sm:$0xff]
        %v2016 = vld [vmem:[%s2010 + $0x28] sm:$0xff]
        %v2017 = vld [vmem:[%s2010 + $0x30] sm:$0xff]
        %v2018 = vld [vmem:[%s2010 + $0x38] sm:$0xff]
        %s2019 = scalar_lea.vmem %s15, 1
        %v2020 = vld [vmem:[%s2019] sm:$0x1]
        %v2022 = vperm.slane %v2020, 0
        %v2025 = vsel %vm1340, %v2009, 0
        %2027 = vmatpush.msra.mxu0 0.0
        %2028 = vmatpush.msra.mxu0 0.0
        %2029 = vmatpush.msra.mxu0 0.0
        %2030 = vmatpush.msra.mxu0 0.0
        %2031 = vmatpush.msra.mxu0 0.0
        %2032 = vmatpush.msra.mxu0 0.0
        %2033 = vmatpush.msra.mxu0 0.0
        %2034 = vmatpush.msra.mxu0 0.0
        %2035 = vmatpush.msra.mxu0 %v2018
        %2036 = vmatpush.msra.mxu0 %v2017
        %2037 = vmatpush.msra.mxu0 %v2016
        %2038 = vmatpush.msra.mxu0 %v2015
        %2039 = vmatpush.msra.mxu0 %v2014
        %2040 = vmatpush.msra.mxu0 %v2013
        %2041 = vmatpush.msra.mxu0 %v2012
        %2042 = vmatpush.msra.mxu0 %v2011
        %2043 = vmatmul.f32.gmra.mxu0 %v2025
        %v2044 = vpop.f32.mrf.mxu0
        %v2045 = vadd.f32 %v2022, %v2044
        %2046 = vdwg.mxu0
        %v2047 = vadd.f32 %v1975, %v2045
        %s2048 = scalar_lea.vmem %s16, 1
        %v2049 = vld [vmem:[%s2048] sm:$0x1]
        %s2050 = scalar_lea.vmem [#allocation10], 1
        %v2051 = vld [vmem:[%s2050] sm:$0x1]
        %v2052 = vsel %vm721, %v2047, 0.0
        %2053 = vadd.xlane.f32.xlu0 %v2052
        %v2054 = vpop.xlane.xlu0 %2053
        %v2055 = vmul.f32 %v2054, %v1268
        %v2056 = vsub.f32 %v2047, %v2055
        %v2057 = vmul.f32 %v2056, %v2056
        %v2058 = vsel %vm721, %v2057, 0.0
        %2059 = vadd.xlane.f32.xlu0 %v2058
        %v2060 = vpop.xlane.xlu0 %2059
        %v2061 = vmul.f32 %v2060, %v1268
        %v2062 = vadd.f32 %v2061, 1e-05
        %v2063 = vrsqrt.pop %v2062
        %v2064 = vmul.f32 %v2063, %v2062
        %v2065 = vmul.f32 %v2064, %v2063
        %v2066 = vmul.f32 0.5, %v2065
        %v2067 = vsub.f32 1.5, %v2066
        %v2068 = vmul.f32 %v2063, %v2067
        %vm2069 = vweird.f32 %v2062
        %vm2070 = vweird.f32 %v2063
        %vm2071 = vmor %vm2069, %vm2070
        %v2072 = vsel %vm2071, %v2063, %v2068
        %v2073 = vmul.f32 %v2056, %v2072
        %v2075 = vperm.slane %v2049, 0
        %v2077 = vmul.f32 %v2073, %v2075
        %v2079 = vperm.slane %v2051, 0
        %v2081 = vadd.f32 %v2077, %v2079
        %s2082 = scalar_lea.vmem %s711, 16 [#allocation11]
        %2083 = vst.msk [vmem:[%s2082] sm:$0xff] %vm721, %v2081
        %v2084 = vmul.f32 %v1884, 0.25
        %s2085 = scalar_lea.vmem %s718, 8 [#allocation12]
        %2086 = vst.msk [vmem:[%s2085] sm:$0xff] %vm859, %v2084
        %s2087 = sand.u32 %s440, 1
        %s2088 = scalar_lea.sflag [#allocation4], %s2087
        %s2089 = sand.u32 %s440, 1
        %s2090 = smul.addr %s2089, 24
        %s2091 = scalar_lea.vmem [#allocation11], %s2090
        %s2092 = sand.u32 %s466, 1
        %s2093 = scalar_lea.sflag [#allocation13], %s2092
        %s2094 = sand.u32 %s466, 1
        %s2095 = smul.addr %s2094, 16
        %s2096 = scalar_lea.vmem [#allocation12], %s2095
        // Predicated region
        $region113: #{tpu_custom_call.1} parent=91 // pred_check
          %p2097 = pneg %p450
        $region114: #{tpu_custom_call.1} parent=91 // pred_check_branch
          %2099 = sbr.rel (%p2097) target = $region116
        $region115: #{tpu_custom_call.1} parent=91 // pred_region
          %2101 = vsyncadd %s2088, 0
          %s2102 = smul.addr %s44, 8
          %s2103 = scalar_lea.hbm %s18, %s2102
          %s2104 = sshll.u32 %s2091, 4
          %s2105 = int_to_ptr.vmem [resolvable:$true] %s2104
          %s2106 = sshll.u32 %s2103, 4
          %s2107 = int_to_ptr.hbm [resolvable:$true] %s2106
          %2112 = dma.vmem_to_hbm [thread:$0]  %s2105, 384, %s2107, %s2088, 128, 256, 8
        $region116: #{tpu_custom_call.1} parent=91 // pred_fallthru
          _
        // Predicated region
        $region117: #{tpu_custom_call.1} parent=91 // pred_check
          %p2113 = pneg %p476
        $region118: #{tpu_custom_call.1} parent=91 // pred_check_branch
          %2115 = sbr.rel (%p2113) target = $region120
        $region119: #{tpu_custom_call.1} parent=91 // pred_region
          %2117 = vsyncadd %s2093, 0
          %s2118 = smul.addr %s44, 8
          %s2119 = scalar_lea.hbm %s19, %s2118
          %s2120 = sshll.u32 %s2096, 4
          %s2121 = int_to_ptr.vmem [resolvable:$true] %s2120
          %s2122 = sshll.u32 %s2119, 4
          %s2123 = int_to_ptr.hbm [resolvable:$true] %s2122
          %2128 = dma.vmem_to_hbm [thread:$0]  %s2121, 256, %s2123, %s2093, 128, 256, 8
        $region120: #{tpu_custom_call.1} parent=91 // pred_fallthru
          _
      $region92: #{tpu_custom_call.1} parent=5 // pred_fallthru
        _
      %p2129 = scmp.le.s32.totalorder 2, %s39
      // Predicated region
      $region121: #{tpu_custom_call.1} parent=5 // pred_check
        %p2130 = pneg %p2129
      $region122: #{tpu_custom_call.1} parent=5 // pred_check_branch
        %2132 = sbr.rel (%p2130) target = $region124
      $region123: #{tpu_custom_call.1} parent=5 // pred_region
        %s2133 = ssub.s32 %s39, 2
        // Predicated region
        $region125: #{tpu_custom_call.1} parent=123 // pred_check
          %p2134 = pneg %p456
        $region126: #{tpu_custom_call.1} parent=123 // pred_check_branch
          %2136 = sbr.rel (%p2134) target = $region128
        $region127: #{tpu_custom_call.1} parent=123 // pred_region
          %s2137 = sand.u32 %s441, 1
          %s2138 = scalar_lea.sflag [#allocation4], %s2137
          %s2139 = sand.u32 %s441, 1
          %s2140 = smul.addr %s2139, 24
          %s2141 = scalar_lea.vmem [#allocation11], %s2140
          %2143 = dma.done %s2138, 384
        $region128: #{tpu_custom_call.1} parent=123 // pred_fallthru
          _
        // Predicated region
        $region129: #{tpu_custom_call.1} parent=123 // pred_check
          %p2144 = pneg %p482
        $region130: #{tpu_custom_call.1} parent=123 // pred_check_branch
          %2146 = sbr.rel (%p2144) target = $region132
        $region131: #{tpu_custom_call.1} parent=123 // pred_region
          %s2147 = sand.u32 %s467, 1
          %s2148 = scalar_lea.sflag [#allocation13], %s2147
          %s2149 = sand.u32 %s467, 1
          %s2150 = smul.addr %s2149, 16
          %s2151 = scalar_lea.vmem [#allocation12], %s2150
          %2153 = dma.done %s2148, 256
        $region132: #{tpu_custom_call.1} parent=123 // pred_fallthru
          _
      $region124: #{tpu_custom_call.1} parent=5 // pred_fallthru
        _
    $region6: #{tpu_custom_call.1} parent=1 // loop_footer
      %s43 = sadd.s32 1, %s39
    $region7: #{tpu_custom_call.1} parent=1 // loop_footer_branch
      %38 = sbr.rel target = $region3
    $region8: #{tpu_custom_call.1} parent=1 // loop_exit
      _
    %2154 = vsyncpa [#allocation3], 1
    %s2155 = scalar_lea.sflag [#allocation3], 1
    %2156 = vsyncpa %s2155, 1
    %2157 = vsyncpa [#allocation6], 1
    %s2158 = scalar_lea.sflag [#allocation6], 1
    %2159 = vsyncpa %s2158, 1
    %2160 = vsyncpa [#allocation9], 1
    %2161 = vsyncpa [#allocation4], 1
    %s2162 = scalar_lea.sflag [#allocation4], 1
    %2163 = vsyncpa %s2162, 1
    %2164 = vsyncpa [#allocation13], 1
    %s2165 = scalar_lea.sflag [#allocation13], 1
    %2166 = vsyncpa %s2165, 1

</llo_original>
